<compile_context>
chip_gen: v5e
topology: v5e:2x2
jax: 0.10.0
libtpu: 0.0.40
codegen_flags: <defaults>
</compile_context>

<pallas_src>
import functools

import jax
import jax.numpy as jnp
from jax.experimental import pallas as pl
from jax.experimental.pallas import tpu as pltpu

NEG_INF = -1e9  # stand-in for -inf in the CLIP causal attention mask

_PARAM_NAMES = ["ln1_g", "ln1_b", "wqkv", "bqkv", "wo", "bo",
                "ln2_g", "ln2_b", "w1", "b1", "w2", "b2"]


# ---------------------------------------------------------------------------
# Pallas kernels
# ---------------------------------------------------------------------------
def stack_kernel(x_ref, pos_ref, ctx_ref,
                 ln1g_ref, ln1b_ref, wqkv_ref, bqkv_ref, wo_ref, bo_ref,
                 ln2g_ref, ln2b_ref, w1_ref, b1_ref, w2_ref, b2_ref,
                 o_ref, *, num_heads, n_ctx, n_deep):
    """One grid step = one CLIP ResidualAttentionBlock (layer l) applied to a
    (TB, L, D) batch block whose running residual lives in o_ref (resident in
    VMEM across the whole layer axis)."""
    l = pl.program_id(1)
    TB, L, D = x_ref.shape
    H = num_heads
    hd = D // H

    # ---- layer 0: seed the resident bf16 residual stream: prompts + pos ----
    @pl.when(l == 0)
    def _():
        o_ref[...] = (x_ref[...].astype(jnp.float32)
                      + pos_ref[...][None].astype(jnp.float32)
                      ).astype(o_ref.dtype)

    x = o_ref[...].astype(jnp.float32)                        # (TB, L, D)

    # ---- deep-prompt splice: layers 1..n_deep replace tokens [1, 1+n_ctx) ----
    if n_deep > 0:
        row = jax.lax.broadcasted_iota(jnp.int32, (L, 1), 0)
        sel = jnp.logical_and(row >= 1, row < 1 + n_ctx)      # (L, 1)
        do_splice = jnp.logical_and(l >= 1, l <= n_deep)      # scalar (traced)
        sel = jnp.logical_and(sel, do_splice)
        x = jnp.where(sel[None], ctx_ref[...][None].astype(jnp.float32), x)

    x2 = x.reshape(TB * L, D)                                 # leading merge only

    def layer_norm(v, g, b):
        mu = jnp.mean(v, axis=-1, keepdims=True)
        c = v - mu
        var = jnp.mean(c * c, axis=-1, keepdims=True)
        return c * jax.lax.rsqrt(var + 1e-5) * g + b

    # ---- multi-head causal self-attention, pre-LN, fused (pre-scaled) QKV ----
    xn = layer_norm(x2, ln1g_ref[...], ln1b_ref[...])
    qkv = jnp.dot(xn.astype(jnp.bfloat16), wqkv_ref[...],
                  preferred_element_type=jnp.float32) + bqkv_ref[...]
    qkv = qkv.astype(jnp.bfloat16)                            # (TB*L, 3D)

    # additive causal mask built once per step (no HBM input, no per-head where)
    # TODO(synk): add key-validity (kj < true_len) here when padding L 77->80.
    qi = jax.lax.broadcasted_iota(jnp.int32, (L, L), 0)
    kj = jax.lax.broadcasted_iota(jnp.int32, (L, L), 1)
    mask = jnp.where(kj <= qi, 0.0, NEG_INF).astype(jnp.float32)[None]  # (1,L,L)

    wo_all = wo_ref[...]                                      # (D, D) bf16
    attn = None
    for h in range(H):                                        # static unroll
        lo = h * hd
        q_h = qkv[:, lo:lo + hd].reshape(TB, L, hd)
        k_h = qkv[:, D + lo:D + lo + hd].reshape(TB, L, hd)
        v_h = qkv[:, 2 * D + lo:2 * D + lo + hd].reshape(TB, L, hd)
        s = jnp.einsum('bqe,bke->bqk', q_h, k_h,
                       preferred_element_type=jnp.float32) + mask
        s = s - jnp.max(s, axis=-1, keepdims=True)
        p = jnp.exp(s)
        p = p * pl.reciprocal(jnp.sum(p, axis=-1, keepdims=True), approx=True)
        o_h = jnp.einsum('bqk,bke->bqe', p.astype(jnp.bfloat16), v_h,
                         preferred_element_type=jnp.float32)  # (TB, L, hd) f32
        # fold the head re-merge into the output projection: per-head partial
        # product against the matching hd rows of W_o (sublane slice, no masked
        # lane-offset stores, no scratch buffer).
        contrib = jnp.dot(o_h.reshape(TB * L, hd).astype(jnp.bfloat16),
                          wo_all[lo:lo + hd, :],
                          preferred_element_type=jnp.float32)
        attn = contrib if attn is None else attn + contrib
    attn = attn + bo_ref[...]
    x2 = x2 + attn

    # ---- MLP with QuickGELU, pre-LN ----
    xn2 = layer_norm(x2, ln2g_ref[...], ln2b_ref[...])
    h1 = jnp.dot(xn2.astype(jnp.bfloat16), w1_ref[...],
                 preferred_element_type=jnp.float32) + b1_ref[...]
    h1 = (h1 * jax.nn.sigmoid(1.702 * h1)).astype(jnp.bfloat16)   # QuickGELU
    mlp = jnp.dot(h1, w2_ref[...],
                  preferred_element_type=jnp.float32) + b2_ref[...]

    # write the layer output back into the resident residual stream (bf16)
    o_ref[...] = (x2 + mlp).reshape(TB, L, D).astype(o_ref.dtype)


def head_kernel(x_ref, g_ref, b_ref, proj_ref, o_ref):
    """ln_final on the gathered EOT features + text projection: (TB,D)->(TB,DP)."""
    x = x_ref[...].astype(jnp.float32)
    mu = jnp.mean(x, axis=-1, keepdims=True)
    c = x - mu
    var = jnp.mean(c * c, axis=-1, keepdims=True)
    xn = c * jax.lax.rsqrt(var + 1e-5) * g_ref[...] + b_ref[...]
    o_ref[...] = jnp.dot(xn.astype(jnp.bfloat16), proj_ref[...],
                         preferred_element_type=jnp.float32).astype(o_ref.dtype)


# ---------------------------------------------------------------------------
# Wrappers
# ---------------------------------------------------------------------------
def _pick_tb(B, target):
    """Largest divisor of B that is <= target (batch block for the layer kernel)."""
    tb = min(target, B)
    while B % tb:
        tb -= 1
    return tb


def _pick_rows(B, target):
    """Row-block for the head kernel (must be B itself or a multiple of 8)."""
    if B <= target:
        return B
    for tb in range(target, 0, -1):
        if B % tb == 0 and tb % 8 == 0:
            return tb
    return B


def pack_params(layers, num_heads):
    """Stack per-layer params along a leading layer axis, fuse Q/K/V (with the
    1/sqrt(hd) scale folded into the Q columns + bias), cast matmul weights to
    bf16 (biases / LN params stay f32)."""
    D = layers[0]["wq"].shape[0]
    hd = D // num_heads
    scale = 1.0 / float(hd) ** 0.5
    bf16, f32 = jnp.bfloat16, jnp.float32

    def stack(fn):
        return jnp.stack([fn(lp) for lp in layers], axis=0)

    return dict(
        ln1_g=stack(lambda p: p["ln1_g"].astype(f32)),
        ln1_b=stack(lambda p: p["ln1_b"].astype(f32)),
        wqkv=stack(lambda p: jnp.concatenate(
            [p["wq"] * scale, p["wk"], p["wv"]], axis=1).astype(bf16)),
        bqkv=stack(lambda p: jnp.concatenate(
            [p["bq"] * scale, p["bk"], p["bv"]], axis=1).astype(f32)),
        wo=stack(lambda p: p["wo"].astype(bf16)),
        bo=stack(lambda p: p["bo"].astype(f32)),
        ln2_g=stack(lambda p: p["ln2_g"].astype(f32)),
        ln2_b=stack(lambda p: p["ln2_b"].astype(f32)),
        w1=stack(lambda p: p["w1"].astype(bf16)),
        b1=stack(lambda p: p["b1"].astype(f32)),
        w2=stack(lambda p: p["w2"].astype(bf16)),
        b2=stack(lambda p: p["b2"].astype(f32)),
    )


def run_transformer(x, pos, ctx_tables, params, *, num_layers, num_heads,
                    n_ctx, n_deep, block_b=8):
    """All LAYERS residual blocks in one pallas_call.  Batch axis outer
    ('parallel', megacore-shardable); layer axis inner ('arbitrary') with the
    activation block resident in the output VMEM buffer across it."""
    B, L, D = x.shape
    TB = _pick_tb(B, block_b)
    plist = [params[n] for n in _PARAM_NAMES]

    xmap = lambda b, l: (b, 0, 0)        # activations: per-batch block, layer-invariant
    posmap = lambda b, l: (0, 0)         # positional embedding: fetched once
    lmap = lambda b, l: (l, 0, 0)        # per-layer tables / weights

    in_specs = [pl.BlockSpec((TB, L, D), xmap),           # prompts (read at l == 0)
                pl.BlockSpec((L, D), posmap),             # positional embedding
                pl.BlockSpec((None, L, D), lmap)]         # per-layer deep-prompt table
    in_specs += [pl.BlockSpec((None,) + p.shape[1:], lmap) for p in plist]

    kernel = functools.partial(stack_kernel, num_heads=num_heads,
                               n_ctx=n_ctx, n_deep=n_deep)
    return pl.pallas_call(
        kernel,
        out_shape=jax.ShapeDtypeStruct((B, L, D), jnp.bfloat16),  # bf16 residual
        grid=(B // TB, num_layers),
        in_specs=in_specs,
        out_specs=pl.BlockSpec((TB, L, D), xmap),   # index constant in l -> resident
        compiler_params=pltpu.CompilerParams(
            dimension_semantics=("parallel", "arbitrary"),
            # 56 MiB is safe on v7x (64 MiB physical); raise toward ~96 MiB on v6e.
            vmem_limit_bytes=56 * 1024 * 1024),
    )(x, pos, ctx_tables, *plist)


def run_head(x_eot, ln_g, ln_b, proj_bf16, *, block_b=256):
    B, D = x_eot.shape
    DP = proj_bf16.shape[1]
    TB = _pick_rows(B, block_b)
    return pl.pallas_call(
        head_kernel,
        out_shape=jax.ShapeDtypeStruct((B, DP), jnp.float32),
        grid=(B // TB,),
        in_specs=[pl.BlockSpec((TB, D), lambda i: (i, 0)),
                  pl.BlockSpec((1, D), lambda i: (0, 0)),
                  pl.BlockSpec((1, D), lambda i: (0, 0)),
                  pl.BlockSpec((D, DP), lambda i: (0, 0))],
        out_specs=pl.BlockSpec((TB, DP), lambda i: (i, 0)),
        compiler_params=pltpu.CompilerParams(
            dimension_semantics=("parallel",),
            vmem_limit_bytes=48 * 1024 * 1024),
    )(x_eot, ln_g, ln_b, proj_bf16)


def text_encoder_deep_forward(prompts, tokenized_prompts, compound_prompts_deeper,
                              pos_emb, layers, ln_final_g, ln_final_b,
                              text_projection, *, num_heads, n_ctx, block_b=8):
    B, L, D = prompts.shape
    num_layers = len(layers)
    params = pack_params(layers, num_heads)

    # transformer([x, compound_prompts_deeper_text, 0]): layer 0 adds the
    # positional embedding; layer i>0 replaces tokens [1 : 1+n_ctx] with
    # compound_prompts_deeper[i-1] while available.
    n_deep = min(len(compound_prompts_deeper), max(num_layers - 1, 0))
    ctx_tables = jnp.zeros((num_layers, L, D), jnp.float32)
    for i in range(n_deep):
        ctx_tables = ctx_tables.at[i + 1, 1:1 + n_ctx].set(
            compound_prompts_deeper[i].astype(jnp.float32))

    x = run_transformer(prompts.astype(jnp.float32), pos_emb.astype(jnp.float32),
                        ctx_tables, params, num_layers=num_layers,
                        num_heads=num_heads, n_ctx=n_ctx, n_deep=n_deep,
                        block_b=block_b)                      # (B, L, D) bf16

    # x[arange(B), tokenized_prompts.argmax(-1)] (LN is per-token, so
    # gather-then-LN equals LN-then-gather), then @ text_projection.
    eot_idx = jnp.argmax(tokenized_prompts, axis=-1)
    x_eot = x[jnp.arange(B), eot_idx]                         # (B, D) glue gather

    return run_head(x_eot, ln_final_g, ln_final_b,
                    text_projection.astype(jnp.bfloat16))


# ---------------------------------------------------------------------------
# Deterministic synthetic parameter init (standard per-layer CLIP layout)
# ---------------------------------------------------------------------------
def init_layer(key, D, Dff):
    ks = jax.random.split(key, 6)
    s = 0.02
    f32 = jnp.float32
    return dict(
        ln1_g=jnp.ones((1, D), f32), ln1_b=jnp.zeros((1, D), f32),
        wq=jax.random.normal(ks[0], (D, D), f32) * s,
        wk=jax.random.normal(ks[1], (D, D), f32) * s,
        wv=jax.random.normal(ks[2], (D, D), f32) * s,
        bq=jnp.zeros((1, D), f32), bk=jnp.zeros((1, D), f32), bv=jnp.zeros((1, D), f32),
        wo=jax.random.normal(ks[3], (D, D), f32) * s, bo=jnp.zeros((1, D), f32),
        ln2_g=jnp.ones((1, D), f32), ln2_b=jnp.zeros((1, D), f32),
        w1=jax.random.normal(ks[4], (D, Dff), f32) * s, b1=jnp.zeros((1, Dff), f32),
        w2=jax.random.normal(ks[5], (Dff, D), f32) * s, b2=jnp.zeros((1, D), f32),
    )


if __name__ == "__main__":
    # Small toy config (lane-friendly dims; head_dim=64 like real CLIP text).
    B, L, D, H, LAYERS, NCTX, DP = 8, 8, 128, 2, 3, 2, 128
    DFF = 4 * D

    key = jax.random.PRNGKey(0)
    k_prompts, k_pos, k_comp, k_layers, k_proj, k_tok = jax.random.split(key, 6)

    prompts = jax.random.normal(k_prompts, (B, L, D), jnp.float32) * 0.1
    pos_emb = jax.random.normal(k_pos, (L, D), jnp.float32) * 0.01
    compound_prompts = [
        jax.random.normal(k, (NCTX, D), jnp.float32) * 0.1
        for k in jax.random.split(k_comp, LAYERS - 1)
    ]
    layers = [init_layer(k, D, DFF) for k in jax.random.split(k_layers, LAYERS)]
    ln_final_g = jnp.ones((1, D), jnp.float32)
    ln_final_b = jnp.zeros((1, D), jnp.float32)
    text_projection = jax.random.normal(k_proj, (D, DP), jnp.float32) * 0.02

    # tokenized prompts: random small token ids with a large EOT id whose
    # position is what argmax(-1) selects.
    tokenized = jax.random.randint(k_tok, (B, L), 1, 100, dtype=jnp.int32)
    eot_pos = (jnp.arange(B, dtype=jnp.int32) % (L - 2)) + 1
    tokenized = tokenized.at[jnp.arange(B), eot_pos].set(49407)

    # block_b=4 -> 2 "parallel" grid steps over B=8 (keeps both v7x TCs busy).
    out = text_encoder_deep_forward(
        prompts, tokenized, compound_prompts, pos_emb, layers,
        ln_final_g, ln_final_b, text_projection,
        num_heads=H, n_ctx=NCTX, block_b=4)
    out = jax.block_until_ready(out)

    assert out.shape == (B, DP), out.shape
    assert bool(jnp.all(jnp.isfinite(out)))
    print("KERNEL_OK")
</pallas_src>

<mosaic_0001>
module attributes {stable_mosaic.version = 11 : i64} {
  func.func @stack_kernel(%arg0: i32, %arg1: i32, %arg2: memref<4x8x128xf32, #tpu.memory_space<vmem>>, %arg3: memref<8x128xf32, #tpu.memory_space<vmem>>, %arg4: memref<1x8x128xf32, #tpu.memory_space<vmem>>, %arg5: memref<1x1x128xf32, #tpu.memory_space<vmem>>, %arg6: memref<1x1x128xf32, #tpu.memory_space<vmem>>, %arg7: memref<1x128x384xbf16, #tpu.memory_space<vmem>>, %arg8: memref<1x1x384xf32, #tpu.memory_space<vmem>>, %arg9: memref<1x128x128xbf16, #tpu.memory_space<vmem>>, %arg10: memref<1x1x128xf32, #tpu.memory_space<vmem>>, %arg11: memref<1x1x128xf32, #tpu.memory_space<vmem>>, %arg12: memref<1x1x128xf32, #tpu.memory_space<vmem>>, %arg13: memref<1x128x512xbf16, #tpu.memory_space<vmem>>, %arg14: memref<1x1x512xf32, #tpu.memory_space<vmem>>, %arg15: memref<1x512x128xbf16, #tpu.memory_space<vmem>>, %arg16: memref<1x1x128xf32, #tpu.memory_space<vmem>>, %arg17: memref<4x8x128xbf16, #tpu.memory_space<vmem>>) attributes {dimension_semantics = [#tpu.dimension_semantics<parallel>, #tpu.dimension_semantics<arbitrary>], iteration_bounds = array<i64: 2, 3>, scalar_prefetch = 0 : i64, scratch_operands = 0 : i64, tpu.core_type = #tpu.core_type<tc>, window_params = [{transform_indices = @transform_0, window_bounds = array<i64: 4, 8, 128>}, {pipeline_mode = #tpu.pipeline_mode<synchronous>, transform_indices = @transform_1, window_bounds = array<i64: 8, 128>}, {transform_indices = @transform_2, window_bounds = array<i64: 1, 8, 128>}, {transform_indices = @transform_3, window_bounds = array<i64: 1, 1, 128>}, {transform_indices = @transform_4, window_bounds = array<i64: 1, 1, 128>}, {transform_indices = @transform_5, window_bounds = array<i64: 1, 128, 384>}, {transform_indices = @transform_6, window_bounds = array<i64: 1, 1, 384>}, {transform_indices = @transform_7, window_bounds = array<i64: 1, 128, 128>}, {transform_indices = @transform_8, window_bounds = array<i64: 1, 1, 128>}, {transform_indices = @transform_9, window_bounds = array<i64: 1, 1, 128>}, {transform_indices = @transform_10, window_bounds = array<i64: 1, 1, 128>}, {transform_indices = @transform_11, window_bounds = array<i64: 1, 128, 512>}, {transform_indices = @transform_12, window_bounds = array<i64: 1, 1, 512>}, {transform_indices = @transform_13, window_bounds = array<i64: 1, 512, 128>}, {transform_indices = @transform_14, window_bounds = array<i64: 1, 1, 128>}, {transform_indices = @transform_15, window_bounds = array<i64: 4, 8, 128>}]} {
    %c0_i32 = arith.constant 0 : i32
    %0 = arith.cmpi eq, %arg1, %c0_i32 : i32
    %1 = arith.extui %0 : i1 to i32
    %c0_i32_0 = arith.constant 0 : i32
    %2 = arith.cmpi ne, %1, %c0_i32_0 : i32
    scf.if %2 {
      %c0_72 = arith.constant 0 : index
      %c0_73 = arith.constant 0 : index
      %c0_74 = arith.constant 0 : index
      %176 = vector.load %arg2[%c0_72, %c0_73, %c0_74] : memref<4x8x128xf32, #tpu.memory_space<vmem>>, vector<4x8x128xf32>
      %c0_75 = arith.constant 0 : index
      %c0_76 = arith.constant 0 : index
      %177 = vector.load %arg3[%c0_75, %c0_76] : memref<8x128xf32, #tpu.memory_space<vmem>>, vector<8x128xf32>
      %178 = vector.shape_cast %177 : vector<8x128xf32> to vector<1x8x128xf32>
      %179 = vector.broadcast %178 : vector<1x8x128xf32> to vector<4x8x128xf32>
      %180 = arith.addf %176, %179 : vector<4x8x128xf32>
      %181 = arith.truncf %180 : vector<4x8x128xf32> to vector<4x8x128xbf16>
      %c0_77 = arith.constant 0 : index
      %c0_78 = arith.constant 0 : index
      %c0_79 = arith.constant 0 : index
      %182 = vector.load %arg17[%c0_77, %c0_78, %c0_79] : memref<4x8x128xbf16, #tpu.memory_space<vmem>>, vector<4x8x128xbf16>
      tpu.vector_store %arg17[%c0_77, %c0_78, %c0_79], %181 {strides = array<i32>} : memref<4x8x128xbf16, #tpu.memory_space<vmem>>, vector<4x8x128xbf16>,
    } else {
    }
    %c0 = arith.constant 0 : index
    %c0_1 = arith.constant 0 : index
    %c0_2 = arith.constant 0 : index
    %3 = vector.load %arg17[%c0, %c0_1, %c0_2] : memref<4x8x128xbf16, #tpu.memory_space<vmem>>, vector<4x8x128xbf16>
    %4 = arith.extf %3 : vector<4x8x128xbf16> to vector<4x8x128xf32>
    %5 = tpu.iota {dimensions = array<i32: 0>} : vector<8x1xi32>
    %c1_i32 = arith.constant 1 : i32
    %6 = vector.broadcast %c1_i32 : i32 to vector<8x1xi32>
    %7 = arith.cmpi sge, %5, %6 : vector<8x1xi32>
    %c3_i32 = arith.constant 3 : i32
    %8 = vector.broadcast %c3_i32 : i32 to vector<8x1xi32>
    %9 = arith.cmpi slt, %5, %8 : vector<8x1xi32>
    %10 = arith.andi %7, %9 : vector<8x1xi1>
    %c1_i32_3 = arith.constant 1 : i32
    %11 = arith.cmpi sge, %arg1, %c1_i32_3 : i32
    %c2_i32 = arith.constant 2 : i32
    %12 = arith.cmpi sle, %arg1, %c2_i32 : i32
    %13 = arith.andi %11, %12 : i1
    %14 = vector.broadcast %13 : i1 to vector<8x1xi1>
    %15 = arith.andi %10, %14 : vector<8x1xi1>
    %16 = vector.shape_cast %15 : vector<8x1xi1> to vector<1x8x1xi1>
    %c0_4 = arith.constant 0 : index
    %c0_5 = arith.constant 0 : index
    %c0_6 = arith.constant 0 : index
    %17 = vector.load %arg4[%c0_4, %c0_5, %c0_6] : memref<1x8x128xf32, #tpu.memory_space<vmem>>, vector<1x8x128xf32>
    %18 = vector.shape_cast %17 : vector<1x8x128xf32> to vector<8x128xf32>
    %19 = vector.shape_cast %18 : vector<8x128xf32> to vector<1x8x128xf32>
    %20 = vector.shape_cast %16 : vector<1x8x1xi1> to vector<1x8x1xi1>
    %21 = vector.broadcast %20 : vector<1x8x1xi1> to vector<4x8x128xi1>
    %22 = vector.shape_cast %19 : vector<1x8x128xf32> to vector<1x8x128xf32>
    %23 = vector.broadcast %22 : vector<1x8x128xf32> to vector<4x8x128xf32>
    %24 = arith.select %21, %23, %4 : vector<4x8x128xi1>, vector<4x8x128xf32>
    %25 = vector.shape_cast %24 : vector<4x8x128xf32> to vector<32x128xf32>
    %c0_7 = arith.constant 0 : index
    %c0_8 = arith.constant 0 : index
    %c0_9 = arith.constant 0 : index
    %26 = vector.load %arg5[%c0_7, %c0_8, %c0_9] : memref<1x1x128xf32, #tpu.memory_space<vmem>>, vector<1x1x128xf32>
    %27 = vector.shape_cast %26 : vector<1x1x128xf32> to vector<1x128xf32>
    %c0_10 = arith.constant 0 : index
    %c0_11 = arith.constant 0 : index
    %c0_12 = arith.constant 0 : index
    %28 = vector.load %arg6[%c0_10, %c0_11, %c0_12] : memref<1x1x128xf32, #tpu.memory_space<vmem>>, vector<1x1x128xf32>
    %29 = vector.shape_cast %28 : vector<1x1x128xf32> to vector<1x128xf32>
    %cst = arith.constant dense<0.000000e+00> : vector<32xf32>
    %30 = vector.multi_reduction <add>, %25, %cst [1] : vector<32x128xf32> to vector<32xf32>
    %31 = vector.shape_cast %30 : vector<32xf32> to vector<32x1xf32>
    %cst_13 = arith.constant 1.280000e+02 : f32
    %32 = vector.broadcast %cst_13 : f32 to vector<32x1xf32>
    %33 = arith.divf %31, %32 : vector<32x1xf32>
    %34 = vector.broadcast %33 : vector<32x1xf32> to vector<32x128xf32>
    %35 = arith.subf %25, %34 : vector<32x128xf32>
    %36 = arith.mulf %35, %35 : vector<32x128xf32>
    %cst_14 = arith.constant dense<0.000000e+00> : vector<32xf32>
    %37 = vector.multi_reduction <add>, %36, %cst_14 [1] : vector<32x128xf32> to vector<32xf32>
    %38 = vector.shape_cast %37 : vector<32xf32> to vector<32x1xf32>
    %cst_15 = arith.constant 1.280000e+02 : f32
    %39 = vector.broadcast %cst_15 : f32 to vector<32x1xf32>
    %40 = arith.divf %38, %39 : vector<32x1xf32>
    %cst_16 = arith.constant 9.99999974E-6 : f32
    %41 = vector.broadcast %cst_16 : f32 to vector<32x1xf32>
    %42 = arith.addf %40, %41 : vector<32x1xf32>
    %43 = math.rsqrt %42 : vector<32x1xf32>
    %44 = vector.broadcast %43 : vector<32x1xf32> to vector<32x128xf32>
    %45 = arith.mulf %35, %44 : vector<32x128xf32>
    %46 = vector.broadcast %27 : vector<1x128xf32> to vector<32x128xf32>
    %47 = arith.mulf %45, %46 : vector<32x128xf32>
    %48 = vector.broadcast %29 : vector<1x128xf32> to vector<32x128xf32>
    %49 = arith.addf %47, %48 : vector<32x128xf32>
    %50 = arith.truncf %49 : vector<32x128xf32> to vector<32x128xbf16>
    %c0_17 = arith.constant 0 : index
    %c0_18 = arith.constant 0 : index
    %c0_19 = arith.constant 0 : index
    %51 = vector.load %arg7[%c0_17, %c0_18, %c0_19] : memref<1x128x384xbf16, #tpu.memory_space<vmem>>, vector<1x128x384xbf16>
    %52 = vector.shape_cast %51 : vector<1x128x384xbf16> to vector<128x384xbf16>
    %cst_20 = arith.constant dense<0.000000e+00> : vector<32x384xf32>
    %53 = tpu.matmul %50, %52, %cst_20 {dimension_numbers = #tpu.dot_dimension_numbers<[1], [0], [0], [1], [0, 0, 1, 1], [], []>} : vector<32x128xbf16>, vector<128x384xbf16>, vector<32x384xf32> -> vector<32x384xf32>
    %c0_21 = arith.constant 0 : index
    %c0_22 = arith.constant 0 : index
    %c0_23 = arith.constant 0 : index
    %54 = vector.load %arg8[%c0_21, %c0_22, %c0_23] : memref<1x1x384xf32, #tpu.memory_space<vmem>>, vector<1x1x384xf32>
    %55 = vector.shape_cast %54 : vector<1x1x384xf32> to vector<1x384xf32>
    %56 = vector.broadcast %55 : vector<1x384xf32> to vector<32x384xf32>
    %57 = arith.addf %53, %56 : vector<32x384xf32>
    %58 = arith.truncf %57 : vector<32x384xf32> to vector<32x384xbf16>
    %59 = tpu.iota {dimensions = array<i32: 0>} : vector<8x8xi32>
    %60 = tpu.iota {dimensions = array<i32: 1>} : vector<8x8xi32>
    %61 = arith.cmpi sle, %60, %59 : vector<8x8xi32>
    %cst_24 = arith.constant 0.000000e+00 : f32
    %cst_25 = arith.constant -1.000000e+09 : f32
    %62 = vector.broadcast %cst_24 : f32 to vector<8x8xf32>
    %63 = vector.broadcast %cst_25 : f32 to vector<8x8xf32>
    %64 = arith.select %61, %62, %63 : vector<8x8xi1>, vector<8x8xf32>
    %65 = vector.shape_cast %64 : vector<8x8xf32> to vector<1x8x8xf32>
    %c0_26 = arith.constant 0 : index
    %c0_27 = arith.constant 0 : index
    %c0_28 = arith.constant 0 : index
    %66 = vector.load %arg9[%c0_26, %c0_27, %c0_28] : memref<1x128x128xbf16, #tpu.memory_space<vmem>>, vector<1x128x128xbf16>
    %67 = vector.shape_cast %66 : vector<1x128x128xbf16> to vector<128x128xbf16>
    %68 = vector.extract_strided_slice %58 {offsets = [0, 0], sizes = [32, 64], strides = [1, 1]} : vector<32x384xbf16> to vector<32x64xbf16>
    %69 = vector.shape_cast %68 : vector<32x64xbf16> to vector<4x8x64xbf16>
    %70 = vector.extract_strided_slice %58 {offsets = [0, 128], sizes = [32, 64], strides = [1, 1]} : vector<32x384xbf16> to vector<32x64xbf16>
    %71 = vector.shape_cast %70 : vector<32x64xbf16> to vector<4x8x64xbf16>
    %72 = vector.extract_strided_slice %58 {offsets = [0, 256], sizes = [32, 64], strides = [1, 1]} : vector<32x384xbf16> to vector<32x64xbf16>
    %73 = vector.shape_cast %72 : vector<32x64xbf16> to vector<4x8x64xbf16>
    "tpu.trace_start"() <{level = 10 : i32, message = "bqe,bke->bqk"}> : () -> ()
    %cst_29 = arith.constant dense<0.000000e+00> : vector<4x8x8xf32>
    %74 = tpu.matmul %69, %71, %cst_29 {dimension_numbers = #tpu.dot_dimension_numbers<[2], [2], [1], [1], [0, 0, 0, 1, 1, 1], [0], [0]>} : vector<4x8x64xbf16>, vector<4x8x64xbf16>, vector<4x8x8xf32> -> vector<4x8x8xf32>
    "tpu.trace_stop"() : () -> ()
    %75 = vector.broadcast %65 : vector<1x8x8xf32> to vector<4x8x8xf32>
    %76 = arith.addf %74, %75 : vector<4x8x8xf32>
    %cst_30 = arith.constant dense<0xFF800000> : vector<4x8xf32>
    %77 = vector.multi_reduction <maximumf>, %76, %cst_30 [2] : vector<4x8x8xf32> to vector<4x8xf32>
    %78 = vector.shape_cast %77 : vector<4x8xf32> to vector<4x8x1xf32>
    %79 = vector.broadcast %78 : vector<4x8x1xf32> to vector<4x8x8xf32>
    %80 = arith.subf %76, %79 : vector<4x8x8xf32>
    %81 = math.exp %80 : vector<4x8x8xf32>
    %cst_31 = arith.constant dense<0.000000e+00> : vector<4x8xf32>
    %82 = vector.multi_reduction <add>, %81, %cst_31 [2] : vector<4x8x8xf32> to vector<4x8xf32>
    %83 = vector.shape_cast %82 : vector<4x8xf32> to vector<4x8x1xf32>
    %84 = tpu.reciprocal %83 {approx = true} : vector<4x8x1xf32> -> vector<4x8x1xf32>
    %85 = vector.broadcast %84 : vector<4x8x1xf32> to vector<4x8x8xf32>
    %86 = arith.mulf %81, %85 : vector<4x8x8xf32>
    %87 = arith.truncf %86 : vector<4x8x8xf32> to vector<4x8x8xbf16>
    "tpu.trace_start"() <{level = 10 : i32, message = "bqk,bke->bqe"}> : () -> ()
    %cst_32 = arith.constant dense<0.000000e+00> : vector<4x8x64xf32>
    %88 = tpu.matmul %87, %73, %cst_32 {dimension_numbers = #tpu.dot_dimension_numbers<[2], [1], [1], [2], [0, 0, 0, 1, 1, 2], [0], [0]>} : vector<4x8x8xbf16>, vector<4x8x64xbf16>, vector<4x8x64xf32> -> vector<4x8x64xf32>
    "tpu.trace_stop"() : () -> ()
    %89 = vector.shape_cast %88 : vector<4x8x64xf32> to vector<32x64xf32>
    %90 = arith.truncf %89 : vector<32x64xf32> to vector<32x64xbf16>
    %91 = vector.extract_strided_slice %67 {offsets = [0, 0], sizes = [64, 128], strides = [1, 1]} : vector<128x128xbf16> to vector<64x128xbf16>
    %cst_33 = arith.constant dense<0.000000e+00> : vector<32x128xf32>
    %92 = tpu.matmul %90, %91, %cst_33 {dimension_numbers = #tpu.dot_dimension_numbers<[1], [0], [0], [1], [0, 0, 1, 1], [], []>} : vector<32x64xbf16>, vector<64x128xbf16>, vector<32x128xf32> -> vector<32x128xf32>
    %93 = vector.extract_strided_slice %58 {offsets = [0, 64], sizes = [32, 64], strides = [1, 1]} : vector<32x384xbf16> to vector<32x64xbf16>
    %94 = vector.shape_cast %93 : vector<32x64xbf16> to vector<4x8x64xbf16>
    %95 = vector.extract_strided_slice %58 {offsets = [0, 192], sizes = [32, 64], strides = [1, 1]} : vector<32x384xbf16> to vector<32x64xbf16>
    %96 = vector.shape_cast %95 : vector<32x64xbf16> to vector<4x8x64xbf16>
    %97 = vector.extract_strided_slice %58 {offsets = [0, 320], sizes = [32, 64], strides = [1, 1]} : vector<32x384xbf16> to vector<32x64xbf16>
    %98 = vector.shape_cast %97 : vector<32x64xbf16> to vector<4x8x64xbf16>
    "tpu.trace_start"() <{level = 10 : i32, message = "bqe,bke->bqk"}> : () -> ()
    %cst_34 = arith.constant dense<0.000000e+00> : vector<4x8x8xf32>
    %99 = tpu.matmul %94, %96, %cst_34 {dimension_numbers = #tpu.dot_dimension_numbers<[2], [2], [1], [1], [0, 0, 0, 1, 1, 1], [0], [0]>} : vector<4x8x64xbf16>, vector<4x8x64xbf16>, vector<4x8x8xf32> -> vector<4x8x8xf32>
    "tpu.trace_stop"() : () -> ()
    %100 = vector.broadcast %65 : vector<1x8x8xf32> to vector<4x8x8xf32>
    %101 = arith.addf %99, %100 : vector<4x8x8xf32>
    %cst_35 = arith.constant dense<0xFF800000> : vector<4x8xf32>
    %102 = vector.multi_reduction <maximumf>, %101, %cst_35 [2] : vector<4x8x8xf32> to vector<4x8xf32>
    %103 = vector.shape_cast %102 : vector<4x8xf32> to vector<4x8x1xf32>
    %104 = vector.broadcast %103 : vector<4x8x1xf32> to vector<4x8x8xf32>
    %105 = arith.subf %101, %104 : vector<4x8x8xf32>
    %106 = math.exp %105 : vector<4x8x8xf32>
    %cst_36 = arith.constant dense<0.000000e+00> : vector<4x8xf32>
    %107 = vector.multi_reduction <add>, %106, %cst_36 [2] : vector<4x8x8xf32> to vector<4x8xf32>
    %108 = vector.shape_cast %107 : vector<4x8xf32> to vector<4x8x1xf32>
    %109 = tpu.reciprocal %108 {approx = true} : vector<4x8x1xf32> -> vector<4x8x1xf32>
    %110 = vector.broadcast %109 : vector<4x8x1xf32> to vector<4x8x8xf32>
    %111 = arith.mulf %106, %110 : vector<4x8x8xf32>
    %112 = arith.truncf %111 : vector<4x8x8xf32> to vector<4x8x8xbf16>
    "tpu.trace_start"() <{level = 10 : i32, message = "bqk,bke->bqe"}> : () -> ()
    %cst_37 = arith.constant dense<0.000000e+00> : vector<4x8x64xf32>
    %113 = tpu.matmul %112, %98, %cst_37 {dimension_numbers = #tpu.dot_dimension_numbers<[2], [1], [1], [2], [0, 0, 0, 1, 1, 2], [0], [0]>} : vector<4x8x8xbf16>, vector<4x8x64xbf16>, vector<4x8x64xf32> -> vector<4x8x64xf32>
    "tpu.trace_stop"() : () -> ()
    %114 = vector.shape_cast %113 : vector<4x8x64xf32> to vector<32x64xf32>
    %115 = arith.truncf %114 : vector<32x64xf32> to vector<32x64xbf16>
    %116 = vector.extract_strided_slice %67 {offsets = [64, 0], sizes = [64, 128], strides = [1, 1]} : vector<128x128xbf16> to vector<64x128xbf16>
    %cst_38 = arith.constant dense<0.000000e+00> : vector<32x128xf32>
    %117 = tpu.matmul %115, %116, %cst_38 {dimension_numbers = #tpu.dot_dimension_numbers<[1], [0], [0], [1], [0, 0, 1, 1], [], []>} : vector<32x64xbf16>, vector<64x128xbf16>, vector<32x128xf32> -> vector<32x128xf32>
    %118 = arith.addf %92, %117 : vector<32x128xf32>
    %c0_39 = arith.constant 0 : index
    %c0_40 = arith.constant 0 : index
    %c0_41 = arith.constant 0 : index
    %119 = vector.load %arg10[%c0_39, %c0_40, %c0_41] : memref<1x1x128xf32, #tpu.memory_space<vmem>>, vector<1x1x128xf32>
    %120 = vector.shape_cast %119 : vector<1x1x128xf32> to vector<1x128xf32>
    %121 = vector.broadcast %120 : vector<1x128xf32> to vector<32x128xf32>
    %122 = arith.addf %118, %121 : vector<32x128xf32>
    %123 = arith.addf %25, %122 : vector<32x128xf32>
    %c0_42 = arith.constant 0 : index
    %c0_43 = arith.constant 0 : index
    %c0_44 = arith.constant 0 : index
    %124 = vector.load %arg11[%c0_42, %c0_43, %c0_44] : memref<1x1x128xf32, #tpu.memory_space<vmem>>, vector<1x1x128xf32>
    %125 = vector.shape_cast %124 : vector<1x1x128xf32> to vector<1x128xf32>
    %c0_45 = arith.constant 0 : index
    %c0_46 = arith.constant 0 : index
    %c0_47 = arith.constant 0 : index
    %126 = vector.load %arg12[%c0_45, %c0_46, %c0_47] : memref<1x1x128xf32, #tpu.memory_space<vmem>>, vector<1x1x128xf32>
    %127 = vector.shape_cast %126 : vector<1x1x128xf32> to vector<1x128xf32>
    %cst_48 = arith.constant dense<0.000000e+00> : vector<32xf32>
    %128 = vector.multi_reduction <add>, %123, %cst_48 [1] : vector<32x128xf32> to vector<32xf32>
    %129 = vector.shape_cast %128 : vector<32xf32> to vector<32x1xf32>
    %cst_49 = arith.constant 1.280000e+02 : f32
    %130 = vector.broadcast %cst_49 : f32 to vector<32x1xf32>
    %131 = arith.divf %129, %130 : vector<32x1xf32>
    %132 = vector.broadcast %131 : vector<32x1xf32> to vector<32x128xf32>
    %133 = arith.subf %123, %132 : vector<32x128xf32>
    %134 = arith.mulf %133, %133 : vector<32x128xf32>
    %cst_50 = arith.constant dense<0.000000e+00> : vector<32xf32>
    %135 = vector.multi_reduction <add>, %134, %cst_50 [1] : vector<32x128xf32> to vector<32xf32>
    %136 = vector.shape_cast %135 : vector<32xf32> to vector<32x1xf32>
    %cst_51 = arith.constant 1.280000e+02 : f32
    %137 = vector.broadcast %cst_51 : f32 to vector<32x1xf32>
    %138 = arith.divf %136, %137 : vector<32x1xf32>
    %cst_52 = arith.constant 9.99999974E-6 : f32
    %139 = vector.broadcast %cst_52 : f32 to vector<32x1xf32>
    %140 = arith.addf %138, %139 : vector<32x1xf32>
    %141 = math.rsqrt %140 : vector<32x1xf32>
    %142 = vector.broadcast %141 : vector<32x1xf32> to vector<32x128xf32>
    %143 = arith.mulf %133, %142 : vector<32x128xf32>
    %144 = vector.broadcast %125 : vector<1x128xf32> to vector<32x128xf32>
    %145 = arith.mulf %143, %144 : vector<32x128xf32>
    %146 = vector.broadcast %127 : vector<1x128xf32> to vector<32x128xf32>
    %147 = arith.addf %145, %146 : vector<32x128xf32>
    %148 = arith.truncf %147 : vector<32x128xf32> to vector<32x128xbf16>
    %c0_53 = arith.constant 0 : index
    %c0_54 = arith.constant 0 : index
    %c0_55 = arith.constant 0 : index
    %149 = vector.load %arg13[%c0_53, %c0_54, %c0_55] : memref<1x128x512xbf16, #tpu.memory_space<vmem>>, vector<1x128x512xbf16>
    %150 = vector.shape_cast %149 : vector<1x128x512xbf16> to vector<128x512xbf16>
    %cst_56 = arith.constant dense<0.000000e+00> : vector<32x512xf32>
    %151 = tpu.matmul %148, %150, %cst_56 {dimension_numbers = #tpu.dot_dimension_numbers<[1], [0], [0], [1], [0, 0, 1, 1], [], []>} : vector<32x128xbf16>, vector<128x512xbf16>, vector<32x512xf32> -> vector<32x512xf32>
    %c0_57 = arith.constant 0 : index
    %c0_58 = arith.constant 0 : index
    %c0_59 = arith.constant 0 : index
    %152 = vector.load %arg14[%c0_57, %c0_58, %c0_59] : memref<1x1x512xf32, #tpu.memory_space<vmem>>, vector<1x1x512xf32>
    %153 = vector.shape_cast %152 : vector<1x1x512xf32> to vector<1x512xf32>
    %154 = vector.broadcast %153 : vector<1x512xf32> to vector<32x512xf32>
    %155 = arith.addf %151, %154 : vector<32x512xf32>
    %cst_60 = arith.constant 1.702000e+00 : f32
    %156 = vector.broadcast %cst_60 : f32 to vector<32x512xf32>
    %157 = arith.mulf %156, %155 : vector<32x512xf32>
    %158 = arith.negf %157 : vector<32x512xf32>
    %159 = math.exp %158 : vector<32x512xf32>
    %cst_61 = arith.constant 1.000000e+00 : f32
    %160 = vector.broadcast %cst_61 : f32 to vector<32x512xf32>
    %161 = arith.addf %160, %159 : vector<32x512xf32>
    %162 = arith.divf %160, %161 : vector<32x512xf32>
    %163 = arith.mulf %155, %162 : vector<32x512xf32>
    %164 = arith.truncf %163 : vector<32x512xf32> to vector<32x512xbf16>
    %c0_62 = arith.constant 0 : index
    %c0_63 = arith.constant 0 : index
    %c0_64 = arith.constant 0 : index
    %165 = vector.load %arg15[%c0_62, %c0_63, %c0_64] : memref<1x512x128xbf16, #tpu.memory_space<vmem>>, vector<1x512x128xbf16>
    %166 = vector.shape_cast %165 : vector<1x512x128xbf16> to vector<512x128xbf16>
    %cst_65 = arith.constant dense<0.000000e+00> : vector<32x128xf32>
    %167 = tpu.matmul %164, %166, %cst_65 {dimension_numbers = #tpu.dot_dimension_numbers<[1], [0], [0], [1], [0, 0, 1, 1], [], []>} : vector<32x512xbf16>, vector<512x128xbf16>, vector<32x128xf32> -> vector<32x128xf32>
    %c0_66 = arith.constant 0 : index
    %c0_67 = arith.constant 0 : index
    %c0_68 = arith.constant 0 : index
    %168 = vector.load %arg16[%c0_66, %c0_67, %c0_68] : memref<1x1x128xf32, #tpu.memory_space<vmem>>, vector<1x1x128xf32>
    %169 = vector.shape_cast %168 : vector<1x1x128xf32> to vector<1x128xf32>
    %170 = vector.broadcast %169 : vector<1x128xf32> to vector<32x128xf32>
    %171 = arith.addf %167, %170 : vector<32x128xf32>
    %172 = arith.addf %123, %171 : vector<32x128xf32>
    %173 = vector.shape_cast %172 : vector<32x128xf32> to vector<4x8x128xf32>
    %174 = arith.truncf %173 : vector<4x8x128xf32> to vector<4x8x128xbf16>
    %c0_69 = arith.constant 0 : index
    %c0_70 = arith.constant 0 : index
    %c0_71 = arith.constant 0 : index
    %175 = vector.load %arg17[%c0_69, %c0_70, %c0_71] : memref<4x8x128xbf16, #tpu.memory_space<vmem>>, vector<4x8x128xbf16>
    tpu.vector_store %arg17[%c0_69, %c0_70, %c0_71], %174 {strides = array<i32>} : memref<4x8x128xbf16, #tpu.memory_space<vmem>>, vector<4x8x128xbf16>,
    return
  }
  func.func @transform_0(%arg0: i32, %arg1: i32) -> (i32, i32, i32) {
    %c0_i32 = arith.constant 0 : i32
    %c0_i32_0 = arith.constant 0 : i32
    %c0_i32_1 = arith.constant 0 : i32
    return %arg0, %c0_i32, %c0_i32_0 : i32, i32, i32
  }
  func.func @transform_1(%arg0: i32, %arg1: i32) -> (i32, i32) {
    %c0_i32 = arith.constant 0 : i32
    %c0_i32_0 = arith.constant 0 : i32
    %c0_i32_1 = arith.constant 0 : i32
    return %c0_i32, %c0_i32_0 : i32, i32
  }
  func.func @transform_2(%arg0: i32, %arg1: i32) -> (i32, i32, i32) {
    %c0_i32 = arith.constant 0 : i32
    %c0_i32_0 = arith.constant 0 : i32
    %c0_i32_1 = arith.constant 0 : i32
    return %arg1, %c0_i32, %c0_i32_0 : i32, i32, i32
  }
  func.func @transform_3(%arg0: i32, %arg1: i32) -> (i32, i32, i32) {
    %c0_i32 = arith.constant 0 : i32
    %c0_i32_0 = arith.constant 0 : i32
    %c0_i32_1 = arith.constant 0 : i32
    return %arg1, %c0_i32, %c0_i32_0 : i32, i32, i32
  }
  func.func @transform_4(%arg0: i32, %arg1: i32) -> (i32, i32, i32) {
    %c0_i32 = arith.constant 0 : i32
    %c0_i32_0 = arith.constant 0 : i32
    %c0_i32_1 = arith.constant 0 : i32
    return %arg1, %c0_i32, %c0_i32_0 : i32, i32, i32
  }
  func.func @transform_5(%arg0: i32, %arg1: i32) -> (i32, i32, i32) {
    %c0_i32 = arith.constant 0 : i32
    %c0_i32_0 = arith.constant 0 : i32
    %c0_i32_1 = arith.constant 0 : i32
    return %arg1, %c0_i32, %c0_i32_0 : i32, i32, i32
  }
  func.func @transform_6(%arg0: i32, %arg1: i32) -> (i32, i32, i32) {
    %c0_i32 = arith.constant 0 : i32
    %c0_i32_0 = arith.constant 0 : i32
    %c0_i32_1 = arith.constant 0 : i32
    return %arg1, %c0_i32, %c0_i32_0 : i32, i32, i32
  }
  func.func @transform_7(%arg0: i32, %arg1: i32) -> (i32, i32, i32) {
    %c0_i32 = arith.constant 0 : i32
    %c0_i32_0 = arith.constant 0 : i32
    %c0_i32_1 = arith.constant 0 : i32
    return %arg1, %c0_i32, %c0_i32_0 : i32, i32, i32
  }
  func.func @transform_8(%arg0: i32, %arg1: i32) -> (i32, i32, i32) {
    %c0_i32 = arith.constant 0 : i32
    %c0_i32_0 = arith.constant 0 : i32
    %c0_i32_1 = arith.constant 0 : i32
    return %arg1, %c0_i32, %c0_i32_0 : i32, i32, i32
  }
  func.func @transform_9(%arg0: i32, %arg1: i32) -> (i32, i32, i32) {
    %c0_i32 = arith.constant 0 : i32
    %c0_i32_0 = arith.constant 0 : i32
    %c0_i32_1 = arith.constant 0 : i32
    return %arg1, %c0_i32, %c0_i32_0 : i32, i32, i32
  }
  func.func @transform_10(%arg0: i32, %arg1: i32) -> (i32, i32, i32) {
    %c0_i32 = arith.constant 0 : i32
    %c0_i32_0 = arith.constant 0 : i32
    %c0_i32_1 = arith.constant 0 : i32
    return %arg1, %c0_i32, %c0_i32_0 : i32, i32, i32
  }
  func.func @transform_11(%arg0: i32, %arg1: i32) -> (i32, i32, i32) {
    %c0_i32 = arith.constant 0 : i32
    %c0_i32_0 = arith.constant 0 : i32
    %c0_i32_1 = arith.constant 0 : i32
    return %arg1, %c0_i32, %c0_i32_0 : i32, i32, i32
  }
  func.func @transform_12(%arg0: i32, %arg1: i32) -> (i32, i32, i32) {
    %c0_i32 = arith.constant 0 : i32
    %c0_i32_0 = arith.constant 0 : i32
    %c0_i32_1 = arith.constant 0 : i32
    return %arg1, %c0_i32, %c0_i32_0 : i32, i32, i32
  }
  func.func @transform_13(%arg0: i32, %arg1: i32) -> (i32, i32, i32) {
    %c0_i32 = arith.constant 0 : i32
    %c0_i32_0 = arith.constant 0 : i32
    %c0_i32_1 = arith.constant 0 : i32
    return %arg1, %c0_i32, %c0_i32_0 : i32, i32, i32
  }
  func.func @transform_14(%arg0: i32, %arg1: i32) -> (i32, i32, i32) {
    %c0_i32 = arith.constant 0 : i32
    %c0_i32_0 = arith.constant 0 : i32
    %c0_i32_1 = arith.constant 0 : i32
    return %arg1, %c0_i32, %c0_i32_0 : i32, i32, i32
  }
  func.func @transform_15(%arg0: i32, %arg1: i32) -> (i32, i32, i32) {
    %c0_i32 = arith.constant 0 : i32
    %c0_i32_0 = arith.constant 0 : i32
    %c0_i32_1 = arith.constant 0 : i32
    return %arg0, %c0_i32, %c0_i32_0 : i32, i32, i32
  }
}

</mosaic_0001>

<llo_original>
// kernel: tpu_custom_call.1
$region0: #{tpu_custom_call.1}
  #allocation0 [shape = 'u32[]', space=smem, size = 0x4, offset = 0x4, fixed_abs, tag = 'smem constant byte address 0x4 - core index']
  #allocation1 [shape = 'u32[72,128]{1,0:T(1,128)}', space=vmem, size = 0x9000, scoped, tag = 'internal scratch']
  %s0 = inlined_call_operand.hbm [shape: f32[8,8,128], index: 0, kind: input, shape index: {}]
  %s1 = inlined_call_operand.hbm [shape: f32[8,128], index: 1, kind: input, shape index: {}]
  %s2 = inlined_call_operand.hbm [shape: f32[3,8,128], index: 2, kind: input, shape index: {}]
  %s3 = inlined_call_operand.hbm [shape: f32[3,1,128], index: 3, kind: input, shape index: {}]
  %s4 = inlined_call_operand.vmem [shape: f32[3,1,128], index: 4, kind: input, shape index: {}]
  %s5 = inlined_call_operand.hbm [shape: bf16[3,128,384], index: 5, kind: input, shape index: {}]
  %s6 = inlined_call_operand.hbm [shape: f32[3,1,384], index: 6, kind: input, shape index: {}]
  %s7 = inlined_call_operand.hbm [shape: bf16[3,128,128], index: 7, kind: input, shape index: {}]
  %s8 = inlined_call_operand.vmem [shape: f32[3,1,128], index: 8, kind: input, shape index: {}]
  %s9 = inlined_call_operand.hbm [shape: f32[3,1,128], index: 9, kind: input, shape index: {}]
  %s10 = inlined_call_operand.vmem [shape: f32[3,1,128], index: 10, kind: input, shape index: {}]
  %s11 = inlined_call_operand.hbm [shape: bf16[3,128,512], index: 11, kind: input, shape index: {}]
  %s12 = inlined_call_operand.hbm [shape: f32[3,1,512], index: 12, kind: input, shape index: {}]
  %s13 = inlined_call_operand.hbm [shape: bf16[3,512,128], index: 13, kind: input, shape index: {}]
  %s14 = inlined_call_operand.vmem [shape: f32[3,1,128], index: 14, kind: input, shape index: {}]
  %s15 = inlined_call_operand.hbm [shape: bf16[8,8,128], index: 15, kind: output, shape index: {}]
  %s16 = sld [smem:[#allocation0]]
  $region141: #{tpu_custom_call.1} parent=0
    _
  %s18 = ssub.s32 1, %s16
  %s19 = scalar_select 0, %s18, %s16
  $region1: #{tpu_custom_call.1} parent=0
    #allocation2 [shape = 'u8[32768]{0}', space=vmem, size = 0x8000, scoped, tag = 'input window, operand 0']
    #allocation3 [shape = 's32[2]{0}', space=sflag, size = 0x8, scoped, tag = 'scoped memory for tpu_custom_call.1']
    #allocation4 [shape = 's32[2]{0}', space=sflag, size = 0x8, scoped, tag = 'scoped memory for tpu_custom_call.1']
    #allocation5 [shape = 'u8[4096]{0}', space=vmem, size = 0x1000, scoped, tag = 'input window, operand 1, single buffered']
    #allocation6 [shape = 's32[1]{0}', space=sflag, size = 0x4, scoped, tag = 'scoped memory for tpu_custom_call.1']
    #allocation7 [shape = 'u8[8192]{0}', space=vmem, size = 0x2000, scoped, tag = 'input window, operand 2']
    #allocation8 [shape = 'u8[1024]{0}', space=vmem, size = 0x400, scoped, tag = 'input window, operand 3']
    #allocation9 [shape = 'u8[196608]{0}', space=vmem, size = 0x30000, scoped, tag = 'input window, operand 5']
    #allocation10 [shape = 'u8[3072]{0}', space=vmem, size = 0xc00, scoped, tag = 'input window, operand 6']
    #allocation11 [shape = 'u8[65536]{0}', space=vmem, size = 0x10000, scoped, tag = 'input window, operand 7']
    #allocation12 [shape = 'u8[1024]{0}', space=vmem, size = 0x400, scoped, tag = 'input window, operand 9']
    #allocation13 [shape = 'u8[262144]{0}', space=vmem, size = 0x40000, scoped, tag = 'input window, operand 11']
    #allocation14 [shape = 'u8[4096]{0}', space=vmem, size = 0x1000, scoped, tag = 'input window, operand 12']
    #allocation15 [shape = 'u8[262144]{0}', space=vmem, size = 0x40000, scoped, tag = 'input window, operand 13']
    #allocation16 [shape = 'u8[16384]{0}', space=vmem, size = 0x4000, scoped, tag = 'output window, operand 0']
    %20 = vsyncpa [#allocation3], 0
    %s21 = scalar_lea.sflag [#allocation3], 1
    %22 = vsyncpa %s21, 0
    %23 = vsyncpa [#allocation6], 0
    %24 = vsyncpa [#allocation4], 0
    %s25 = scalar_lea.sflag [#allocation4], 1
    %26 = vsyncpa %s25, 0
    loop: start=0, step=1, limit=8
    $region2: #{tpu_custom_call.1} parent=1 // loop_pre_header
      _
    $region3: #{tpu_custom_call.1} parent=1 // loop_header
      %s28 = sphi 0, %s32
      %p29 = scmp.ge.s32.totalorder %s28, 8
      %s35 = sphi 0, %s47
      %s36 = sphi 0, %s43
      %s37 = sphi 0, %s35
      %s38 = sphi 0, %s36
      %s39 = sphi 0, %s37
      %s40 = sphi 0, %s38
      %s50 = sphi 0, %s52
      %s53 = sphi 0, %s50
      %s54 = sphi 0, %s53
      %s70 = sphi 0, %s54
      %s74 = sphi 0, %s74
      %s76 = sphi 0, %s74
      %s77 = sphi 0, %s76
      %s91 = sphi 0, %s77
      %s97 = sphi 0, %s99
      %s100 = sphi 0, %s97
      %s101 = sphi 0, %s100
      %s117 = sphi 0, %s101
      %s123 = sphi 0, %s125
      %s126 = sphi 0, %s123
      %s127 = sphi 0, %s126
      %s143 = sphi 0, %s127
      %s149 = sphi 0, %s151
      %s152 = sphi 0, %s149
      %s153 = sphi 0, %s152
      %s169 = sphi 0, %s153
      %s175 = sphi 0, %s177
      %s178 = sphi 0, %s175
      %s179 = sphi 0, %s178
      %s195 = sphi 0, %s179
      %s201 = sphi 0, %s203
      %s204 = sphi 0, %s201
      %s205 = sphi 0, %s204
      %s221 = sphi 0, %s205
      %s227 = sphi 0, %s229
      %s230 = sphi 0, %s227
      %s231 = sphi 0, %s230
      %s247 = sphi 0, %s231
      %s253 = sphi 0, %s255
      %s256 = sphi 0, %s253
      %s257 = sphi 0, %s256
      %s273 = sphi 0, %s257
      %s279 = sphi 0, %s281
      %s282 = sphi 0, %s279
      %s283 = sphi 0, %s282
      %s299 = sphi 0, %s283
      %s305 = sphi 0, %s307
      %s308 = sphi 0, %s305
      %s309 = sphi 0, %s308
      %s325 = sphi 0, %s309
      %s331 = sphi 0, %s333
      %s334 = sphi 0, %s331
      %s335 = sphi 0, %s334
      %s351 = sphi 0, %s335
      %s357 = sphi 0, %s359
      %s360 = sphi 0, %s357
      %s361 = sphi 0, %s360
      %s377 = sphi 0, %s361
      %s383 = sphi 0, %s385
      %s386 = sphi 0, %s383
      %s387 = sphi 0, %s386
      %s403 = sphi 0, %s387
      %s409 = sphi 0, %s411
      %s412 = sphi 0, %s409
      %s413 = sphi 0, %s412
      %s429 = sphi 0, %s413
      %s435 = sphi 0, %s437
      %s438 = sphi 0, %s435
      %s439 = sphi 0, %s438
      %s455 = sphi 0, %s439
    $region4: #{tpu_custom_call.1} parent=1 // loop_header_branch
      %31 = sbr.rel (%p29) target = $region8
    $region5: #{tpu_custom_call.1} parent=1 // loop_body
      %s33 = ssub.s32 %s28, 1
      %s34 = ssub.s32 %s28, 2
      %s41 = sadd.s32 1, %s36
      %p42 = scmp.ge.s32.totalorder %s41, 3
      %s43 = scalar_select %p42, 0, %s41
      %s44 = sadd.s32 1, %s35
      %s45 = scalar_select %p42, %s44, %s35
      %p46 = scmp.ge.s32.totalorder %s45, 2
      %s47 = scalar_select %p46, 0, %s45
      %s48 = ssub.s32 %s35, %s47
      %p49 = scmp.eq.s32.totalorder %s48, 0
      %s51 = sadd.s32 %s50, 1
      %s52 = scalar_select %p49, %s50, %s51
      %p55 = pneg %p49
      %p56 = scmp.eq.s32.totalorder %s28, 5
      %p57 = por %p55, %p56
      %p58 = scmp.ne.s32.totalorder %s50, %s53
      %p59 = scmp.eq.s32.totalorder %s28, 0
      %p60 = por %p58, %p59
      %p61 = scmp.ne.s32.totalorder %s50, %s53
      %p62 = scmp.eq.s32.totalorder %s33, 5
      %p63 = por %p61, %p62
      %p64 = scmp.ne.s32.totalorder %s53, %s54
      %p65 = scmp.eq.s32.totalorder %s33, 0
      %p66 = por %p64, %p65
      %p67 = scmp.ne.s32.totalorder %s53, %s54
      %p68 = scmp.eq.s32.totalorder %s34, 5
      %p69 = por %p67, %p68
      %p71 = scmp.ne.s32.totalorder %s54, %s70
      %p72 = scmp.eq.s32.totalorder %s34, 0
      %p73 = por %p71, %p72
      %s75 = sadd.s32 %s74, 1
      %p78 = scmp.eq.s32.totalorder %s28, 5
      %p79 = scmp.ne.s32.totalorder %s74, %s76
      %p80 = scmp.eq.s32.totalorder %s28, 0
      %p81 = por %p79, %p80
      %p82 = scmp.ne.s32.totalorder %s74, %s76
      %p83 = scmp.eq.s32.totalorder %s33, 5
      %p84 = por %p82, %p83
      %p85 = scmp.ne.s32.totalorder %s76, %s77
      %p86 = scmp.eq.s32.totalorder %s33, 0
      %p87 = por %p85, %p86
      %p88 = scmp.ne.s32.totalorder %s76, %s77
      %p89 = scmp.eq.s32.totalorder %s34, 5
      %p90 = por %p88, %p89
      %p92 = scmp.ne.s32.totalorder %s77, %s91
      %p93 = scmp.eq.s32.totalorder %s34, 0
      %p94 = por %p92, %p93
      %s95 = ssub.s32 %s36, %s43
      %p96 = scmp.eq.s32.totalorder %s95, 0
      %s98 = sadd.s32 %s97, 1
      %s99 = scalar_select %p96, %s97, %s98
      %p102 = pneg %p96
      %p103 = scmp.eq.s32.totalorder %s28, 5
      %p104 = por %p102, %p103
      %p105 = scmp.ne.s32.totalorder %s97, %s100
      %p106 = scmp.eq.s32.totalorder %s28, 0
      %p107 = por %p105, %p106
      %p108 = scmp.ne.s32.totalorder %s97, %s100
      %p109 = scmp.eq.s32.totalorder %s33, 5
      %p110 = por %p108, %p109
      %p111 = scmp.ne.s32.totalorder %s100, %s101
      %p112 = scmp.eq.s32.totalorder %s33, 0
      %p113 = por %p111, %p112
      %p114 = scmp.ne.s32.totalorder %s100, %s101
      %p115 = scmp.eq.s32.totalorder %s34, 5
      %p116 = por %p114, %p115
      %p118 = scmp.ne.s32.totalorder %s101, %s117
      %p119 = scmp.eq.s32.totalorder %s34, 0
      %p120 = por %p118, %p119
      %s121 = ssub.s32 %s36, %s43
      %p122 = scmp.eq.s32.totalorder %s121, 0
      %s124 = sadd.s32 %s123, 1
      %s125 = scalar_select %p122, %s123, %s124
      %p128 = pneg %p122
      %p129 = scmp.eq.s32.totalorder %s28, 5
      %p130 = por %p128, %p129
      %p131 = scmp.ne.s32.totalorder %s123, %s126
      %p132 = scmp.eq.s32.totalorder %s28, 0
      %p133 = por %p131, %p132
      %p134 = scmp.ne.s32.totalorder %s123, %s126
      %p135 = scmp.eq.s32.totalorder %s33, 5
      %p136 = por %p134, %p135
      %p137 = scmp.ne.s32.totalorder %s126, %s127
      %p138 = scmp.eq.s32.totalorder %s33, 0
      %p139 = por %p137, %p138
      %p140 = scmp.ne.s32.totalorder %s126, %s127
      %p141 = scmp.eq.s32.totalorder %s34, 5
      %p142 = por %p140, %p141
      %p144 = scmp.ne.s32.totalorder %s127, %s143
      %p145 = scmp.eq.s32.totalorder %s34, 0
      %p146 = por %p144, %p145
      %s147 = ssub.s32 %s36, %s43
      %p148 = scmp.eq.s32.totalorder %s147, 0
      %s150 = sadd.s32 %s149, 1
      %s151 = scalar_select %p148, %s149, %s150
      %p154 = pneg %p148
      %p155 = scmp.eq.s32.totalorder %s28, 5
      %p156 = por %p154, %p155
      %p157 = scmp.ne.s32.totalorder %s149, %s152
      %p158 = scmp.eq.s32.totalorder %s28, 0
      %p159 = por %p157, %p158
      %p160 = scmp.ne.s32.totalorder %s149, %s152
      %p161 = scmp.eq.s32.totalorder %s33, 5
      %p162 = por %p160, %p161
      %p163 = scmp.ne.s32.totalorder %s152, %s153
      %p164 = scmp.eq.s32.totalorder %s33, 0
      %p165 = por %p163, %p164
      %p166 = scmp.ne.s32.totalorder %s152, %s153
      %p167 = scmp.eq.s32.totalorder %s34, 5
      %p168 = por %p166, %p167
      %p170 = scmp.ne.s32.totalorder %s153, %s169
      %p171 = scmp.eq.s32.totalorder %s34, 0
      %p172 = por %p170, %p171
      %s173 = ssub.s32 %s36, %s43
      %p174 = scmp.eq.s32.totalorder %s173, 0
      %s176 = sadd.s32 %s175, 1
      %s177 = scalar_select %p174, %s175, %s176
      %p180 = pneg %p174
      %p181 = scmp.eq.s32.totalorder %s28, 5
      %p182 = por %p180, %p181
      %p183 = scmp.ne.s32.totalorder %s175, %s178
      %p184 = scmp.eq.s32.totalorder %s28, 0
      %p185 = por %p183, %p184
      %p186 = scmp.ne.s32.totalorder %s175, %s178
      %p187 = scmp.eq.s32.totalorder %s33, 5
      %p188 = por %p186, %p187
      %p189 = scmp.ne.s32.totalorder %s178, %s179
      %p190 = scmp.eq.s32.totalorder %s33, 0
      %p191 = por %p189, %p190
      %p192 = scmp.ne.s32.totalorder %s178, %s179
      %p193 = scmp.eq.s32.totalorder %s34, 5
      %p194 = por %p192, %p193
      %p196 = scmp.ne.s32.totalorder %s179, %s195
      %p197 = scmp.eq.s32.totalorder %s34, 0
      %p198 = por %p196, %p197
      %s199 = ssub.s32 %s36, %s43
      %p200 = scmp.eq.s32.totalorder %s199, 0
      %s202 = sadd.s32 %s201, 1
      %s203 = scalar_select %p200, %s201, %s202
      %p206 = pneg %p200
      %p207 = scmp.eq.s32.totalorder %s28, 5
      %p208 = por %p206, %p207
      %p209 = scmp.ne.s32.totalorder %s201, %s204
      %p210 = scmp.eq.s32.totalorder %s28, 0
      %p211 = por %p209, %p210
      %p212 = scmp.ne.s32.totalorder %s201, %s204
      %p213 = scmp.eq.s32.totalorder %s33, 5
      %p214 = por %p212, %p213
      %p215 = scmp.ne.s32.totalorder %s204, %s205
      %p216 = scmp.eq.s32.totalorder %s33, 0
      %p217 = por %p215, %p216
      %p218 = scmp.ne.s32.totalorder %s204, %s205
      %p219 = scmp.eq.s32.totalorder %s34, 5
      %p220 = por %p218, %p219
      %p222 = scmp.ne.s32.totalorder %s205, %s221
      %p223 = scmp.eq.s32.totalorder %s34, 0
      %p224 = por %p222, %p223
      %s225 = ssub.s32 %s36, %s43
      %p226 = scmp.eq.s32.totalorder %s225, 0
      %s228 = sadd.s32 %s227, 1
      %s229 = scalar_select %p226, %s227, %s228
      %p232 = pneg %p226
      %p233 = scmp.eq.s32.totalorder %s28, 5
      %p234 = por %p232, %p233
      %p235 = scmp.ne.s32.totalorder %s227, %s230
      %p236 = scmp.eq.s32.totalorder %s28, 0
      %p237 = por %p235, %p236
      %p238 = scmp.ne.s32.totalorder %s227, %s230
      %p239 = scmp.eq.s32.totalorder %s33, 5
      %p240 = por %p238, %p239
      %p241 = scmp.ne.s32.totalorder %s230, %s231
      %p242 = scmp.eq.s32.totalorder %s33, 0
      %p243 = por %p241, %p242
      %p244 = scmp.ne.s32.totalorder %s230, %s231
      %p245 = scmp.eq.s32.totalorder %s34, 5
      %p246 = por %p244, %p245
      %p248 = scmp.ne.s32.totalorder %s231, %s247
      %p249 = scmp.eq.s32.totalorder %s34, 0
      %p250 = por %p248, %p249
      %s251 = ssub.s32 %s36, %s43
      %p252 = scmp.eq.s32.totalorder %s251, 0
      %s254 = sadd.s32 %s253, 1
      %s255 = scalar_select %p252, %s253, %s254
      %p258 = pneg %p252
      %p259 = scmp.eq.s32.totalorder %s28, 5
      %p260 = por %p258, %p259
      %p261 = scmp.ne.s32.totalorder %s253, %s256
      %p262 = scmp.eq.s32.totalorder %s28, 0
      %p263 = por %p261, %p262
      %p264 = scmp.ne.s32.totalorder %s253, %s256
      %p265 = scmp.eq.s32.totalorder %s33, 5
      %p266 = por %p264, %p265
      %p267 = scmp.ne.s32.totalorder %s256, %s257
      %p268 = scmp.eq.s32.totalorder %s33, 0
      %p269 = por %p267, %p268
      %p270 = scmp.ne.s32.totalorder %s256, %s257
      %p271 = scmp.eq.s32.totalorder %s34, 5
      %p272 = por %p270, %p271
      %p274 = scmp.ne.s32.totalorder %s257, %s273
      %p275 = scmp.eq.s32.totalorder %s34, 0
      %p276 = por %p274, %p275
      %s277 = ssub.s32 %s36, %s43
      %p278 = scmp.eq.s32.totalorder %s277, 0
      %s280 = sadd.s32 %s279, 1
      %s281 = scalar_select %p278, %s279, %s280
      %p284 = pneg %p278
      %p285 = scmp.eq.s32.totalorder %s28, 5
      %p286 = por %p284, %p285
      %p287 = scmp.ne.s32.totalorder %s279, %s282
      %p288 = scmp.eq.s32.totalorder %s28, 0
      %p289 = por %p287, %p288
      %p290 = scmp.ne.s32.totalorder %s279, %s282
      %p291 = scmp.eq.s32.totalorder %s33, 5
      %p292 = por %p290, %p291
      %p293 = scmp.ne.s32.totalorder %s282, %s283
      %p294 = scmp.eq.s32.totalorder %s33, 0
      %p295 = por %p293, %p294
      %p296 = scmp.ne.s32.totalorder %s282, %s283
      %p297 = scmp.eq.s32.totalorder %s34, 5
      %p298 = por %p296, %p297
      %p300 = scmp.ne.s32.totalorder %s283, %s299
      %p301 = scmp.eq.s32.totalorder %s34, 0
      %p302 = por %p300, %p301
      %s303 = ssub.s32 %s36, %s43
      %p304 = scmp.eq.s32.totalorder %s303, 0
      %s306 = sadd.s32 %s305, 1
      %s307 = scalar_select %p304, %s305, %s306
      %p310 = pneg %p304
      %p311 = scmp.eq.s32.totalorder %s28, 5
      %p312 = por %p310, %p311
      %p313 = scmp.ne.s32.totalorder %s305, %s308
      %p314 = scmp.eq.s32.totalorder %s28, 0
      %p315 = por %p313, %p314
      %p316 = scmp.ne.s32.totalorder %s305, %s308
      %p317 = scmp.eq.s32.totalorder %s33, 5
      %p318 = por %p316, %p317
      %p319 = scmp.ne.s32.totalorder %s308, %s309
      %p320 = scmp.eq.s32.totalorder %s33, 0
      %p321 = por %p319, %p320
      %p322 = scmp.ne.s32.totalorder %s308, %s309
      %p323 = scmp.eq.s32.totalorder %s34, 5
      %p324 = por %p322, %p323
      %p326 = scmp.ne.s32.totalorder %s309, %s325
      %p327 = scmp.eq.s32.totalorder %s34, 0
      %p328 = por %p326, %p327
      %s329 = ssub.s32 %s36, %s43
      %p330 = scmp.eq.s32.totalorder %s329, 0
      %s332 = sadd.s32 %s331, 1
      %s333 = scalar_select %p330, %s331, %s332
      %p336 = pneg %p330
      %p337 = scmp.eq.s32.totalorder %s28, 5
      %p338 = por %p336, %p337
      %p339 = scmp.ne.s32.totalorder %s331, %s334
      %p340 = scmp.eq.s32.totalorder %s28, 0
      %p341 = por %p339, %p340
      %p342 = scmp.ne.s32.totalorder %s331, %s334
      %p343 = scmp.eq.s32.totalorder %s33, 5
      %p344 = por %p342, %p343
      %p345 = scmp.ne.s32.totalorder %s334, %s335
      %p346 = scmp.eq.s32.totalorder %s33, 0
      %p347 = por %p345, %p346
      %p348 = scmp.ne.s32.totalorder %s334, %s335
      %p349 = scmp.eq.s32.totalorder %s34, 5
      %p350 = por %p348, %p349
      %p352 = scmp.ne.s32.totalorder %s335, %s351
      %p353 = scmp.eq.s32.totalorder %s34, 0
      %p354 = por %p352, %p353
      %s355 = ssub.s32 %s36, %s43
      %p356 = scmp.eq.s32.totalorder %s355, 0
      %s358 = sadd.s32 %s357, 1
      %s359 = scalar_select %p356, %s357, %s358
      %p362 = pneg %p356
      %p363 = scmp.eq.s32.totalorder %s28, 5
      %p364 = por %p362, %p363
      %p365 = scmp.ne.s32.totalorder %s357, %s360
      %p366 = scmp.eq.s32.totalorder %s28, 0
      %p367 = por %p365, %p366
      %p368 = scmp.ne.s32.totalorder %s357, %s360
      %p369 = scmp.eq.s32.totalorder %s33, 5
      %p370 = por %p368, %p369
      %p371 = scmp.ne.s32.totalorder %s360, %s361
      %p372 = scmp.eq.s32.totalorder %s33, 0
      %p373 = por %p371, %p372
      %p374 = scmp.ne.s32.totalorder %s360, %s361
      %p375 = scmp.eq.s32.totalorder %s34, 5
      %p376 = por %p374, %p375
      %p378 = scmp.ne.s32.totalorder %s361, %s377
      %p379 = scmp.eq.s32.totalorder %s34, 0
      %p380 = por %p378, %p379
      %s381 = ssub.s32 %s36, %s43
      %p382 = scmp.eq.s32.totalorder %s381, 0
      %s384 = sadd.s32 %s383, 1
      %s385 = scalar_select %p382, %s383, %s384
      %p388 = pneg %p382
      %p389 = scmp.eq.s32.totalorder %s28, 5
      %p390 = por %p388, %p389
      %p391 = scmp.ne.s32.totalorder %s383, %s386
      %p392 = scmp.eq.s32.totalorder %s28, 0
      %p393 = por %p391, %p392
      %p394 = scmp.ne.s32.totalorder %s383, %s386
      %p395 = scmp.eq.s32.totalorder %s33, 5
      %p396 = por %p394, %p395
      %p397 = scmp.ne.s32.totalorder %s386, %s387
      %p398 = scmp.eq.s32.totalorder %s33, 0
      %p399 = por %p397, %p398
      %p400 = scmp.ne.s32.totalorder %s386, %s387
      %p401 = scmp.eq.s32.totalorder %s34, 5
      %p402 = por %p400, %p401
      %p404 = scmp.ne.s32.totalorder %s387, %s403
      %p405 = scmp.eq.s32.totalorder %s34, 0
      %p406 = por %p404, %p405
      %s407 = ssub.s32 %s36, %s43
      %p408 = scmp.eq.s32.totalorder %s407, 0
      %s410 = sadd.s32 %s409, 1
      %s411 = scalar_select %p408, %s409, %s410
      %p414 = pneg %p408
      %p415 = scmp.eq.s32.totalorder %s28, 5
      %p416 = por %p414, %p415
      %p417 = scmp.ne.s32.totalorder %s409, %s412
      %p418 = scmp.eq.s32.totalorder %s28, 0
      %p419 = por %p417, %p418
      %p420 = scmp.ne.s32.totalorder %s409, %s412
      %p421 = scmp.eq.s32.totalorder %s33, 5
      %p422 = por %p420, %p421
      %p423 = scmp.ne.s32.totalorder %s412, %s413
      %p424 = scmp.eq.s32.totalorder %s33, 0
      %p425 = por %p423, %p424
      %p426 = scmp.ne.s32.totalorder %s412, %s413
      %p427 = scmp.eq.s32.totalorder %s34, 5
      %p428 = por %p426, %p427
      %p430 = scmp.ne.s32.totalorder %s413, %s429
      %p431 = scmp.eq.s32.totalorder %s34, 0
      %p432 = por %p430, %p431
      %s433 = ssub.s32 %s35, %s47
      %p434 = scmp.eq.s32.totalorder %s433, 0
      %s436 = sadd.s32 %s435, 1
      %s437 = scalar_select %p434, %s435, %s436
      %p440 = pneg %p434
      %p441 = scmp.eq.s32.totalorder %s28, 5
      %p442 = por %p440, %p441
      %p443 = scmp.ne.s32.totalorder %s435, %s438
      %p444 = scmp.eq.s32.totalorder %s28, 0
      %p445 = por %p443, %p444
      %p446 = scmp.ne.s32.totalorder %s435, %s438
      %p447 = scmp.eq.s32.totalorder %s33, 5
      %p448 = por %p446, %p447
      %p449 = scmp.ne.s32.totalorder %s438, %s439
      %p450 = scmp.eq.s32.totalorder %s33, 0
      %p451 = por %p449, %p450
      %p452 = scmp.ne.s32.totalorder %s438, %s439
      %p453 = scmp.eq.s32.totalorder %s34, 5
      %p454 = por %p452, %p453
      %p456 = scmp.ne.s32.totalorder %s439, %s455
      %p457 = scmp.eq.s32.totalorder %s34, 0
      %p458 = por %p456, %p457
      %p459 = scmp.le.s32.totalorder 1, %s28
      %p460 = scmp.lt.s32.totalorder %s28, 7
      %p461 = pnand %p459, %p460
      %p462 = pneg %p461
      // Predicated region
      $region9: #{tpu_custom_call.1} parent=5 // pred_check
        _
      $region10: #{tpu_custom_call.1} parent=5 // pred_check_branch
        %464 = sbr.rel (%p461) target = $region12
      $region11: #{tpu_custom_call.1} parent=5 // pred_region
        %s465 = ssub.s32 %s28, 1
        // Predicated region
        $region13: #{tpu_custom_call.1} parent=11 // pred_check
          %p466 = pneg %p87
        $region14: #{tpu_custom_call.1} parent=11 // pred_check_branch
          %468 = sbr.rel (%p466) target = $region16
        $region15: #{tpu_custom_call.1} parent=11 // pred_region
          %470 = vsyncadd [#allocation6], 0
          %s472 = sshll.u32 %s1, 4
          %s473 = int_to_ptr.hbm [resolvable:$true] %s472
          %s474 = sshll.u32 [#allocation5], 4
          %s475 = int_to_ptr.vmem [resolvable:$true] %s474
          %477 = dma.hbm_to_vmem [thread:$0]  %s473, 128, %s475, [#allocation6]
        $region16: #{tpu_custom_call.1} parent=11 // pred_fallthru
          _
      $region12: #{tpu_custom_call.1} parent=5 // pred_fallthru
        _
      %p478 = scmp.lt.s32.totalorder %s28, 6
      // Predicated region
      $region17: #{tpu_custom_call.1} parent=5 // pred_check
        %p479 = pneg %p478
      $region18: #{tpu_custom_call.1} parent=5 // pred_check_branch
        %481 = sbr.rel (%p479) target = $region20
      $region19: #{tpu_custom_call.1} parent=5 // pred_region
        // Predicated region
        $region21: #{tpu_custom_call.1} parent=19 // pred_check
          %p482 = pneg %p60
        $region22: #{tpu_custom_call.1} parent=19 // pred_check_branch
          %484 = sbr.rel (%p482) target = $region24
        $region23: #{tpu_custom_call.1} parent=19 // pred_region
          %s485 = sand.u32 %s28, 1
          %s486 = scalar_lea.sflag [#allocation3], %s485
          %s487 = sand.u32 %s50, 1
          %s488 = smul.addr %s487, 32
          %s489 = scalar_lea.vmem [#allocation2], %s488
          %s490 = smul.u32 4, %s35
          %492 = vsyncadd %s486, 0
          %s493 = smul.addr %s490, 8
          %s494 = scalar_lea.hbm %s0, %s493
          %s495 = sshll.u32 %s494, 4
          %s496 = int_to_ptr.hbm [resolvable:$true] %s495
          %s497 = sshll.u32 %s489, 4
          %s498 = int_to_ptr.vmem [resolvable:$true] %s497
          %503 = dma.hbm_to_vmem [thread:$0]  %s496, 512, %s498, %s486, 128, 128, 8
        $region24: #{tpu_custom_call.1} parent=19 // pred_fallthru
          _
        // Predicated region
        $region25: #{tpu_custom_call.1} parent=19 // pred_check
          %p504 = pneg %p107
        $region26: #{tpu_custom_call.1} parent=19 // pred_check_branch
          %506 = sbr.rel (%p504) target = $region28
        $region27: #{tpu_custom_call.1} parent=19 // pred_region
          %s507 = sand.u32 %s28, 1
          %s508 = scalar_lea.sflag [#allocation3], %s507
          %s509 = sand.u32 %s97, 1
          %s510 = smul.addr %s509, 8
          %s511 = scalar_lea.vmem [#allocation7], %s510
          %513 = vsyncadd %s508, 0
          %s514 = smul.addr %s36, 8
          %s515 = scalar_lea.hbm %s2, %s514
          %s517 = sshll.u32 %s515, 4
          %s518 = int_to_ptr.hbm [resolvable:$true] %s517
          %s519 = sshll.u32 %s511, 4
          %s520 = int_to_ptr.vmem [resolvable:$true] %s519
          %522 = dma.hbm_to_vmem [thread:$0]  %s518, 128, %s520, %s508
        $region28: #{tpu_custom_call.1} parent=19 // pred_fallthru
          _
        // Predicated region
        $region29: #{tpu_custom_call.1} parent=19 // pred_check
          %p523 = pneg %p133
        $region30: #{tpu_custom_call.1} parent=19 // pred_check_branch
          %525 = sbr.rel (%p523) target = $region32
        $region31: #{tpu_custom_call.1} parent=19 // pred_region
          %s526 = sand.u32 %s28, 1
          %s527 = scalar_lea.sflag [#allocation3], %s526
          %s528 = sand.u32 %s123, 1
          %s529 = scalar_lea.vmem [#allocation8], %s528
          %531 = vsyncadd %s527, 0
          %s532 = scalar_lea.hbm %s3, %s36
          %s534 = sshll.u32 %s532, 4
          %s535 = int_to_ptr.hbm [resolvable:$true] %s534
          %s536 = sshll.u32 %s529, 4
          %s537 = int_to_ptr.vmem [resolvable:$true] %s536
          %539 = dma.hbm_to_vmem [thread:$0]  %s535, 16, %s537, %s527
        $region32: #{tpu_custom_call.1} parent=19 // pred_fallthru
          _
        // Predicated region
        $region33: #{tpu_custom_call.1} parent=19 // pred_check
          %p540 = pneg %p159
        $region34: #{tpu_custom_call.1} parent=19 // pred_check_branch
          %542 = sbr.rel (%p540) target = $region36
        $region35: #{tpu_custom_call.1} parent=19 // pred_region
          %p543 = scmp.lt.s32.totalorder %s36, 2
          %s544 = scalar_select %p543, %s36, 2
          %s545 = scalar_lea.vmem %s4, %s544
        $region36: #{tpu_custom_call.1} parent=19 // pred_fallthru
          _
        // Predicated region
        $region37: #{tpu_custom_call.1} parent=19 // pred_check
          %p546 = pneg %p185
        $region38: #{tpu_custom_call.1} parent=19 // pred_check_branch
          %548 = sbr.rel (%p546) target = $region40
        $region39: #{tpu_custom_call.1} parent=19 // pred_region
          %s549 = sand.u32 %s28, 1
          %s550 = scalar_lea.sflag [#allocation3], %s549
          %s551 = sand.u32 %s175, 1
          %s552 = smul.addr %s551, 192
          %s553 = scalar_lea.vmem [#allocation9], %s552
          %555 = vsyncadd %s550, 0
          %s556 = smul.addr %s36, 48
          %s557 = smul.addr %s556, 4
          %s558 = scalar_lea.hbm %s5, %s557
          %s559 = sshll.u32 %s558, 4
          %s560 = int_to_ptr.hbm [resolvable:$true] %s559
          %s561 = sshll.u32 %s553, 4
          %s562 = int_to_ptr.vmem [resolvable:$true] %s561
          %567 = dma.hbm_to_vmem [thread:$0]  %s560, 3072, %s562, %s550, 192, 192, 12
        $region40: #{tpu_custom_call.1} parent=19 // pred_fallthru
          _
        // Predicated region
        $region41: #{tpu_custom_call.1} parent=19 // pred_check
          %p568 = pneg %p211
        $region42: #{tpu_custom_call.1} parent=19 // pred_check_branch
          %570 = sbr.rel (%p568) target = $region44
        $region43: #{tpu_custom_call.1} parent=19 // pred_region
          %s571 = sand.u32 %s28, 1
          %s572 = scalar_lea.sflag [#allocation3], %s571
          %s573 = sand.u32 %s201, 1
          %s574 = smul.addr %s573, 3
          %s575 = scalar_lea.vmem [#allocation10], %s574
          %577 = vsyncadd %s572, 0
          %s578 = smul.addr %s36, 3
          %s579 = scalar_lea.hbm %s6, %s578
          %s581 = sshll.u32 %s579, 4
          %s582 = int_to_ptr.hbm [resolvable:$true] %s581
          %s583 = sshll.u32 %s575, 4
          %s584 = int_to_ptr.vmem [resolvable:$true] %s583
          %586 = dma.hbm_to_vmem [thread:$0]  %s582, 48, %s584, %s572
        $region44: #{tpu_custom_call.1} parent=19 // pred_fallthru
          _
        // Predicated region
        $region45: #{tpu_custom_call.1} parent=19 // pred_check
          %p587 = pneg %p237
        $region46: #{tpu_custom_call.1} parent=19 // pred_check_branch
          %589 = sbr.rel (%p587) target = $region48
        $region47: #{tpu_custom_call.1} parent=19 // pred_region
          %s590 = sand.u32 %s28, 1
          %s591 = scalar_lea.sflag [#allocation3], %s590
          %s592 = sand.u32 %s227, 1
          %s593 = smul.addr %s592, 64
          %s594 = scalar_lea.vmem [#allocation11], %s593
          %596 = vsyncadd %s591, 0
          %s597 = smul.addr %s36, 16
          %s598 = smul.addr %s597, 4
          %s599 = scalar_lea.hbm %s7, %s598
          %s600 = sshll.u32 %s599, 4
          %s601 = int_to_ptr.hbm [resolvable:$true] %s600
          %s602 = sshll.u32 %s594, 4
          %s603 = int_to_ptr.vmem [resolvable:$true] %s602
          %608 = dma.hbm_to_vmem [thread:$0]  %s601, 1024, %s603, %s591, 64, 64, 4
        $region48: #{tpu_custom_call.1} parent=19 // pred_fallthru
          _
        // Predicated region
        $region49: #{tpu_custom_call.1} parent=19 // pred_check
          %p609 = pneg %p263
        $region50: #{tpu_custom_call.1} parent=19 // pred_check_branch
          %611 = sbr.rel (%p609) target = $region52
        $region51: #{tpu_custom_call.1} parent=19 // pred_region
          %p612 = scmp.lt.s32.totalorder %s36, 2
          %s613 = scalar_select %p612, %s36, 2
          %s614 = scalar_lea.vmem %s8, %s613
        $region52: #{tpu_custom_call.1} parent=19 // pred_fallthru
          _
        // Predicated region
        $region53: #{tpu_custom_call.1} parent=19 // pred_check
          %p615 = pneg %p289
        $region54: #{tpu_custom_call.1} parent=19 // pred_check_branch
          %617 = sbr.rel (%p615) target = $region56
        $region55: #{tpu_custom_call.1} parent=19 // pred_region
          %s618 = sand.u32 %s28, 1
          %s619 = scalar_lea.sflag [#allocation3], %s618
          %s620 = sand.u32 %s279, 1
          %s621 = scalar_lea.vmem [#allocation12], %s620
          %623 = vsyncadd %s619, 0
          %s624 = scalar_lea.hbm %s9, %s36
          %s626 = sshll.u32 %s624, 4
          %s627 = int_to_ptr.hbm [resolvable:$true] %s626
          %s628 = sshll.u32 %s621, 4
          %s629 = int_to_ptr.vmem [resolvable:$true] %s628
          %631 = dma.hbm_to_vmem [thread:$0]  %s627, 16, %s629, %s619
        $region56: #{tpu_custom_call.1} parent=19 // pred_fallthru
          _
        // Predicated region
        $region57: #{tpu_custom_call.1} parent=19 // pred_check
          %p632 = pneg %p315
        $region58: #{tpu_custom_call.1} parent=19 // pred_check_branch
          %634 = sbr.rel (%p632) target = $region60
        $region59: #{tpu_custom_call.1} parent=19 // pred_region
          %p635 = scmp.lt.s32.totalorder %s36, 2
          %s636 = scalar_select %p635, %s36, 2
          %s637 = scalar_lea.vmem %s10, %s636
        $region60: #{tpu_custom_call.1} parent=19 // pred_fallthru
          _
        // Predicated region
        $region61: #{tpu_custom_call.1} parent=19 // pred_check
          %p638 = pneg %p341
        $region62: #{tpu_custom_call.1} parent=19 // pred_check_branch
          %640 = sbr.rel (%p638) target = $region64
        $region63: #{tpu_custom_call.1} parent=19 // pred_region
          %s641 = sand.u32 %s28, 1
          %s642 = scalar_lea.sflag [#allocation3], %s641
          %s643 = sand.u32 %s331, 1
          %s644 = smul.addr %s643, 256
          %s645 = scalar_lea.vmem [#allocation13], %s644
          %647 = vsyncadd %s642, 0
          %s648 = smul.addr %s36, 64
          %s649 = smul.addr %s648, 4
          %s650 = scalar_lea.hbm %s11, %s649
          %s651 = sshll.u32 %s650, 4
          %s652 = int_to_ptr.hbm [resolvable:$true] %s651
          %s653 = sshll.u32 %s645, 4
          %s654 = int_to_ptr.vmem [resolvable:$true] %s653
          %659 = dma.hbm_to_vmem [thread:$0]  %s652, 4096, %s654, %s642, 256, 256, 16
        $region64: #{tpu_custom_call.1} parent=19 // pred_fallthru
          _
        // Predicated region
        $region65: #{tpu_custom_call.1} parent=19 // pred_check
          %p660 = pneg %p367
        $region66: #{tpu_custom_call.1} parent=19 // pred_check_branch
          %662 = sbr.rel (%p660) target = $region68
        $region67: #{tpu_custom_call.1} parent=19 // pred_region
          %s663 = sand.u32 %s28, 1
          %s664 = scalar_lea.sflag [#allocation3], %s663
          %s665 = sand.u32 %s357, 1
          %s666 = smul.addr %s665, 4
          %s667 = scalar_lea.vmem [#allocation14], %s666
          %669 = vsyncadd %s664, 0
          %s670 = smul.addr %s36, 4
          %s671 = scalar_lea.hbm %s12, %s670
          %s673 = sshll.u32 %s671, 4
          %s674 = int_to_ptr.hbm [resolvable:$true] %s673
          %s675 = sshll.u32 %s667, 4
          %s676 = int_to_ptr.vmem [resolvable:$true] %s675
          %678 = dma.hbm_to_vmem [thread:$0]  %s674, 64, %s676, %s664
        $region68: #{tpu_custom_call.1} parent=19 // pred_fallthru
          _
        // Predicated region
        $region69: #{tpu_custom_call.1} parent=19 // pred_check
          %p679 = pneg %p393
        $region70: #{tpu_custom_call.1} parent=19 // pred_check_branch
          %681 = sbr.rel (%p679) target = $region72
        $region71: #{tpu_custom_call.1} parent=19 // pred_region
          %s682 = sand.u32 %s28, 1
          %s683 = scalar_lea.sflag [#allocation3], %s682
          %s684 = sand.u32 %s383, 1
          %s685 = smul.addr %s684, 256
          %s686 = scalar_lea.vmem [#allocation15], %s685
          %688 = vsyncadd %s683, 0
          %s689 = smul.addr %s36, 64
          %s690 = smul.addr %s689, 4
          %s691 = scalar_lea.hbm %s13, %s690
          %s692 = sshll.u32 %s691, 4
          %s693 = int_to_ptr.hbm [resolvable:$true] %s692
          %s694 = sshll.u32 %s686, 4
          %s695 = int_to_ptr.vmem [resolvable:$true] %s694
          %700 = dma.hbm_to_vmem [thread:$0]  %s693, 4096, %s695, %s683, 64, 64, 4
        $region72: #{tpu_custom_call.1} parent=19 // pred_fallthru
          _
        // Predicated region
        $region73: #{tpu_custom_call.1} parent=19 // pred_check
          %p701 = pneg %p419
        $region74: #{tpu_custom_call.1} parent=19 // pred_check_branch
          %703 = sbr.rel (%p701) target = $region76
        $region75: #{tpu_custom_call.1} parent=19 // pred_region
          %p704 = scmp.lt.s32.totalorder %s36, 2
          %s705 = scalar_select %p704, %s36, 2
          %s706 = scalar_lea.vmem %s14, %s705
        $region76: #{tpu_custom_call.1} parent=19 // pred_fallthru
          _
      $region20: #{tpu_custom_call.1} parent=5 // pred_fallthru
        _
      %p707 = scmp.le.s32.totalorder 1, %s28
      %p708 = scmp.lt.s32.totalorder %s28, 7
      %p709 = pnand %p707, %p708
      %p710 = pneg %p709
      // Predicated region
      $region77: #{tpu_custom_call.1} parent=5 // pred_check
        _
      $region78: #{tpu_custom_call.1} parent=5 // pred_check_branch
        %712 = sbr.rel (%p709) target = $region80
      $region79: #{tpu_custom_call.1} parent=5 // pred_region
        %s713 = ssub.s32 %s28, 1
        %s714 = sand.u32 %s33, 1
        %s715 = scalar_lea.sflag [#allocation3], %s714
        %s716 = sand.u32 %s53, 1
        %s717 = smul.addr %s716, 32
        %s718 = scalar_lea.vmem [#allocation2], %s717
        // Predicated region
        $region81: #{tpu_custom_call.1} parent=79 // pred_check
          %p719 = pneg %p66
        $region82: #{tpu_custom_call.1} parent=79 // pred_check_branch
          %721 = sbr.rel (%p719) target = $region84
        $region83: #{tpu_custom_call.1} parent=79 // pred_region
          %723 = dma.done %s715, 512
        $region84: #{tpu_custom_call.1} parent=79 // pred_fallthru
          _
        // Predicated region
        $region85: #{tpu_custom_call.1} parent=79 // pred_check
          %p724 = pneg %p87
        $region86: #{tpu_custom_call.1} parent=79 // pred_check_branch
          %726 = sbr.rel (%p724) target = $region88
        $region87: #{tpu_custom_call.1} parent=79 // pred_region
          %728 = dma.done [#allocation6], 128
        $region88: #{tpu_custom_call.1} parent=79 // pred_fallthru
          _
        %s729 = sand.u32 %s33, 1
        %s730 = scalar_lea.sflag [#allocation3], %s729
        %s731 = sand.u32 %s100, 1
        %s732 = smul.addr %s731, 8
        %s733 = scalar_lea.vmem [#allocation7], %s732
        // Predicated region
        $region89: #{tpu_custom_call.1} parent=79 // pred_check
          %p734 = pneg %p113
        $region90: #{tpu_custom_call.1} parent=79 // pred_check_branch
          %736 = sbr.rel (%p734) target = $region92
        $region91: #{tpu_custom_call.1} parent=79 // pred_region
          %738 = dma.done %s730, 128
        $region92: #{tpu_custom_call.1} parent=79 // pred_fallthru
          _
        %s739 = sand.u32 %s33, 1
        %s740 = scalar_lea.sflag [#allocation3], %s739
        %s741 = sand.u32 %s126, 1
        %s742 = scalar_lea.vmem [#allocation8], %s741
        // Predicated region
        $region93: #{tpu_custom_call.1} parent=79 // pred_check
          %p743 = pneg %p139
        $region94: #{tpu_custom_call.1} parent=79 // pred_check_branch
          %745 = sbr.rel (%p743) target = $region96
        $region95: #{tpu_custom_call.1} parent=79 // pred_region
          %747 = dma.done %s740, 16
        $region96: #{tpu_custom_call.1} parent=79 // pred_fallthru
          _
        %s748 = sand.u32 %s33, 1
        %s749 = scalar_lea.sflag [#allocation3], %s748
        %s750 = sand.u32 %s178, 1
        %s751 = smul.addr %s750, 192
        %s752 = scalar_lea.vmem [#allocation9], %s751
        // Predicated region
        $region97: #{tpu_custom_call.1} parent=79 // pred_check
          %p753 = pneg %p191
        $region98: #{tpu_custom_call.1} parent=79 // pred_check_branch
          %755 = sbr.rel (%p753) target = $region100
        $region99: #{tpu_custom_call.1} parent=79 // pred_region
          %757 = dma.done %s749, 3072
        $region100: #{tpu_custom_call.1} parent=79 // pred_fallthru
          _
        %s758 = sand.u32 %s33, 1
        %s759 = scalar_lea.sflag [#allocation3], %s758
        %s760 = sand.u32 %s204, 1
        %s761 = smul.addr %s760, 3
        %s762 = scalar_lea.vmem [#allocation10], %s761
        // Predicated region
        $region101: #{tpu_custom_call.1} parent=79 // pred_check
          %p763 = pneg %p217
        $region102: #{tpu_custom_call.1} parent=79 // pred_check_branch
          %765 = sbr.rel (%p763) target = $region104
        $region103: #{tpu_custom_call.1} parent=79 // pred_region
          %767 = dma.done %s759, 48
        $region104: #{tpu_custom_call.1} parent=79 // pred_fallthru
          _
        %s768 = sand.u32 %s33, 1
        %s769 = scalar_lea.sflag [#allocation3], %s768
        %s770 = sand.u32 %s230, 1
        %s771 = smul.addr %s770, 64
        %s772 = scalar_lea.vmem [#allocation11], %s771
        // Predicated region
        $region105: #{tpu_custom_call.1} parent=79 // pred_check
          %p773 = pneg %p243
        $region106: #{tpu_custom_call.1} parent=79 // pred_check_branch
          %775 = sbr.rel (%p773) target = $region108
        $region107: #{tpu_custom_call.1} parent=79 // pred_region
          %777 = dma.done %s769, 1024
        $region108: #{tpu_custom_call.1} parent=79 // pred_fallthru
          _
        %s778 = sand.u32 %s33, 1
        %s779 = scalar_lea.sflag [#allocation3], %s778
        %s780 = sand.u32 %s282, 1
        %s781 = scalar_lea.vmem [#allocation12], %s780
        // Predicated region
        $region109: #{tpu_custom_call.1} parent=79 // pred_check
          %p782 = pneg %p295
        $region110: #{tpu_custom_call.1} parent=79 // pred_check_branch
          %784 = sbr.rel (%p782) target = $region112
        $region111: #{tpu_custom_call.1} parent=79 // pred_region
          %786 = dma.done %s779, 16
        $region112: #{tpu_custom_call.1} parent=79 // pred_fallthru
          _
        %s787 = sand.u32 %s33, 1
        %s788 = scalar_lea.sflag [#allocation3], %s787
        %s789 = sand.u32 %s334, 1
        %s790 = smul.addr %s789, 256
        %s791 = scalar_lea.vmem [#allocation13], %s790
        // Predicated region
        $region113: #{tpu_custom_call.1} parent=79 // pred_check
          %p792 = pneg %p347
        $region114: #{tpu_custom_call.1} parent=79 // pred_check_branch
          %794 = sbr.rel (%p792) target = $region116
        $region115: #{tpu_custom_call.1} parent=79 // pred_region
          %796 = dma.done %s788, 4096
        $region116: #{tpu_custom_call.1} parent=79 // pred_fallthru
          _
        %s797 = sand.u32 %s33, 1
        %s798 = scalar_lea.sflag [#allocation3], %s797
        %s799 = sand.u32 %s360, 1
        %s800 = smul.addr %s799, 4
        %s801 = scalar_lea.vmem [#allocation14], %s800
        // Predicated region
        $region117: #{tpu_custom_call.1} parent=79 // pred_check
          %p802 = pneg %p373
        $region118: #{tpu_custom_call.1} parent=79 // pred_check_branch
          %804 = sbr.rel (%p802) target = $region120
        $region119: #{tpu_custom_call.1} parent=79 // pred_region
          %806 = dma.done %s798, 64
        $region120: #{tpu_custom_call.1} parent=79 // pred_fallthru
          _
        %s807 = sand.u32 %s33, 1
        %s808 = scalar_lea.sflag [#allocation3], %s807
        %s809 = sand.u32 %s386, 1
        %s810 = smul.addr %s809, 256
        %s811 = scalar_lea.vmem [#allocation15], %s810
        // Predicated region
        $region121: #{tpu_custom_call.1} parent=79 // pred_check
          %p812 = pneg %p399
        $region122: #{tpu_custom_call.1} parent=79 // pred_check_branch
          %814 = sbr.rel (%p812) target = $region124
        $region123: #{tpu_custom_call.1} parent=79 // pred_region
          %816 = dma.done %s808, 4096
        $region124: #{tpu_custom_call.1} parent=79 // pred_fallthru
          _
        %s817 = sand.u32 %s33, 1
        %s818 = scalar_lea.sflag [#allocation3], %s817
        %s819 = sand.u32 %s53, 1
        %s820 = smul.addr %s819, 32
        %s821 = scalar_lea.vmem [#allocation2], %s820
        %p822 = pneg %p66
        %p823 = pneg %p63
        %p824 = pneg %p87
        %p825 = pneg %p84
        %s826 = sand.u32 %s33, 1
        %s827 = scalar_lea.sflag [#allocation3], %s826
        %s828 = sand.u32 %s100, 1
        %s829 = smul.addr %s828, 8
        %s830 = scalar_lea.vmem [#allocation7], %s829
        %p831 = pneg %p113
        %p832 = pneg %p110
        %s833 = sand.u32 %s33, 1
        %s834 = scalar_lea.sflag [#allocation3], %s833
        %s835 = sand.u32 %s126, 1
        %s836 = scalar_lea.vmem [#allocation8], %s835
        %p837 = pneg %p139
        %p838 = pneg %p136
        %p839 = scmp.lt.s32.totalorder %s38, 2
        %s840 = scalar_select %p839, %s38, 2
        %s841 = scalar_lea.vmem %s4, %s840
        %p842 = pneg %p165
        %p843 = pneg %p162
        %s844 = sand.u32 %s33, 1
        %s845 = scalar_lea.sflag [#allocation3], %s844
        %s846 = sand.u32 %s178, 1
        %s847 = smul.addr %s846, 192
        %s848 = scalar_lea.vmem [#allocation9], %s847
        %p849 = pneg %p191
        %p850 = pneg %p188
        %s851 = sand.u32 %s33, 1
        %s852 = scalar_lea.sflag [#allocation3], %s851
        %s853 = sand.u32 %s204, 1
        %s854 = smul.addr %s853, 3
        %s855 = scalar_lea.vmem [#allocation10], %s854
        %p856 = pneg %p217
        %p857 = pneg %p214
        %s858 = sand.u32 %s33, 1
        %s859 = scalar_lea.sflag [#allocation3], %s858
        %s860 = sand.u32 %s230, 1
        %s861 = smul.addr %s860, 64
        %s862 = scalar_lea.vmem [#allocation11], %s861
        %p863 = pneg %p243
        %p864 = pneg %p240
        %p865 = scmp.lt.s32.totalorder %s38, 2
        %s866 = scalar_select %p865, %s38, 2
        %s867 = scalar_lea.vmem %s8, %s866
        %p868 = pneg %p269
        %p869 = pneg %p266
        %s870 = sand.u32 %s33, 1
        %s871 = scalar_lea.sflag [#allocation3], %s870
        %s872 = sand.u32 %s282, 1
        %s873 = scalar_lea.vmem [#allocation12], %s872
        %p874 = pneg %p295
        %p875 = pneg %p292
        %p876 = scmp.lt.s32.totalorder %s38, 2
        %s877 = scalar_select %p876, %s38, 2
        %s878 = scalar_lea.vmem %s10, %s877
        %p879 = pneg %p321
        %p880 = pneg %p318
        %s881 = sand.u32 %s33, 1
        %s882 = scalar_lea.sflag [#allocation3], %s881
        %s883 = sand.u32 %s334, 1
        %s884 = smul.addr %s883, 256
        %s885 = scalar_lea.vmem [#allocation13], %s884
        %p886 = pneg %p347
        %p887 = pneg %p344
        %s888 = sand.u32 %s33, 1
        %s889 = scalar_lea.sflag [#allocation3], %s888
        %s890 = sand.u32 %s360, 1
        %s891 = smul.addr %s890, 4
        %s892 = scalar_lea.vmem [#allocation14], %s891
        %p893 = pneg %p373
        %p894 = pneg %p370
        %s895 = sand.u32 %s33, 1
        %s896 = scalar_lea.sflag [#allocation3], %s895
        %s897 = sand.u32 %s386, 1
        %s898 = smul.addr %s897, 256
        %s899 = scalar_lea.vmem [#allocation15], %s898
        %p900 = pneg %p399
        %p901 = pneg %p396
        %p902 = scmp.lt.s32.totalorder %s38, 2
        %s903 = scalar_select %p902, %s38, 2
        %s904 = scalar_lea.vmem %s14, %s903
        %p905 = pneg %p425
        %p906 = pneg %p422
        %p907 = pneg %p451
        %p908 = pneg %p448
        %s909 = sand.u32 %s438, 1
        %s910 = scalar_lea.sflag [#allocation4], %s909
        %s911 = sand.u32 %s438, 1
        %s912 = smul.addr %s911, 16
        %s913 = scalar_lea.vmem [#allocation16], %s912
        %s914 = smul.u32 4, %s37
        %p915 = scmp.lt.s32.totalorder %s38, 2
        %s916 = scalar_select %p915, %s38, 2
        %s917 = scalar_lea.vmem %s4, %s916
        %p918 = scmp.lt.s32.totalorder %s38, 2
        %s919 = scalar_select %p918, %s38, 2
        %s920 = scalar_lea.vmem %s8, %s919
        %p921 = scmp.lt.s32.totalorder %s38, 2
        %s922 = scalar_select %p921, %s38, 2
        %s923 = scalar_lea.vmem %s10, %s922
        %p924 = scmp.lt.s32.totalorder %s38, 2
        %s925 = scalar_select %p924, %s38, 2
        %s926 = scalar_lea.vmem %s14, %s925
        %s927 = smul.u32 4, %s37
        %p929 = scmp.eq.s32.totalorder %s38, 0
        // Predicated region
        $region125: #{tpu_custom_call.1} parent=79 // pred_check
          %p930 = pneg %p929
        $region126: #{tpu_custom_call.1} parent=79 // pred_check_branch
          %932 = sbr.rel (%p930) target = $region128
        $region127: #{tpu_custom_call.1} parent=79 // pred_region
          %v933 = vld [vmem:[%s718] sm:$0xff]
          %v934 = vld [vmem:[%s718 + $0x8] sm:$0xff]
          %v935 = vld [vmem:[%s718 + $0x10] sm:$0xff]
          %v936 = vld [vmem:[%s718 + $0x18] sm:$0xff]
          %v937 = vld [vmem:[#allocation5] sm:$0xff]
          %v938 = vadd.f32 %v933, %v937
          %v939 = vadd.f32 %v934, %v937
          %v940 = vadd.f32 %v935, %v937
          %v941 = vadd.f32 %v936, %v937
          %v942 = vpack.c.bf16 %v938, %v938
          %v943 = vpack.c.bf16 %v939, %v939
          %v944 = vpack.c.bf16 %v940, %v940
          %v945 = vpack.c.bf16 %v941, %v941
          %946 = vst [vmem:[%s913] sm:$0xf] %v942
          %947 = vst [vmem:[%s913 + $0x4] sm:$0xf] %v943
          %948 = vst [vmem:[%s913 + $0x8] sm:$0xf] %v944
          %949 = vst [vmem:[%s913 + $0xc] sm:$0xf] %v945
        $region128: #{tpu_custom_call.1} parent=79 // pred_fallthru
          _
        %v950 = vld [vmem:[%s913] sm:$0xf]
        %v951 = vld [vmem:[%s913 + $0x4] sm:$0xf]
        %v952 = vld [vmem:[%s913 + $0x8] sm:$0xf]
        %v953 = vld [vmem:[%s913 + $0xc] sm:$0xf]
        %v954 = vunpack.c.l.bf16 %v950
        %v955 = vunpack.c.l.bf16 %v951
        %v956 = vunpack.c.l.bf16 %v952
        %v957 = vunpack.c.l.bf16 %v953
        %v958 = vlaneseq
        %v959 = vshrl.u32 %v958, 7
        %vm960 = vcmp.ge.s32.totalorder %v959, 1
        %vm961 = vcmp.lt.s32.totalorder %v959, 3
        %vm962 = vmand %vm960, %vm961
        %p963 = scmp.ge.s32.totalorder %s38, 1
        %p964 = scmp.le.s32.totalorder %s38, 2
        %p965 = pnand %p963, %p964
        %p966 = pneg %p965
        %s967 = scalar_select %p966, 1, 0
        %v968 = vstv %s967
        %vm969 = vcmp.eq.s32.totalorder %v968, 1
        %vm970 = vmand %vm962, %vm969
        %v971 = vld [vmem:[%s733] sm:$0xff]
        %v972 = vsel %vm970, 1, 0
        %vm973 = vcmp.eq.s32.totalorder %v972, 1
        %v974 = vsel %vm973, %v971, %v954
        %v975 = vsel %vm973, %v971, %v955
        %v976 = vsel %vm973, %v971, %v956
        %v977 = vsel %vm973, %v971, %v957
        %v978 = vld [vmem:[%s742] sm:$0x1]
        %v979 = vld [vmem:[%s917] sm:$0x1]
        %980 = vadd.xlane.f32.xlu0 %v974
        %v981 = vpop.xlane.xlu0 %980
        %982 = vadd.xlane.f32.xlu0 %v975
        %v983 = vpop.xlane.xlu0 %982
        %984 = vadd.xlane.f32.xlu0 %v976
        %v985 = vpop.xlane.xlu0 %984
        %986 = vadd.xlane.f32.xlu0 %v977
        %v987 = vpop.xlane.xlu0 %986
        %v988 = vrcp.pop 128.0
        %v989 = vmul.f32 128.0, %v988
        %v990 = vsub.f32 1.0, %v989
        %v991 = vmul.f32 %v988, %v990
        %v992 = vadd.f32 %v988, %v991
        %vm993 = vweird.f32 %v988
        %v994 = vsel %vm993, %v988, %v992
        %v995 = vmul.f32 %v981, %v994
        %v996 = vmul.f32 %v983, %v994
        %v997 = vmul.f32 %v985, %v994
        %v998 = vmul.f32 %v987, %v994
        %v999 = vsub.f32 %v974, %v995
        %v1000 = vsub.f32 %v975, %v996
        %v1001 = vsub.f32 %v976, %v997
        %v1002 = vsub.f32 %v977, %v998
        %v1003 = vmul.f32 %v999, %v999
        %v1004 = vmul.f32 %v1000, %v1000
        %v1005 = vmul.f32 %v1001, %v1001
        %v1006 = vmul.f32 %v1002, %v1002
        %1007 = vadd.xlane.f32.xlu0 %v1003
        %v1008 = vpop.xlane.xlu0 %1007
        %1009 = vadd.xlane.f32.xlu0 %v1004
        %v1010 = vpop.xlane.xlu0 %1009
        %1011 = vadd.xlane.f32.xlu0 %v1005
        %v1012 = vpop.xlane.xlu0 %1011
        %1013 = vadd.xlane.f32.xlu0 %v1006
        %v1014 = vpop.xlane.xlu0 %1013
        %v1015 = vmul.f32 %v1008, %v994
        %v1016 = vmul.f32 %v1010, %v994
        %v1017 = vmul.f32 %v1012, %v994
        %v1018 = vmul.f32 %v1014, %v994
        %v1019 = vadd.f32 %v1015, 1e-05
        %v1020 = vadd.f32 %v1016, 1e-05
        %v1021 = vadd.f32 %v1017, 1e-05
        %v1022 = vadd.f32 %v1018, 1e-05
        %v1023 = vrsqrt.pop %v1019
        %v1024 = vmul.f32 %v1023, %v1019
        %v1025 = vmul.f32 %v1024, %v1023
        %v1026 = vmul.f32 0.5, %v1025
        %v1027 = vsub.f32 1.5, %v1026
        %v1028 = vmul.f32 %v1023, %v1027
        %vm1029 = vweird.f32 %v1019
        %vm1030 = vweird.f32 %v1023
        %vm1031 = vmor %vm1029, %vm1030
        %v1032 = vsel %vm1031, %v1023, %v1028
        %v1033 = vrsqrt.pop %v1020
        %v1034 = vmul.f32 %v1033, %v1020
        %v1035 = vmul.f32 %v1034, %v1033
        %v1036 = vmul.f32 0.5, %v1035
        %v1037 = vsub.f32 1.5, %v1036
        %v1038 = vmul.f32 %v1033, %v1037
        %vm1039 = vweird.f32 %v1020
        %vm1040 = vweird.f32 %v1033
        %vm1041 = vmor %vm1039, %vm1040
        %v1042 = vsel %vm1041, %v1033, %v1038
        %v1043 = vrsqrt.pop %v1021
        %v1044 = vmul.f32 %v1043, %v1021
        %v1045 = vmul.f32 %v1044, %v1043
        %v1046 = vmul.f32 0.5, %v1045
        %v1047 = vsub.f32 1.5, %v1046
        %v1048 = vmul.f32 %v1043, %v1047
        %vm1049 = vweird.f32 %v1021
        %vm1050 = vweird.f32 %v1043
        %vm1051 = vmor %vm1049, %vm1050
        %v1052 = vsel %vm1051, %v1043, %v1048
        %v1053 = vrsqrt.pop %v1022
        %v1054 = vmul.f32 %v1053, %v1022
        %v1055 = vmul.f32 %v1054, %v1053
        %v1056 = vmul.f32 0.5, %v1055
        %v1057 = vsub.f32 1.5, %v1056
        %v1058 = vmul.f32 %v1053, %v1057
        %vm1059 = vweird.f32 %v1022
        %vm1060 = vweird.f32 %v1053
        %vm1061 = vmor %vm1059, %vm1060
        %v1062 = vsel %vm1061, %v1053, %v1058
        %v1063 = vmul.f32 %v999, %v1032
        %v1064 = vmul.f32 %v1000, %v1042
        %v1065 = vmul.f32 %v1001, %v1052
        %v1066 = vmul.f32 %v1002, %v1062
        %v1068 = vperm.slane %v978, 0
        %v1070 = vmul.f32 %v1063, %v1068
        %v1071 = vmul.f32 %v1064, %v1068
        %v1072 = vmul.f32 %v1065, %v1068
        %v1073 = vmul.f32 %v1066, %v1068
        %v1075 = vperm.slane %v979, 0
        %v1077 = vadd.f32 %v1070, %v1075
        %v1078 = vadd.f32 %v1071, %v1075
        %v1079 = vadd.f32 %v1072, %v1075
        %v1080 = vadd.f32 %v1073, %v1075
        %v1081 = vpack.c.bf16 %v1078, %v1077
        %v1082 = vpack.c.bf16 %v1080, %v1079
        %v1083 = vld [vmem:[%s752] sm:$0xff]
        %v1084 = vld [vmem:[%s752 + $0x8] sm:$0xf]
        %v1085 = vld [vmem:[%s752 + $0xc] sm:$0xff]
        %v1086 = vld [vmem:[%s752 + $0x14] sm:$0xf]
        %v1087 = vld [vmem:[%s752 + $0x18] sm:$0xff]
        %v1088 = vld [vmem:[%s752 + $0x20] sm:$0xf]
        %v1089 = vld [vmem:[%s752 + $0x24] sm:$0xff]
        %v1090 = vld [vmem:[%s752 + $0x2c] sm:$0xf]
        %v1091 = vld [vmem:[%s752 + $0x30] sm:$0xff]
        %v1092 = vld [vmem:[%s752 + $0x38] sm:$0xf]
        %v1093 = vld [vmem:[%s752 + $0x3c] sm:$0xff]
        %v1094 = vld [vmem:[%s752 + $0x44] sm:$0xf]
        %v1095 = vld [vmem:[%s752 + $0x48] sm:$0xff]
        %v1096 = vld [vmem:[%s752 + $0x50] sm:$0xf]
        %v1097 = vld [vmem:[%s752 + $0x54] sm:$0xff]
        %v1098 = vld [vmem:[%s752 + $0x5c] sm:$0xf]
        %v1099 = vld [vmem:[%s752 + $0x60] sm:$0xff]
        %v1100 = vld [vmem:[%s752 + $0x68] sm:$0xf]
        %v1101 = vld [vmem:[%s752 + $0x6c] sm:$0xff]
        %v1102 = vld [vmem:[%s752 + $0x74] sm:$0xf]
        %v1103 = vld [vmem:[%s752 + $0x78] sm:$0xff]
        %v1104 = vld [vmem:[%s752 + $0x80] sm:$0xf]
        %v1105 = vld [vmem:[%s752 + $0x84] sm:$0xff]
        %v1106 = vld [vmem:[%s752 + $0x8c] sm:$0xf]
        %v1107 = vld [vmem:[%s752 + $0x90] sm:$0xff]
        %v1108 = vld [vmem:[%s752 + $0x98] sm:$0xf]
        %v1109 = vld [vmem:[%s752 + $0x9c] sm:$0xff]
        %v1110 = vld [vmem:[%s752 + $0xa4] sm:$0xf]
        %v1111 = vld [vmem:[%s752 + $0xa8] sm:$0xff]
        %v1112 = vld [vmem:[%s752 + $0xb0] sm:$0xf]
        %v1113 = vld [vmem:[%s752 + $0xb4] sm:$0xff]
        %v1114 = vld [vmem:[%s752 + $0xbc] sm:$0xf]
        %v1115 = vld [vmem:[%s762] sm:$0x7]
        %v1117 = vperm.slane %v1115, 0
        %v1118 = vperm.slane %v1115, 1
        %v1119 = vperm.slane %v1115, 2
        %v1155 = vunpack.c.l.b16 %v1083
        %v1156 = vunpack.c.h.b16 %v1083
        %v1157 = vunpack.c.l.b16 %v1084
        %v1158 = vunpack.c.l.b16 %v1085
        %v1159 = vunpack.c.h.b16 %v1085
        %v1160 = vunpack.c.l.b16 %v1086
        %v1161 = vunpack.c.l.b16 %v1087
        %v1162 = vunpack.c.h.b16 %v1087
        %v1163 = vunpack.c.l.b16 %v1088
        %v1164 = vunpack.c.l.b16 %v1089
        %v1165 = vunpack.c.h.b16 %v1089
        %v1166 = vunpack.c.l.b16 %v1090
        %v1167 = vunpack.c.l.b16 %v1091
        %v1168 = vunpack.c.h.b16 %v1091
        %v1169 = vunpack.c.l.b16 %v1092
        %v1170 = vunpack.c.l.b16 %v1093
        %v1171 = vunpack.c.h.b16 %v1093
        %v1172 = vunpack.c.l.b16 %v1094
        %v1173 = vunpack.c.l.b16 %v1095
        %v1174 = vunpack.c.h.b16 %v1095
        %v1175 = vunpack.c.l.b16 %v1096
        %v1176 = vunpack.c.l.b16 %v1097
        %v1177 = vunpack.c.h.b16 %v1097
        %v1178 = vunpack.c.l.b16 %v1098
        %v1179 = vunpack.c.l.b16 %v1099
        %v1180 = vunpack.c.h.b16 %v1099
        %v1181 = vunpack.c.l.b16 %v1100
        %v1182 = vunpack.c.l.b16 %v1101
        %v1183 = vunpack.c.h.b16 %v1101
        %v1184 = vunpack.c.l.b16 %v1102
        %v1185 = vunpack.c.l.b16 %v1103
        %v1186 = vunpack.c.h.b16 %v1103
        %v1187 = vunpack.c.l.b16 %v1104
        %v1188 = vunpack.c.l.b16 %v1105
        %v1189 = vunpack.c.h.b16 %v1105
        %v1190 = vunpack.c.l.b16 %v1106
        %v1191 = vunpack.c.l.b16 %v1107
        %v1192 = vunpack.c.h.b16 %v1107
        %v1193 = vunpack.c.l.b16 %v1108
        %v1194 = vunpack.c.l.b16 %v1109
        %v1195 = vunpack.c.h.b16 %v1109
        %v1196 = vunpack.c.l.b16 %v1110
        %v1197 = vunpack.c.l.b16 %v1111
        %v1198 = vunpack.c.h.b16 %v1111
        %v1199 = vunpack.c.l.b16 %v1112
        %v1200 = vunpack.c.l.b16 %v1113
        %v1201 = vunpack.c.h.b16 %v1113
        %v1202 = vunpack.c.l.b16 %v1114
        %v1203 = vpack.c.b16 %v1158, %v1155
        %v1204 = vpack.c.b16 %v1159, %v1156
        %v1205 = vpack.c.b16 %v1160, %v1157
        %v1206 = vpack.c.b16 %v1164, %v1161
        %v1207 = vpack.c.b16 %v1165, %v1162
        %v1208 = vpack.c.b16 %v1166, %v1163
        %v1209 = vpack.c.b16 %v1170, %v1167
        %v1210 = vpack.c.b16 %v1171, %v1168
        %v1211 = vpack.c.b16 %v1172, %v1169
        %v1212 = vpack.c.b16 %v1176, %v1173
        %v1213 = vpack.c.b16 %v1177, %v1174
        %v1214 = vpack.c.b16 %v1178, %v1175
        %v1215 = vpack.c.b16 %v1182, %v1179
        %v1216 = vpack.c.b16 %v1183, %v1180
        %v1217 = vpack.c.b16 %v1184, %v1181
        %v1218 = vpack.c.b16 %v1188, %v1185
        %v1219 = vpack.c.b16 %v1189, %v1186
        %v1220 = vpack.c.b16 %v1190, %v1187
        %v1221 = vpack.c.b16 %v1194, %v1191
        %v1222 = vpack.c.b16 %v1195, %v1192
        %v1223 = vpack.c.b16 %v1196, %v1193
        %v1224 = vpack.c.b16 %v1200, %v1197
        %v1225 = vpack.c.b16 %v1201, %v1198
        %v1226 = vpack.c.b16 %v1202, %v1199
        %1251 = vmatpush.bf16.msra.mxu0 %v1224
        %1252 = vmatpush.bf16.msra.mxu0 %v1221
        %1253 = vmatpush.bf16.msra.mxu0 %v1218
        %1254 = vmatpush.bf16.msra.mxu0 %v1215
        %1255 = vmatpush.bf16.msra.mxu0 %v1212
        %1256 = vmatpush.bf16.msra.mxu0 %v1209
        %1257 = vmatpush.bf16.msra.mxu0 %v1206
        %1258 = vmatpush.bf16.msra.mxu0 %v1203
        %1259 = vmatmul.bf16.gmra.mxu0 %v1081
        %v1260 = vpop.f32.mrf.mxu0
        %v1261 = vadd.f32 %v1117, %v1260
        %v1262 = vpop.f32.mrf.mxu0
        %v1263 = vadd.f32 %v1117, %v1262
        %1264 = vmatmul.bf16.gmra.mxu0 %v1082
        %v1265 = vpop.f32.mrf.mxu0
        %v1266 = vadd.f32 %v1117, %v1265
        %v1267 = vpop.f32.mrf.mxu0
        %v1268 = vadd.f32 %v1117, %v1267
        %1269 = vdwg.mxu0
        %1270 = vmatpush.bf16.msra.mxu0 %v1225
        %1271 = vmatpush.bf16.msra.mxu0 %v1222
        %1272 = vmatpush.bf16.msra.mxu0 %v1219
        %1273 = vmatpush.bf16.msra.mxu0 %v1216
        %1274 = vmatpush.bf16.msra.mxu0 %v1213
        %1275 = vmatpush.bf16.msra.mxu0 %v1210
        %1276 = vmatpush.bf16.msra.mxu0 %v1207
        %1277 = vmatpush.bf16.msra.mxu0 %v1204
        %1278 = vmatmul.bf16.gmra.mxu0 %v1081
        %v1279 = vpop.f32.mrf.mxu0
        %v1280 = vadd.f32 %v1118, %v1279
        %v1281 = vpop.f32.mrf.mxu0
        %v1282 = vadd.f32 %v1118, %v1281
        %1283 = vmatmul.bf16.gmra.mxu0 %v1082
        %v1284 = vpop.f32.mrf.mxu0
        %v1285 = vadd.f32 %v1118, %v1284
        %v1286 = vpop.f32.mrf.mxu0
        %v1287 = vadd.f32 %v1118, %v1286
        %1288 = vdwg.mxu0
        %1289 = vmatpush.bf16.msra.mxu0 %v1226
        %1290 = vmatpush.bf16.msra.mxu0 %v1223
        %1291 = vmatpush.bf16.msra.mxu0 %v1220
        %1292 = vmatpush.bf16.msra.mxu0 %v1217
        %1293 = vmatpush.bf16.msra.mxu0 %v1214
        %1294 = vmatpush.bf16.msra.mxu0 %v1211
        %1295 = vmatpush.bf16.msra.mxu0 %v1208
        %1296 = vmatpush.bf16.msra.mxu0 %v1205
        %1297 = vmatmul.bf16.gmra.mxu0 %v1081
        %v1298 = vpop.f32.mrf.mxu0
        %v1299 = vadd.f32 %v1119, %v1298
        %v1300 = vpop.f32.mrf.mxu0
        %v1301 = vadd.f32 %v1119, %v1300
        %1302 = vmatmul.bf16.gmra.mxu0 %v1082
        %v1303 = vpop.f32.mrf.mxu0
        %v1304 = vadd.f32 %v1119, %v1303
        %v1305 = vpop.f32.mrf.mxu0
        %v1306 = vadd.f32 %v1119, %v1305
        %1307 = vdwg.mxu0
        %v1308 = vpack.c.bf16 %v1280, %v1261
        %v1309 = vpack.c.bf16 %v1299, %v1299
        %v1310 = vpack.c.bf16 %v1282, %v1263
        %v1311 = vpack.c.bf16 %v1301, %v1301
        %v1312 = vpack.c.bf16 %v1285, %v1266
        %v1313 = vpack.c.bf16 %v1304, %v1304
        %v1314 = vpack.c.bf16 %v1287, %v1268
        %v1315 = vpack.c.bf16 %v1306, %v1306
        %v1316 = vlaneseq
        %v1317 = vand.u32 %v1316, 127
        %vm1318 = vcmp.le.s32.totalorder %v1317, %v959
        %v1319 = vsel %vm1318, 0.0, -1e+09
        %v1320 = vld [vmem:[%s772] sm:$0xf]
        %v1321 = vld [vmem:[%s772 + $0x4] sm:$0xf]
        %v1322 = vld [vmem:[%s772 + $0x8] sm:$0xf]
        %v1323 = vld [vmem:[%s772 + $0xc] sm:$0xf]
        %v1324 = vld [vmem:[%s772 + $0x10] sm:$0xf]
        %v1325 = vld [vmem:[%s772 + $0x14] sm:$0xf]
        %v1326 = vld [vmem:[%s772 + $0x18] sm:$0xf]
        %v1327 = vld [vmem:[%s772 + $0x1c] sm:$0xf]
        %v1328 = vld [vmem:[%s772 + $0x20] sm:$0xf]
        %v1329 = vld [vmem:[%s772 + $0x24] sm:$0xf]
        %v1330 = vld [vmem:[%s772 + $0x28] sm:$0xf]
        %v1331 = vld [vmem:[%s772 + $0x2c] sm:$0xf]
        %v1332 = vld [vmem:[%s772 + $0x30] sm:$0xf]
        %v1333 = vld [vmem:[%s772 + $0x34] sm:$0xf]
        %v1334 = vld [vmem:[%s772 + $0x38] sm:$0xf]
        %v1335 = vld [vmem:[%s772 + $0x3c] sm:$0xf]
        %v1340 = vrot.slane %v1308, 4
        %v1341 = vrot.slane %v1310, 4
        %v1342 = vrot.slane %v1312, 4
        %v1343 = vrot.slane %v1314, 4
        %vm1344 = vcmask 523264
        %v1346 = vsel %vm1344, %v1308, 0
        %v1349 = vsel %vm1344, %v1340, 0
        %1351 = vmatpush.bf16.xpose.msra.mxu0 0
        %1352 = vmatpush.bf16.xpose.msra.mxu0 0
        %1353 = vmatpush.bf16.xpose.msra.mxu0 0
        %1354 = vmatpush.bf16.xpose.msra.mxu0 0
        %1355 = vmatpush.bf16.xpose.msra.mxu0 0
        %1356 = vmatpush.bf16.xpose.msra.mxu0 0
        %1357 = vmatpush.bf16.xpose.msra.mxu0 0
        %1358 = vmatpush.bf16.xpose.msra.mxu0 %v1349
        %1359 = vmatmul.bf16.gmra.mxu0 %v1346
        %v1360 = vpop.f32.mrf.mxu0
        %v1361 = vadd.f32 %v1319, %v1360
        %v1362 = vpop.f32.mrf.mxu0
        %1363 = vdwg.mxu0
        %v1365 = vsel %vm1344, %v1310, 0
        %v1368 = vsel %vm1344, %v1341, 0
        %1370 = vmatpush.bf16.xpose.msra.mxu0 0
        %1371 = vmatpush.bf16.xpose.msra.mxu0 0
        %1372 = vmatpush.bf16.xpose.msra.mxu0 0
        %1373 = vmatpush.bf16.xpose.msra.mxu0 0
        %1374 = vmatpush.bf16.xpose.msra.mxu0 0
        %1375 = vmatpush.bf16.xpose.msra.mxu0 0
        %1376 = vmatpush.bf16.xpose.msra.mxu0 0
        %1377 = vmatpush.bf16.xpose.msra.mxu0 %v1368
        %1378 = vmatmul.bf16.gmra.mxu0 %v1365
        %v1379 = vpop.f32.mrf.mxu0
        %v1380 = vadd.f32 %v1319, %v1379
        %v1381 = vpop.f32.mrf.mxu0
        %1382 = vdwg.mxu0
        %v1384 = vsel %vm1344, %v1312, 0
        %v1387 = vsel %vm1344, %v1342, 0
        %1389 = vmatpush.bf16.xpose.msra.mxu0 0
        %1390 = vmatpush.bf16.xpose.msra.mxu0 0
        %1391 = vmatpush.bf16.xpose.msra.mxu0 0
        %1392 = vmatpush.bf16.xpose.msra.mxu0 0
        %1393 = vmatpush.bf16.xpose.msra.mxu0 0
        %1394 = vmatpush.bf16.xpose.msra.mxu0 0
        %1395 = vmatpush.bf16.xpose.msra.mxu0 0
        %1396 = vmatpush.bf16.xpose.msra.mxu0 %v1387
        %1397 = vmatmul.bf16.gmra.mxu0 %v1384
        %v1398 = vpop.f32.mrf.mxu0
        %v1399 = vadd.f32 %v1319, %v1398
        %v1400 = vpop.f32.mrf.mxu0
        %1401 = vdwg.mxu0
        %v1403 = vsel %vm1344, %v1314, 0
        %v1406 = vsel %vm1344, %v1343, 0
        %1408 = vmatpush.bf16.xpose.msra.mxu0 0
        %1409 = vmatpush.bf16.xpose.msra.mxu0 0
        %1410 = vmatpush.bf16.xpose.msra.mxu0 0
        %1411 = vmatpush.bf16.xpose.msra.mxu0 0
        %1412 = vmatpush.bf16.xpose.msra.mxu0 0
        %1413 = vmatpush.bf16.xpose.msra.mxu0 0
        %1414 = vmatpush.bf16.xpose.msra.mxu0 0
        %1415 = vmatpush.bf16.xpose.msra.mxu0 %v1406
        %1416 = vmatmul.bf16.gmra.mxu0 %v1403
        %v1417 = vpop.f32.mrf.mxu0
        %v1418 = vadd.f32 %v1319, %v1417
        %v1419 = vpop.f32.mrf.mxu0
        %1420 = vdwg.mxu0
        %vm1421 = vcmask 64512
        %v1422 = vsel %vm1421, %v1361, -inf
        %1423 = vmax.xlane.f32.xlu0 %v1422
        %v1424 = vpop.xlane.xlu0 %1423
        %v1425 = vsel %vm1421, %v1380, -inf
        %1426 = vmax.xlane.f32.xlu0 %v1425
        %v1427 = vpop.xlane.xlu0 %1426
        %v1428 = vsel %vm1421, %v1399, -inf
        %1429 = vmax.xlane.f32.xlu0 %v1428
        %v1430 = vpop.xlane.xlu0 %1429
        %v1431 = vsel %vm1421, %v1418, -inf
        %1432 = vmax.xlane.f32.xlu0 %v1431
        %v1433 = vpop.xlane.xlu0 %1432
        %v1434 = vsub.f32 %v1361, %v1424
        %v1435 = vsub.f32 %v1380, %v1427
        %v1436 = vsub.f32 %v1399, %v1430
        %v1437 = vsub.f32 %v1418, %v1433
        %v1438 = vmul.f32 %v1434, 1.442695
        %v1439 = vpow.pop %v1438
        %v1440 = vmul.f32 %v1435, 1.442695
        %v1441 = vpow.pop %v1440
        %v1442 = vmul.f32 %v1436, 1.442695
        %v1443 = vpow.pop %v1442
        %v1444 = vmul.f32 %v1437, 1.442695
        %v1445 = vpow.pop %v1444
        %v1446 = vsel %vm1421, %v1439, 0.0
        %1447 = vadd.xlane.f32.xlu0 %v1446
        %v1448 = vpop.xlane.xlu0 %1447
        %v1449 = vsel %vm1421, %v1441, 0.0
        %1450 = vadd.xlane.f32.xlu0 %v1449
        %v1451 = vpop.xlane.xlu0 %1450
        %v1452 = vsel %vm1421, %v1443, 0.0
        %1453 = vadd.xlane.f32.xlu0 %v1452
        %v1454 = vpop.xlane.xlu0 %1453
        %v1455 = vsel %vm1421, %v1445, 0.0
        %1456 = vadd.xlane.f32.xlu0 %v1455
        %v1457 = vpop.xlane.xlu0 %1456
        %v1458 = vrcp.pop %v1448
        %v1459 = vrcp.pop %v1451
        %v1460 = vrcp.pop %v1454
        %v1461 = vrcp.pop %v1457
        %v1462 = vmul.f32 %v1439, %v1458
        %v1463 = vmul.f32 %v1441, %v1459
        %v1464 = vmul.f32 %v1443, %v1460
        %v1465 = vmul.f32 %v1445, %v1461
        %v1466 = vpack.c.bf16 %v1462, %v1462
        %v1467 = vpack.c.bf16 %v1463, %v1463
        %v1468 = vpack.c.bf16 %v1464, %v1464
        %v1469 = vpack.c.bf16 %v1465, %v1465
        %v1471 = vsel %vm1421, %v1466, 0
        %vm1473 = vcmask 1043456
        %v1475 = vsel %vm1473, %v1309, 0
        %1477 = vmatpush.bf16.msra.mxu0 0
        %1478 = vmatpush.bf16.msra.mxu0 0
        %1479 = vmatpush.bf16.msra.mxu0 0
        %1480 = vmatpush.bf16.msra.mxu0 0
        %1481 = vmatpush.bf16.msra.mxu0 0
        %1482 = vmatpush.bf16.msra.mxu0 0
        %1483 = vmatpush.bf16.msra.mxu0 0
        %1484 = vmatpush.bf16.msra.mxu0 %v1475
        %1485 = vmatmul.bf16.gmra.mxu0 %v1471
        %v1486 = vpop.f32.mrf.mxu0
        %v1487 = vadd.f32 0.0, %v1486
        %v1488 = vpop.f32.mrf.mxu0
        %1489 = vdwg.mxu0
        %v1491 = vsel %vm1421, %v1467, 0
        %v1494 = vsel %vm1473, %v1311, 0
        %1496 = vmatpush.bf16.msra.mxu0 0
        %1497 = vmatpush.bf16.msra.mxu0 0
        %1498 = vmatpush.bf16.msra.mxu0 0
        %1499 = vmatpush.bf16.msra.mxu0 0
        %1500 = vmatpush.bf16.msra.mxu0 0
        %1501 = vmatpush.bf16.msra.mxu0 0
        %1502 = vmatpush.bf16.msra.mxu0 0
        %1503 = vmatpush.bf16.msra.mxu0 %v1494
        %1504 = vmatmul.bf16.gmra.mxu0 %v1491
        %v1505 = vpop.f32.mrf.mxu0
        %v1506 = vadd.f32 0.0, %v1505
        %v1507 = vpop.f32.mrf.mxu0
        %1508 = vdwg.mxu0
        %v1510 = vsel %vm1421, %v1468, 0
        %v1513 = vsel %vm1473, %v1313, 0
        %1515 = vmatpush.bf16.msra.mxu0 0
        %1516 = vmatpush.bf16.msra.mxu0 0
        %1517 = vmatpush.bf16.msra.mxu0 0
        %1518 = vmatpush.bf16.msra.mxu0 0
        %1519 = vmatpush.bf16.msra.mxu0 0
        %1520 = vmatpush.bf16.msra.mxu0 0
        %1521 = vmatpush.bf16.msra.mxu0 0
        %1522 = vmatpush.bf16.msra.mxu0 %v1513
        %1523 = vmatmul.bf16.gmra.mxu0 %v1510
        %v1524 = vpop.f32.mrf.mxu0
        %v1525 = vadd.f32 0.0, %v1524
        %v1526 = vpop.f32.mrf.mxu0
        %1527 = vdwg.mxu0
        %v1529 = vsel %vm1421, %v1469, 0
        %v1532 = vsel %vm1473, %v1315, 0
        %1534 = vmatpush.bf16.msra.mxu0 0
        %1535 = vmatpush.bf16.msra.mxu0 0
        %1536 = vmatpush.bf16.msra.mxu0 0
        %1537 = vmatpush.bf16.msra.mxu0 0
        %1538 = vmatpush.bf16.msra.mxu0 0
        %1539 = vmatpush.bf16.msra.mxu0 0
        %1540 = vmatpush.bf16.msra.mxu0 0
        %1541 = vmatpush.bf16.msra.mxu0 %v1532
        %1542 = vmatmul.bf16.gmra.mxu0 %v1529
        %v1543 = vpop.f32.mrf.mxu0
        %v1544 = vadd.f32 0.0, %v1543
        %v1545 = vpop.f32.mrf.mxu0
        %1546 = vdwg.mxu0
        %v1547 = vpack.c.bf16 %v1506, %v1487
        %v1548 = vpack.c.bf16 %v1544, %v1525
        %1549 = vrot.lane.b32.xlu0 %v1308, 64
        %v1550 = vpop.permute.xlu0 %1549
        %1551 = vrot.lane.b32.xlu0 %v1310, 64
        %v1552 = vpop.permute.xlu0 %1551
        %1553 = vrot.lane.b32.xlu0 %v1312, 64
        %v1554 = vpop.permute.xlu0 %1553
        %1555 = vrot.lane.b32.xlu0 %v1314, 64
        %v1556 = vpop.permute.xlu0 %1555
        %v1557 = vrot.slane %v1550, 4
        %v1558 = vrot.slane %v1552, 4
        %v1559 = vrot.slane %v1554, 4
        %v1560 = vrot.slane %v1556, 4
        %v1561 = vunpack.c.l.b16 %v1308
        %v1562 = vpack.c.b16 %v1561, %v1561
        %1563 = vrot.lane.b32.xlu0 %v1562, 64
        %v1564 = vpop.permute.xlu0 %1563
        %v1566 = vsel %vm1344, %v1564, 0
        %v1569 = vsel %vm1344, %v1557, 0
        %1571 = vmatpush.bf16.xpose.msra.mxu0 0
        %1572 = vmatpush.bf16.xpose.msra.mxu0 0
        %1573 = vmatpush.bf16.xpose.msra.mxu0 0
        %1574 = vmatpush.bf16.xpose.msra.mxu0 0
        %1575 = vmatpush.bf16.xpose.msra.mxu0 0
        %1576 = vmatpush.bf16.xpose.msra.mxu0 0
        %1577 = vmatpush.bf16.xpose.msra.mxu0 0
        %1578 = vmatpush.bf16.xpose.msra.mxu0 %v1569
        %1579 = vmatmul.bf16.gmra.mxu0 %v1566
        %v1580 = vpop.f32.mrf.mxu0
        %v1581 = vadd.f32 %v1319, %v1580
        %v1582 = vpop.f32.mrf.mxu0
        %1583 = vdwg.mxu0
        %v1584 = vunpack.c.l.b16 %v1310
        %v1585 = vpack.c.b16 %v1584, %v1584
        %1586 = vrot.lane.b32.xlu0 %v1585, 64
        %v1587 = vpop.permute.xlu0 %1586
        %v1589 = vsel %vm1344, %v1587, 0
        %v1592 = vsel %vm1344, %v1558, 0
        %1594 = vmatpush.bf16.xpose.msra.mxu0 0
        %1595 = vmatpush.bf16.xpose.msra.mxu0 0
        %1596 = vmatpush.bf16.xpose.msra.mxu0 0
        %1597 = vmatpush.bf16.xpose.msra.mxu0 0
        %1598 = vmatpush.bf16.xpose.msra.mxu0 0
        %1599 = vmatpush.bf16.xpose.msra.mxu0 0
        %1600 = vmatpush.bf16.xpose.msra.mxu0 0
        %1601 = vmatpush.bf16.xpose.msra.mxu0 %v1592
        %1602 = vmatmul.bf16.gmra.mxu0 %v1589
        %v1603 = vpop.f32.mrf.mxu0
        %v1604 = vadd.f32 %v1319, %v1603
        %v1605 = vpop.f32.mrf.mxu0
        %1606 = vdwg.mxu0
        %v1607 = vunpack.c.l.b16 %v1312
        %v1608 = vpack.c.b16 %v1607, %v1607
        %1609 = vrot.lane.b32.xlu0 %v1608, 64
        %v1610 = vpop.permute.xlu0 %1609
        %v1612 = vsel %vm1344, %v1610, 0
        %v1615 = vsel %vm1344, %v1559, 0
        %1617 = vmatpush.bf16.xpose.msra.mxu0 0
        %1618 = vmatpush.bf16.xpose.msra.mxu0 0
        %1619 = vmatpush.bf16.xpose.msra.mxu0 0
        %1620 = vmatpush.bf16.xpose.msra.mxu0 0
        %1621 = vmatpush.bf16.xpose.msra.mxu0 0
        %1622 = vmatpush.bf16.xpose.msra.mxu0 0
        %1623 = vmatpush.bf16.xpose.msra.mxu0 0
        %1624 = vmatpush.bf16.xpose.msra.mxu0 %v1615
        %1625 = vmatmul.bf16.gmra.mxu0 %v1612
        %v1626 = vpop.f32.mrf.mxu0
        %v1627 = vadd.f32 %v1319, %v1626
        %v1628 = vpop.f32.mrf.mxu0
        %1629 = vdwg.mxu0
        %v1630 = vunpack.c.l.b16 %v1314
        %v1631 = vpack.c.b16 %v1630, %v1630
        %1632 = vrot.lane.b32.xlu0 %v1631, 64
        %v1633 = vpop.permute.xlu0 %1632
        %v1635 = vsel %vm1344, %v1633, 0
        %v1638 = vsel %vm1344, %v1560, 0
        %1640 = vmatpush.bf16.xpose.msra.mxu0 0
        %1641 = vmatpush.bf16.xpose.msra.mxu0 0
        %1642 = vmatpush.bf16.xpose.msra.mxu0 0
        %1643 = vmatpush.bf16.xpose.msra.mxu0 0
        %1644 = vmatpush.bf16.xpose.msra.mxu0 0
        %1645 = vmatpush.bf16.xpose.msra.mxu0 0
        %1646 = vmatpush.bf16.xpose.msra.mxu0 0
        %1647 = vmatpush.bf16.xpose.msra.mxu0 %v1638
        %1648 = vmatmul.bf16.gmra.mxu0 %v1635
        %v1649 = vpop.f32.mrf.mxu0
        %v1650 = vadd.f32 %v1319, %v1649
        %v1651 = vpop.f32.mrf.mxu0
        %1652 = vdwg.mxu0
        %v1653 = vsel %vm1421, %v1581, -inf
        %1654 = vmax.xlane.f32.xlu0 %v1653
        %v1655 = vpop.xlane.xlu0 %1654
        %v1656 = vsel %vm1421, %v1604, -inf
        %1657 = vmax.xlane.f32.xlu0 %v1656
        %v1658 = vpop.xlane.xlu0 %1657
        %v1659 = vsel %vm1421, %v1627, -inf
        %1660 = vmax.xlane.f32.xlu0 %v1659
        %v1661 = vpop.xlane.xlu0 %1660
        %v1662 = vsel %vm1421, %v1650, -inf
        %1663 = vmax.xlane.f32.xlu0 %v1662
        %v1664 = vpop.xlane.xlu0 %1663
        %v1665 = vsub.f32 %v1581, %v1655
        %v1666 = vsub.f32 %v1604, %v1658
        %v1667 = vsub.f32 %v1627, %v1661
        %v1668 = vsub.f32 %v1650, %v1664
        %v1669 = vmul.f32 %v1665, 1.442695
        %v1670 = vpow.pop %v1669
        %v1671 = vmul.f32 %v1666, 1.442695
        %v1672 = vpow.pop %v1671
        %v1673 = vmul.f32 %v1667, 1.442695
        %v1674 = vpow.pop %v1673
        %v1675 = vmul.f32 %v1668, 1.442695
        %v1676 = vpow.pop %v1675
        %v1677 = vsel %vm1421, %v1670, 0.0
        %1678 = vadd.xlane.f32.xlu0 %v1677
        %v1679 = vpop.xlane.xlu0 %1678
        %v1680 = vsel %vm1421, %v1672, 0.0
        %1681 = vadd.xlane.f32.xlu0 %v1680
        %v1682 = vpop.xlane.xlu0 %1681
        %v1683 = vsel %vm1421, %v1674, 0.0
        %1684 = vadd.xlane.f32.xlu0 %v1683
        %v1685 = vpop.xlane.xlu0 %1684
        %v1686 = vsel %vm1421, %v1676, 0.0
        %1687 = vadd.xlane.f32.xlu0 %v1686
        %v1688 = vpop.xlane.xlu0 %1687
        %v1689 = vrcp.pop %v1679
        %v1690 = vrcp.pop %v1682
        %v1691 = vrcp.pop %v1685
        %v1692 = vrcp.pop %v1688
        %v1693 = vmul.f32 %v1670, %v1689
        %v1694 = vmul.f32 %v1672, %v1690
        %v1695 = vmul.f32 %v1674, %v1691
        %v1696 = vmul.f32 %v1676, %v1692
        %v1697 = vpack.c.bf16 %v1693, %v1693
        %v1698 = vpack.c.bf16 %v1694, %v1694
        %v1699 = vpack.c.bf16 %v1695, %v1695
        %v1700 = vpack.c.bf16 %v1696, %v1696
        %v1702 = vunpack.c.l.b16 %v1309
        %v1703 = vpack.c.b16 %v1702, %v1702
        %1704 = vrot.lane.b32.xlu0 %v1703, 64
        %v1705 = vpop.permute.xlu0 %1704
        %v1707 = vsel %vm1421, %v1697, 0
        %v1710 = vsel %vm1473, %v1705, 0
        %1712 = vmatpush.bf16.msra.mxu0 0
        %1713 = vmatpush.bf16.msra.mxu0 0
        %1714 = vmatpush.bf16.msra.mxu0 0
        %1715 = vmatpush.bf16.msra.mxu0 0
        %1716 = vmatpush.bf16.msra.mxu0 0
        %1717 = vmatpush.bf16.msra.mxu0 0
        %1718 = vmatpush.bf16.msra.mxu0 0
        %1719 = vmatpush.bf16.msra.mxu0 %v1710
        %1720 = vmatmul.bf16.gmra.mxu0 %v1707
        %v1721 = vpop.f32.mrf.mxu0
        %v1722 = vadd.f32 0.0, %v1721
        %v1723 = vpop.f32.mrf.mxu0
        %1724 = vdwg.mxu0
        %v1726 = vunpack.c.l.b16 %v1311
        %v1727 = vpack.c.b16 %v1726, %v1726
        %1728 = vrot.lane.b32.xlu0 %v1727, 64
        %v1729 = vpop.permute.xlu0 %1728
        %v1731 = vsel %vm1421, %v1698, 0
        %v1734 = vsel %vm1473, %v1729, 0
        %1736 = vmatpush.bf16.msra.mxu0 0
        %1737 = vmatpush.bf16.msra.mxu0 0
        %1738 = vmatpush.bf16.msra.mxu0 0
        %1739 = vmatpush.bf16.msra.mxu0 0
        %1740 = vmatpush.bf16.msra.mxu0 0
        %1741 = vmatpush.bf16.msra.mxu0 0
        %1742 = vmatpush.bf16.msra.mxu0 0
        %1743 = vmatpush.bf16.msra.mxu0 %v1734
        %1744 = vmatmul.bf16.gmra.mxu0 %v1731
        %v1745 = vpop.f32.mrf.mxu0
        %v1746 = vadd.f32 0.0, %v1745
        %v1747 = vpop.f32.mrf.mxu0
        %1748 = vdwg.mxu0
        %v1750 = vunpack.c.l.b16 %v1313
        %v1751 = vpack.c.b16 %v1750, %v1750
        %1752 = vrot.lane.b32.xlu0 %v1751, 64
        %v1753 = vpop.permute.xlu0 %1752
        %v1755 = vsel %vm1421, %v1699, 0
        %v1758 = vsel %vm1473, %v1753, 0
        %1760 = vmatpush.bf16.msra.mxu0 0
        %1761 = vmatpush.bf16.msra.mxu0 0
        %1762 = vmatpush.bf16.msra.mxu0 0
        %1763 = vmatpush.bf16.msra.mxu0 0
        %1764 = vmatpush.bf16.msra.mxu0 0
        %1765 = vmatpush.bf16.msra.mxu0 0
        %1766 = vmatpush.bf16.msra.mxu0 0
        %1767 = vmatpush.bf16.msra.mxu0 %v1758
        %1768 = vmatmul.bf16.gmra.mxu0 %v1755
        %v1769 = vpop.f32.mrf.mxu0
        %v1770 = vadd.f32 0.0, %v1769
        %v1771 = vpop.f32.mrf.mxu0
        %1772 = vdwg.mxu0
        %v1774 = vunpack.c.l.b16 %v1315
        %v1775 = vpack.c.b16 %v1774, %v1774
        %1776 = vrot.lane.b32.xlu0 %v1775, 64
        %v1777 = vpop.permute.xlu0 %1776
        %v1779 = vsel %vm1421, %v1700, 0
        %v1782 = vsel %vm1473, %v1777, 0
        %1784 = vmatpush.bf16.msra.mxu0 0
        %1785 = vmatpush.bf16.msra.mxu0 0
        %1786 = vmatpush.bf16.msra.mxu0 0
        %1787 = vmatpush.bf16.msra.mxu0 0
        %1788 = vmatpush.bf16.msra.mxu0 0
        %1789 = vmatpush.bf16.msra.mxu0 0
        %1790 = vmatpush.bf16.msra.mxu0 0
        %1791 = vmatpush.bf16.msra.mxu0 %v1782
        %1792 = vmatmul.bf16.gmra.mxu0 %v1779
        %v1793 = vpop.f32.mrf.mxu0
        %v1794 = vadd.f32 0.0, %v1793
        %v1795 = vpop.f32.mrf.mxu0
        %1796 = vdwg.mxu0
        %v1797 = vpack.c.bf16 %v1746, %v1722
        %v1798 = vpack.c.bf16 %v1794, %v1770
        %v1807 = vunpack.c.l.b16 %v1328
        %v1808 = vunpack.c.l.b16 %v1329
        %v1809 = vunpack.c.l.b16 %v1330
        %v1810 = vunpack.c.l.b16 %v1331
        %v1811 = vunpack.c.l.b16 %v1332
        %v1812 = vunpack.c.l.b16 %v1333
        %v1813 = vunpack.c.l.b16 %v1334
        %v1814 = vunpack.c.l.b16 %v1335
        %v1815 = vpack.c.b16 %v1808, %v1807
        %v1816 = vpack.c.b16 %v1810, %v1809
        %v1817 = vpack.c.b16 %v1812, %v1811
        %v1818 = vpack.c.b16 %v1814, %v1813
        %v1824 = vsel %vm1344, %v1797, 0
        %v1827 = vsel %vm1344, %v1798, 0
        %1829 = vmatpush.bf16.msra.mxu0 0
        %1830 = vmatpush.bf16.msra.mxu0 0
        %1831 = vmatpush.bf16.msra.mxu0 0
        %1832 = vmatpush.bf16.msra.mxu0 0
        %1833 = vmatpush.bf16.msra.mxu0 %v1818
        %1834 = vmatpush.bf16.msra.mxu0 %v1817
        %1835 = vmatpush.bf16.msra.mxu0 %v1816
        %1836 = vmatpush.bf16.msra.mxu0 %v1815
        %1837 = vmatmul.bf16.gmra.mxu0 %v1824
        %v1838 = vpop.f32.mrf.mxu0
        %v1839 = vadd.f32 0.0, %v1838
        %v1840 = vpop.f32.mrf.mxu0
        %v1841 = vadd.f32 0.0, %v1840
        %1842 = vmatmul.bf16.gmra.mxu0 %v1827
        %v1843 = vpop.f32.mrf.mxu0
        %v1844 = vadd.f32 0.0, %v1843
        %v1845 = vpop.f32.mrf.mxu0
        %v1846 = vadd.f32 0.0, %v1845
        %1847 = vdwg.mxu0
        %v1856 = vunpack.c.l.b16 %v1320
        %v1857 = vunpack.c.l.b16 %v1321
        %v1858 = vunpack.c.l.b16 %v1322
        %v1859 = vunpack.c.l.b16 %v1323
        %v1860 = vunpack.c.l.b16 %v1324
        %v1861 = vunpack.c.l.b16 %v1325
        %v1862 = vunpack.c.l.b16 %v1326
        %v1863 = vunpack.c.l.b16 %v1327
        %v1864 = vpack.c.b16 %v1857, %v1856
        %v1865 = vpack.c.b16 %v1859, %v1858
        %v1866 = vpack.c.b16 %v1861, %v1860
        %v1867 = vpack.c.b16 %v1863, %v1862
        %v1873 = vsel %vm1344, %v1547, 0
        %v1876 = vsel %vm1344, %v1548, 0
        %1878 = vmatpush.bf16.msra.mxu0 0
        %1879 = vmatpush.bf16.msra.mxu0 0
        %1880 = vmatpush.bf16.msra.mxu0 0
        %1881 = vmatpush.bf16.msra.mxu0 0
        %1882 = vmatpush.bf16.msra.mxu0 %v1867
        %1883 = vmatpush.bf16.msra.mxu0 %v1866
        %1884 = vmatpush.bf16.msra.mxu0 %v1865
        %1885 = vmatpush.bf16.msra.mxu0 %v1864
        %1886 = vmatmul.bf16.gmra.mxu0 %v1873
        %v1887 = vpop.f32.mrf.mxu0
        %v1888 = vadd.f32 %v1839, %v1887
        %v1889 = vpop.f32.mrf.mxu0
        %v1890 = vadd.f32 %v1841, %v1889
        %1891 = vmatmul.bf16.gmra.mxu0 %v1876
        %v1892 = vpop.f32.mrf.mxu0
        %v1893 = vadd.f32 %v1844, %v1892
        %v1894 = vpop.f32.mrf.mxu0
        %v1895 = vadd.f32 %v1846, %v1894
        %1896 = vdwg.mxu0
        %v1897 = vld [vmem:[%s920] sm:$0x1]
        %v1899 = vperm.slane %v1897, 0
        %v1901 = vadd.f32 %v1888, %v1899
        %v1902 = vadd.f32 %v1890, %v1899
        %v1903 = vadd.f32 %v1893, %v1899
        %v1904 = vadd.f32 %v1895, %v1899
        %v1905 = vadd.f32 %v974, %v1901
        %v1906 = vadd.f32 %v975, %v1902
        %v1907 = vadd.f32 %v976, %v1903
        %v1908 = vadd.f32 %v977, %v1904
        %v1909 = vld [vmem:[%s781] sm:$0x1]
        %v1910 = vld [vmem:[%s923] sm:$0x1]
        %1911 = vadd.xlane.f32.xlu0 %v1905
        %v1912 = vpop.xlane.xlu0 %1911
        %1913 = vadd.xlane.f32.xlu0 %v1906
        %v1914 = vpop.xlane.xlu0 %1913
        %1915 = vadd.xlane.f32.xlu0 %v1907
        %v1916 = vpop.xlane.xlu0 %1915
        %1917 = vadd.xlane.f32.xlu0 %v1908
        %v1918 = vpop.xlane.xlu0 %1917
        %v1919 = vmul.f32 %v1912, %v994
        %v1920 = vmul.f32 %v1914, %v994
        %v1921 = vmul.f32 %v1916, %v994
        %v1922 = vmul.f32 %v1918, %v994
        %v1923 = vsub.f32 %v1905, %v1919
        %v1924 = vsub.f32 %v1906, %v1920
        %v1925 = vsub.f32 %v1907, %v1921
        %v1926 = vsub.f32 %v1908, %v1922
        %v1927 = vmul.f32 %v1923, %v1923
        %v1928 = vmul.f32 %v1924, %v1924
        %v1929 = vmul.f32 %v1925, %v1925
        %v1930 = vmul.f32 %v1926, %v1926
        %1931 = vadd.xlane.f32.xlu0 %v1927
        %v1932 = vpop.xlane.xlu0 %1931
        %1933 = vadd.xlane.f32.xlu0 %v1928
        %v1934 = vpop.xlane.xlu0 %1933
        %1935 = vadd.xlane.f32.xlu0 %v1929
        %v1936 = vpop.xlane.xlu0 %1935
        %1937 = vadd.xlane.f32.xlu0 %v1930
        %v1938 = vpop.xlane.xlu0 %1937
        %v1939 = vmul.f32 %v1932, %v994
        %v1940 = vmul.f32 %v1934, %v994
        %v1941 = vmul.f32 %v1936, %v994
        %v1942 = vmul.f32 %v1938, %v994
        %v1943 = vadd.f32 %v1939, 1e-05
        %v1944 = vadd.f32 %v1940, 1e-05
        %v1945 = vadd.f32 %v1941, 1e-05
        %v1946 = vadd.f32 %v1942, 1e-05
        %v1947 = vrsqrt.pop %v1943
        %v1948 = vmul.f32 %v1947, %v1943
        %v1949 = vmul.f32 %v1948, %v1947
        %v1950 = vmul.f32 0.5, %v1949
        %v1951 = vsub.f32 1.5, %v1950
        %v1952 = vmul.f32 %v1947, %v1951
        %vm1953 = vweird.f32 %v1943
        %vm1954 = vweird.f32 %v1947
        %vm1955 = vmor %vm1953, %vm1954
        %v1956 = vsel %vm1955, %v1947, %v1952
        %v1957 = vrsqrt.pop %v1944
        %v1958 = vmul.f32 %v1957, %v1944
        %v1959 = vmul.f32 %v1958, %v1957
        %v1960 = vmul.f32 0.5, %v1959
        %v1961 = vsub.f32 1.5, %v1960
        %v1962 = vmul.f32 %v1957, %v1961
        %vm1963 = vweird.f32 %v1944
        %vm1964 = vweird.f32 %v1957
        %vm1965 = vmor %vm1963, %vm1964
        %v1966 = vsel %vm1965, %v1957, %v1962
        %v1967 = vrsqrt.pop %v1945
        %v1968 = vmul.f32 %v1967, %v1945
        %v1969 = vmul.f32 %v1968, %v1967
        %v1970 = vmul.f32 0.5, %v1969
        %v1971 = vsub.f32 1.5, %v1970
        %v1972 = vmul.f32 %v1967, %v1971
        %vm1973 = vweird.f32 %v1945
        %vm1974 = vweird.f32 %v1967
        %vm1975 = vmor %vm1973, %vm1974
        %v1976 = vsel %vm1975, %v1967, %v1972
        %v1977 = vrsqrt.pop %v1946
        %v1978 = vmul.f32 %v1977, %v1946
        %v1979 = vmul.f32 %v1978, %v1977
        %v1980 = vmul.f32 0.5, %v1979
        %v1981 = vsub.f32 1.5, %v1980
        %v1982 = vmul.f32 %v1977, %v1981
        %vm1983 = vweird.f32 %v1946
        %vm1984 = vweird.f32 %v1977
        %vm1985 = vmor %vm1983, %vm1984
        %v1986 = vsel %vm1985, %v1977, %v1982
        %v1987 = vmul.f32 %v1923, %v1956
        %v1988 = vmul.f32 %v1924, %v1966
        %v1989 = vmul.f32 %v1925, %v1976
        %v1990 = vmul.f32 %v1926, %v1986
        %v1992 = vperm.slane %v1909, 0
        %v1994 = vmul.f32 %v1987, %v1992
        %v1995 = vmul.f32 %v1988, %v1992
        %v1996 = vmul.f32 %v1989, %v1992
        %v1997 = vmul.f32 %v1990, %v1992
        %v1999 = vperm.slane %v1910, 0
        %v2001 = vadd.f32 %v1994, %v1999
        %v2002 = vadd.f32 %v1995, %v1999
        %v2003 = vadd.f32 %v1996, %v1999
        %v2004 = vadd.f32 %v1997, %v1999
        %v2005 = vpack.c.bf16 %v2002, %v2001
        %v2006 = vpack.c.bf16 %v2004, %v2003
        %v2007 = vld [vmem:[%s791] sm:$0xff]
        %v2008 = vld [vmem:[%s791 + $0x8] sm:$0xff]
        %v2009 = vld [vmem:[%s791 + $0x10] sm:$0xff]
        %v2010 = vld [vmem:[%s791 + $0x18] sm:$0xff]
        %v2011 = vld [vmem:[%s791 + $0x20] sm:$0xff]
        %v2012 = vld [vmem:[%s791 + $0x28] sm:$0xff]
        %v2013 = vld [vmem:[%s791 + $0x30] sm:$0xff]
        %v2014 = vld [vmem:[%s791 + $0x38] sm:$0xff]
        %v2015 = vld [vmem:[%s791 + $0x40] sm:$0xff]
        %v2016 = vld [vmem:[%s791 + $0x48] sm:$0xff]
        %v2017 = vld [vmem:[%s791 + $0x50] sm:$0xff]
        %v2018 = vld [vmem:[%s791 + $0x58] sm:$0xff]
        %v2019 = vld [vmem:[%s791 + $0x60] sm:$0xff]
        %v2020 = vld [vmem:[%s791 + $0x68] sm:$0xff]
        %v2021 = vld [vmem:[%s791 + $0x70] sm:$0xff]
        %v2022 = vld [vmem:[%s791 + $0x78] sm:$0xff]
        %v2023 = vld [vmem:[%s791 + $0x80] sm:$0xff]
        %v2024 = vld [vmem:[%s791 + $0x88] sm:$0xff]
        %v2025 = vld [vmem:[%s791 + $0x90] sm:$0xff]
        %v2026 = vld [vmem:[%s791 + $0x98] sm:$0xff]
        %v2027 = vld [vmem:[%s791 + $0xa0] sm:$0xff]
        %v2028 = vld [vmem:[%s791 + $0xa8] sm:$0xff]
        %v2029 = vld [vmem:[%s791 + $0xb0] sm:$0xff]
        %v2030 = vld [vmem:[%s791 + $0xb8] sm:$0xff]
        %v2031 = vld [vmem:[%s791 + $0xc0] sm:$0xff]
        %v2032 = vld [vmem:[%s791 + $0xc8] sm:$0xff]
        %v2033 = vld [vmem:[%s791 + $0xd0] sm:$0xff]
        %v2034 = vld [vmem:[%s791 + $0xd8] sm:$0xff]
        %v2035 = vld [vmem:[%s791 + $0xe0] sm:$0xff]
        %v2036 = vld [vmem:[%s791 + $0xe8] sm:$0xff]
        %v2037 = vld [vmem:[%s791 + $0xf0] sm:$0xff]
        %v2038 = vld [vmem:[%s791 + $0xf8] sm:$0xff]
        %v2039 = vld [vmem:[%s801] sm:$0xf]
        %v2041 = vperm.slane %v2039, 0
        %v2042 = vperm.slane %v2039, 1
        %v2043 = vperm.slane %v2039, 2
        %v2044 = vperm.slane %v2039, 3
        %v2081 = vunpack.c.l.b16 %v2007
        %v2082 = vunpack.c.h.b16 %v2007
        %v2083 = vunpack.c.l.b16 %v2008
        %v2084 = vunpack.c.h.b16 %v2008
        %v2085 = vunpack.c.l.b16 %v2009
        %v2086 = vunpack.c.h.b16 %v2009
        %v2087 = vunpack.c.l.b16 %v2010
        %v2088 = vunpack.c.h.b16 %v2010
        %v2089 = vunpack.c.l.b16 %v2011
        %v2090 = vunpack.c.h.b16 %v2011
        %v2091 = vunpack.c.l.b16 %v2012
        %v2092 = vunpack.c.h.b16 %v2012
        %v2093 = vunpack.c.l.b16 %v2013
        %v2094 = vunpack.c.h.b16 %v2013
        %v2095 = vunpack.c.l.b16 %v2014
        %v2096 = vunpack.c.h.b16 %v2014
        %v2097 = vunpack.c.l.b16 %v2015
        %v2098 = vunpack.c.h.b16 %v2015
        %v2099 = vunpack.c.l.b16 %v2016
        %v2100 = vunpack.c.h.b16 %v2016
        %v2101 = vunpack.c.l.b16 %v2017
        %v2102 = vunpack.c.h.b16 %v2017
        %v2103 = vunpack.c.l.b16 %v2018
        %v2104 = vunpack.c.h.b16 %v2018
        %v2105 = vunpack.c.l.b16 %v2019
        %v2106 = vunpack.c.h.b16 %v2019
        %v2107 = vunpack.c.l.b16 %v2020
        %v2108 = vunpack.c.h.b16 %v2020
        %v2109 = vunpack.c.l.b16 %v2021
        %v2110 = vunpack.c.h.b16 %v2021
        %v2111 = vunpack.c.l.b16 %v2022
        %v2112 = vunpack.c.h.b16 %v2022
        %v2113 = vunpack.c.l.b16 %v2023
        %v2114 = vunpack.c.h.b16 %v2023
        %v2115 = vunpack.c.l.b16 %v2024
        %v2116 = vunpack.c.h.b16 %v2024
        %v2117 = vunpack.c.l.b16 %v2025
        %v2118 = vunpack.c.h.b16 %v2025
        %v2119 = vunpack.c.l.b16 %v2026
        %v2120 = vunpack.c.h.b16 %v2026
        %v2121 = vunpack.c.l.b16 %v2027
        %v2122 = vunpack.c.h.b16 %v2027
        %v2123 = vunpack.c.l.b16 %v2028
        %v2124 = vunpack.c.h.b16 %v2028
        %v2125 = vunpack.c.l.b16 %v2029
        %v2126 = vunpack.c.h.b16 %v2029
        %v2127 = vunpack.c.l.b16 %v2030
        %v2128 = vunpack.c.h.b16 %v2030
        %v2129 = vunpack.c.l.b16 %v2031
        %v2130 = vunpack.c.h.b16 %v2031
        %v2131 = vunpack.c.l.b16 %v2032
        %v2132 = vunpack.c.h.b16 %v2032
        %v2133 = vunpack.c.l.b16 %v2033
        %v2134 = vunpack.c.h.b16 %v2033
        %v2135 = vunpack.c.l.b16 %v2034
        %v2136 = vunpack.c.h.b16 %v2034
        %v2137 = vunpack.c.l.b16 %v2035
        %v2138 = vunpack.c.h.b16 %v2035
        %v2139 = vunpack.c.l.b16 %v2036
        %v2140 = vunpack.c.h.b16 %v2036
        %v2141 = vunpack.c.l.b16 %v2037
        %v2142 = vunpack.c.h.b16 %v2037
        %v2143 = vunpack.c.l.b16 %v2038
        %v2144 = vunpack.c.h.b16 %v2038
        %v2145 = vpack.c.b16 %v2085, %v2081
        %v2146 = vpack.c.b16 %v2086, %v2082
        %v2147 = vpack.c.b16 %v2087, %v2083
        %v2148 = vpack.c.b16 %v2088, %v2084
        %v2149 = vpack.c.b16 %v2093, %v2089
        %v2150 = vpack.c.b16 %v2094, %v2090
        %v2151 = vpack.c.b16 %v2095, %v2091
        %v2152 = vpack.c.b16 %v2096, %v2092
        %v2153 = vpack.c.b16 %v2101, %v2097
        %v2154 = vpack.c.b16 %v2102, %v2098
        %v2155 = vpack.c.b16 %v2103, %v2099
        %v2156 = vpack.c.b16 %v2104, %v2100
        %v2157 = vpack.c.b16 %v2109, %v2105
        %v2158 = vpack.c.b16 %v2110, %v2106
        %v2159 = vpack.c.b16 %v2111, %v2107
        %v2160 = vpack.c.b16 %v2112, %v2108
        %v2161 = vpack.c.b16 %v2117, %v2113
        %v2162 = vpack.c.b16 %v2118, %v2114
        %v2163 = vpack.c.b16 %v2119, %v2115
        %v2164 = vpack.c.b16 %v2120, %v2116
        %v2165 = vpack.c.b16 %v2125, %v2121
        %v2166 = vpack.c.b16 %v2126, %v2122
        %v2167 = vpack.c.b16 %v2127, %v2123
        %v2168 = vpack.c.b16 %v2128, %v2124
        %v2169 = vpack.c.b16 %v2133, %v2129
        %v2170 = vpack.c.b16 %v2134, %v2130
        %v2171 = vpack.c.b16 %v2135, %v2131
        %v2172 = vpack.c.b16 %v2136, %v2132
        %v2173 = vpack.c.b16 %v2141, %v2137
        %v2174 = vpack.c.b16 %v2142, %v2138
        %v2175 = vpack.c.b16 %v2143, %v2139
        %v2176 = vpack.c.b16 %v2144, %v2140
        %2209 = vmatpush.bf16.msra.mxu0 %v2173
        %2210 = vmatpush.bf16.msra.mxu0 %v2169
        %2211 = vmatpush.bf16.msra.mxu0 %v2165
        %2212 = vmatpush.bf16.msra.mxu0 %v2161
        %2213 = vmatpush.bf16.msra.mxu0 %v2157
        %2214 = vmatpush.bf16.msra.mxu0 %v2153
        %2215 = vmatpush.bf16.msra.mxu0 %v2149
        %2216 = vmatpush.bf16.msra.mxu0 %v2145
        %2217 = vmatmul.bf16.gmra.mxu0 %v2005
        %v2218 = vpop.f32.mrf.mxu0
        %v2219 = vadd.f32 %v2041, %v2218
        %v2220 = vpop.f32.mrf.mxu0
        %v2221 = vadd.f32 %v2041, %v2220
        %2222 = vmatmul.bf16.gmra.mxu0 %v2006
        %v2223 = vpop.f32.mrf.mxu0
        %v2224 = vadd.f32 %v2041, %v2223
        %v2225 = vpop.f32.mrf.mxu0
        %v2226 = vadd.f32 %v2041, %v2225
        %2227 = vdwg.mxu0
        %2228 = vmatpush.bf16.msra.mxu0 %v2174
        %2229 = vmatpush.bf16.msra.mxu0 %v2170
        %2230 = vmatpush.bf16.msra.mxu0 %v2166
        %2231 = vmatpush.bf16.msra.mxu0 %v2162
        %2232 = vmatpush.bf16.msra.mxu0 %v2158
        %2233 = vmatpush.bf16.msra.mxu0 %v2154
        %2234 = vmatpush.bf16.msra.mxu0 %v2150
        %2235 = vmatpush.bf16.msra.mxu0 %v2146
        %2236 = vmatmul.bf16.gmra.mxu0 %v2005
        %v2237 = vpop.f32.mrf.mxu0
        %v2238 = vadd.f32 %v2042, %v2237
        %v2239 = vpop.f32.mrf.mxu0
        %v2240 = vadd.f32 %v2042, %v2239
        %2241 = vmatmul.bf16.gmra.mxu0 %v2006
        %v2242 = vpop.f32.mrf.mxu0
        %v2243 = vadd.f32 %v2042, %v2242
        %v2244 = vpop.f32.mrf.mxu0
        %v2245 = vadd.f32 %v2042, %v2244
        %2246 = vdwg.mxu0
        %2247 = vmatpush.bf16.msra.mxu0 %v2175
        %2248 = vmatpush.bf16.msra.mxu0 %v2171
        %2249 = vmatpush.bf16.msra.mxu0 %v2167
        %2250 = vmatpush.bf16.msra.mxu0 %v2163
        %2251 = vmatpush.bf16.msra.mxu0 %v2159
        %2252 = vmatpush.bf16.msra.mxu0 %v2155
        %2253 = vmatpush.bf16.msra.mxu0 %v2151
        %2254 = vmatpush.bf16.msra.mxu0 %v2147
        %2255 = vmatmul.bf16.gmra.mxu0 %v2005
        %v2256 = vpop.f32.mrf.mxu0
        %v2257 = vadd.f32 %v2043, %v2256
        %v2258 = vpop.f32.mrf.mxu0
        %v2259 = vadd.f32 %v2043, %v2258
        %2260 = vmatmul.bf16.gmra.mxu0 %v2006
        %v2261 = vpop.f32.mrf.mxu0
        %v2262 = vadd.f32 %v2043, %v2261
        %v2263 = vpop.f32.mrf.mxu0
        %v2264 = vadd.f32 %v2043, %v2263
        %2265 = vdwg.mxu0
        %2266 = vmatpush.bf16.msra.mxu0 %v2176
        %2267 = vmatpush.bf16.msra.mxu0 %v2172
        %2268 = vmatpush.bf16.msra.mxu0 %v2168
        %2269 = vmatpush.bf16.msra.mxu0 %v2164
        %2270 = vmatpush.bf16.msra.mxu0 %v2160
        %2271 = vmatpush.bf16.msra.mxu0 %v2156
        %2272 = vmatpush.bf16.msra.mxu0 %v2152
        %2273 = vmatpush.bf16.msra.mxu0 %v2148
        %2274 = vmatmul.bf16.gmra.mxu0 %v2005
        %v2275 = vpop.f32.mrf.mxu0
        %v2276 = vadd.f32 %v2044, %v2275
        %v2277 = vpop.f32.mrf.mxu0
        %v2278 = vadd.f32 %v2044, %v2277
        %2279 = vmatmul.bf16.gmra.mxu0 %v2006
        %v2280 = vpop.f32.mrf.mxu0
        %v2281 = vadd.f32 %v2044, %v2280
        %v2282 = vpop.f32.mrf.mxu0
        %v2283 = vadd.f32 %v2044, %v2282
        %2284 = vdwg.mxu0
        %v2285 = vmul.f32 %v2219, 1.702
        %v2286 = vmul.f32 %v2238, 1.702
        %v2287 = vmul.f32 %v2257, 1.702
        %v2288 = vmul.f32 %v2276, 1.702
        %v2289 = vmul.f32 %v2221, 1.702
        %v2290 = vmul.f32 %v2240, 1.702
        %v2291 = vmul.f32 %v2259, 1.702
        %v2292 = vmul.f32 %v2278, 1.702
        %v2293 = vmul.f32 %v2224, 1.702
        %v2294 = vmul.f32 %v2243, 1.702
        %v2295 = vmul.f32 %v2262, 1.702
        %v2296 = vmul.f32 %v2281, 1.702
        %v2297 = vmul.f32 %v2226, 1.702
        %v2298 = vmul.f32 %v2245, 1.702
        %v2299 = vmul.f32 %v2264, 1.702
        %v2300 = vmul.f32 %v2283, 1.702
        %v2301 = vxor.u32 %v2285, 2147483648
        %v2302 = vxor.u32 %v2286, 2147483648
        %v2303 = vxor.u32 %v2287, 2147483648
        %v2304 = vxor.u32 %v2288, 2147483648
        %v2305 = vxor.u32 %v2289, 2147483648
        %v2306 = vxor.u32 %v2290, 2147483648
        %v2307 = vxor.u32 %v2291, 2147483648
        %v2308 = vxor.u32 %v2292, 2147483648
        %v2309 = vxor.u32 %v2293, 2147483648
        %v2310 = vxor.u32 %v2294, 2147483648
        %v2311 = vxor.u32 %v2295, 2147483648
        %v2312 = vxor.u32 %v2296, 2147483648
        %v2313 = vxor.u32 %v2297, 2147483648
        %v2314 = vxor.u32 %v2298, 2147483648
        %v2315 = vxor.u32 %v2299, 2147483648
        %v2316 = vxor.u32 %v2300, 2147483648
        %v2317 = vmul.f32 %v2301, 1.442695
        %v2318 = vpow.pop %v2317
        %v2319 = vmul.f32 %v2302, 1.442695
        %v2320 = vpow.pop %v2319
        %v2321 = vmul.f32 %v2303, 1.442695
        %v2322 = vpow.pop %v2321
        %v2323 = vmul.f32 %v2304, 1.442695
        %v2324 = vpow.pop %v2323
        %v2325 = vmul.f32 %v2305, 1.442695
        %v2326 = vpow.pop %v2325
        %v2327 = vmul.f32 %v2306, 1.442695
        %v2328 = vpow.pop %v2327
        %v2329 = vmul.f32 %v2307, 1.442695
        %v2330 = vpow.pop %v2329
        %v2331 = vmul.f32 %v2308, 1.442695
        %v2332 = vpow.pop %v2331
        %v2333 = vmul.f32 %v2309, 1.442695
        %v2334 = vpow.pop %v2333
        %v2335 = vmul.f32 %v2310, 1.442695
        %v2336 = vpow.pop %v2335
        %v2337 = vmul.f32 %v2311, 1.442695
        %v2338 = vpow.pop %v2337
        %v2339 = vmul.f32 %v2312, 1.442695
        %v2340 = vpow.pop %v2339
        %v2341 = vmul.f32 %v2313, 1.442695
        %v2342 = vpow.pop %v2341
        %v2343 = vmul.f32 %v2314, 1.442695
        %v2344 = vpow.pop %v2343
        %v2345 = vmul.f32 %v2315, 1.442695
        %v2346 = vpow.pop %v2345
        %v2347 = vmul.f32 %v2316, 1.442695
        %v2348 = vpow.pop %v2347
        %v2349 = vadd.f32 %v2318, 1.0
        %v2350 = vadd.f32 %v2320, 1.0
        %v2351 = vadd.f32 %v2322, 1.0
        %v2352 = vadd.f32 %v2324, 1.0
        %v2353 = vadd.f32 %v2326, 1.0
        %v2354 = vadd.f32 %v2328, 1.0
        %v2355 = vadd.f32 %v2330, 1.0
        %v2356 = vadd.f32 %v2332, 1.0
        %v2357 = vadd.f32 %v2334, 1.0
        %v2358 = vadd.f32 %v2336, 1.0
        %v2359 = vadd.f32 %v2338, 1.0
        %v2360 = vadd.f32 %v2340, 1.0
        %v2361 = vadd.f32 %v2342, 1.0
        %v2362 = vadd.f32 %v2344, 1.0
        %v2363 = vadd.f32 %v2346, 1.0
        %v2364 = vadd.f32 %v2348, 1.0
        %v2365 = vrcp.pop %v2349
        %v2366 = vmul.f32 %v2349, %v2365
        %v2367 = vsub.f32 1.0, %v2366
        %v2368 = vmul.f32 %v2365, %v2367
        %v2369 = vadd.f32 %v2365, %v2368
        %vm2370 = vweird.f32 %v2349
        %vm2371 = vweird.f32 %v2365
        %vm2372 = vmor %vm2370, %vm2371
        %v2373 = vsel %vm2372, %v2365, %v2369
        %v2374 = vand.u32 2147483647, %v2349
        %vm2375 = vcmp.eq.f32.partialorder %v2374, 8.507059e+37
        %v2376 = vand.u32 %v2349, 2147483648
        %v2377 = vor.u32 1.1754944e-38, %v2376
        %v2378 = vsel %vm2375, %v2377, %v2373
        %v2379 = vmul.f32 1.0, %v2378
        %v2380 = vrcp.pop %v2350
        %v2381 = vmul.f32 %v2350, %v2380
        %v2382 = vsub.f32 1.0, %v2381
        %v2383 = vmul.f32 %v2380, %v2382
        %v2384 = vadd.f32 %v2380, %v2383
        %vm2385 = vweird.f32 %v2350
        %vm2386 = vweird.f32 %v2380
        %vm2387 = vmor %vm2385, %vm2386
        %v2388 = vsel %vm2387, %v2380, %v2384
        %v2389 = vand.u32 2147483647, %v2350
        %vm2390 = vcmp.eq.f32.partialorder %v2389, 8.507059e+37
        %v2391 = vand.u32 %v2350, 2147483648
        %v2392 = vor.u32 1.1754944e-38, %v2391
        %v2393 = vsel %vm2390, %v2392, %v2388
        %v2394 = vmul.f32 1.0, %v2393
        %v2395 = vrcp.pop %v2351
        %v2396 = vmul.f32 %v2351, %v2395
        %v2397 = vsub.f32 1.0, %v2396
        %v2398 = vmul.f32 %v2395, %v2397
        %v2399 = vadd.f32 %v2395, %v2398
        %vm2400 = vweird.f32 %v2351
        %vm2401 = vweird.f32 %v2395
        %vm2402 = vmor %vm2400, %vm2401
        %v2403 = vsel %vm2402, %v2395, %v2399
        %v2404 = vand.u32 2147483647, %v2351
        %vm2405 = vcmp.eq.f32.partialorder %v2404, 8.507059e+37
        %v2406 = vand.u32 %v2351, 2147483648
        %v2407 = vor.u32 1.1754944e-38, %v2406
        %v2408 = vsel %vm2405, %v2407, %v2403
        %v2409 = vmul.f32 1.0, %v2408
        %v2410 = vrcp.pop %v2352
        %v2411 = vmul.f32 %v2352, %v2410
        %v2412 = vsub.f32 1.0, %v2411
        %v2413 = vmul.f32 %v2410, %v2412
        %v2414 = vadd.f32 %v2410, %v2413
        %vm2415 = vweird.f32 %v2352
        %vm2416 = vweird.f32 %v2410
        %vm2417 = vmor %vm2415, %vm2416
        %v2418 = vsel %vm2417, %v2410, %v2414
        %v2419 = vand.u32 2147483647, %v2352
        %vm2420 = vcmp.eq.f32.partialorder %v2419, 8.507059e+37
        %v2421 = vand.u32 %v2352, 2147483648
        %v2422 = vor.u32 1.1754944e-38, %v2421
        %v2423 = vsel %vm2420, %v2422, %v2418
        %v2424 = vmul.f32 1.0, %v2423
        %v2425 = vrcp.pop %v2353
        %v2426 = vmul.f32 %v2353, %v2425
        %v2427 = vsub.f32 1.0, %v2426
        %v2428 = vmul.f32 %v2425, %v2427
        %v2429 = vadd.f32 %v2425, %v2428
        %vm2430 = vweird.f32 %v2353
        %vm2431 = vweird.f32 %v2425
        %vm2432 = vmor %vm2430, %vm2431
        %v2433 = vsel %vm2432, %v2425, %v2429
        %v2434 = vand.u32 2147483647, %v2353
        %vm2435 = vcmp.eq.f32.partialorder %v2434, 8.507059e+37
        %v2436 = vand.u32 %v2353, 2147483648
        %v2437 = vor.u32 1.1754944e-38, %v2436
        %v2438 = vsel %vm2435, %v2437, %v2433
        %v2439 = vmul.f32 1.0, %v2438
        %v2440 = vrcp.pop %v2354
        %v2441 = vmul.f32 %v2354, %v2440
        %v2442 = vsub.f32 1.0, %v2441
        %v2443 = vmul.f32 %v2440, %v2442
        %v2444 = vadd.f32 %v2440, %v2443
        %vm2445 = vweird.f32 %v2354
        %vm2446 = vweird.f32 %v2440
        %vm2447 = vmor %vm2445, %vm2446
        %v2448 = vsel %vm2447, %v2440, %v2444
        %v2449 = vand.u32 2147483647, %v2354
        %vm2450 = vcmp.eq.f32.partialorder %v2449, 8.507059e+37
        %v2451 = vand.u32 %v2354, 2147483648
        %v2452 = vor.u32 1.1754944e-38, %v2451
        %v2453 = vsel %vm2450, %v2452, %v2448
        %v2454 = vmul.f32 1.0, %v2453
        %v2455 = vrcp.pop %v2355
        %v2456 = vmul.f32 %v2355, %v2455
        %v2457 = vsub.f32 1.0, %v2456
        %v2458 = vmul.f32 %v2455, %v2457
        %v2459 = vadd.f32 %v2455, %v2458
        %vm2460 = vweird.f32 %v2355
        %vm2461 = vweird.f32 %v2455
        %vm2462 = vmor %vm2460, %vm2461
        %v2463 = vsel %vm2462, %v2455, %v2459
        %v2464 = vand.u32 2147483647, %v2355
        %vm2465 = vcmp.eq.f32.partialorder %v2464, 8.507059e+37
        %v2466 = vand.u32 %v2355, 2147483648
        %v2467 = vor.u32 1.1754944e-38, %v2466
        %v2468 = vsel %vm2465, %v2467, %v2463
        %v2469 = vmul.f32 1.0, %v2468
        %v2470 = vrcp.pop %v2356
        %v2471 = vmul.f32 %v2356, %v2470
        %v2472 = vsub.f32 1.0, %v2471
        %v2473 = vmul.f32 %v2470, %v2472
        %v2474 = vadd.f32 %v2470, %v2473
        %vm2475 = vweird.f32 %v2356
        %vm2476 = vweird.f32 %v2470
        %vm2477 = vmor %vm2475, %vm2476
        %v2478 = vsel %vm2477, %v2470, %v2474
        %v2479 = vand.u32 2147483647, %v2356
        %vm2480 = vcmp.eq.f32.partialorder %v2479, 8.507059e+37
        %v2481 = vand.u32 %v2356, 2147483648
        %v2482 = vor.u32 1.1754944e-38, %v2481
        %v2483 = vsel %vm2480, %v2482, %v2478
        %v2484 = vmul.f32 1.0, %v2483
        %v2485 = vrcp.pop %v2357
        %v2486 = vmul.f32 %v2357, %v2485
        %v2487 = vsub.f32 1.0, %v2486
        %v2488 = vmul.f32 %v2485, %v2487
        %v2489 = vadd.f32 %v2485, %v2488
        %vm2490 = vweird.f32 %v2357
        %vm2491 = vweird.f32 %v2485
        %vm2492 = vmor %vm2490, %vm2491
        %v2493 = vsel %vm2492, %v2485, %v2489
        %v2494 = vand.u32 2147483647, %v2357
        %vm2495 = vcmp.eq.f32.partialorder %v2494, 8.507059e+37
        %v2496 = vand.u32 %v2357, 2147483648
        %v2497 = vor.u32 1.1754944e-38, %v2496
        %v2498 = vsel %vm2495, %v2497, %v2493
        %v2499 = vmul.f32 1.0, %v2498
        %v2500 = vrcp.pop %v2358
        %v2501 = vmul.f32 %v2358, %v2500
        %v2502 = vsub.f32 1.0, %v2501
        %v2503 = vmul.f32 %v2500, %v2502
        %v2504 = vadd.f32 %v2500, %v2503
        %vm2505 = vweird.f32 %v2358
        %vm2506 = vweird.f32 %v2500
        %vm2507 = vmor %vm2505, %vm2506
        %v2508 = vsel %vm2507, %v2500, %v2504
        %v2509 = vand.u32 2147483647, %v2358
        %vm2510 = vcmp.eq.f32.partialorder %v2509, 8.507059e+37
        %v2511 = vand.u32 %v2358, 2147483648
        %v2512 = vor.u32 1.1754944e-38, %v2511
        %v2513 = vsel %vm2510, %v2512, %v2508
        %v2514 = vmul.f32 1.0, %v2513
        %v2515 = vrcp.pop %v2359
        %v2516 = vmul.f32 %v2359, %v2515
        %v2517 = vsub.f32 1.0, %v2516
        %v2518 = vmul.f32 %v2515, %v2517
        %v2519 = vadd.f32 %v2515, %v2518
        %vm2520 = vweird.f32 %v2359
        %vm2521 = vweird.f32 %v2515
        %vm2522 = vmor %vm2520, %vm2521
        %v2523 = vsel %vm2522, %v2515, %v2519
        %v2524 = vand.u32 2147483647, %v2359
        %vm2525 = vcmp.eq.f32.partialorder %v2524, 8.507059e+37
        %v2526 = vand.u32 %v2359, 2147483648
        %v2527 = vor.u32 1.1754944e-38, %v2526
        %v2528 = vsel %vm2525, %v2527, %v2523
        %v2529 = vmul.f32 1.0, %v2528
        %v2530 = vrcp.pop %v2360
        %v2531 = vmul.f32 %v2360, %v2530
        %v2532 = vsub.f32 1.0, %v2531
        %v2533 = vmul.f32 %v2530, %v2532
        %v2534 = vadd.f32 %v2530, %v2533
        %vm2535 = vweird.f32 %v2360
        %vm2536 = vweird.f32 %v2530
        %vm2537 = vmor %vm2535, %vm2536
        %v2538 = vsel %vm2537, %v2530, %v2534
        %v2539 = vand.u32 2147483647, %v2360
        %vm2540 = vcmp.eq.f32.partialorder %v2539, 8.507059e+37
        %v2541 = vand.u32 %v2360, 2147483648
        %v2542 = vor.u32 1.1754944e-38, %v2541
        %v2543 = vsel %vm2540, %v2542, %v2538
        %v2544 = vmul.f32 1.0, %v2543
        %v2545 = vrcp.pop %v2361
        %v2546 = vmul.f32 %v2361, %v2545
        %v2547 = vsub.f32 1.0, %v2546
        %v2548 = vmul.f32 %v2545, %v2547
        %v2549 = vadd.f32 %v2545, %v2548
        %vm2550 = vweird.f32 %v2361
        %vm2551 = vweird.f32 %v2545
        %vm2552 = vmor %vm2550, %vm2551
        %v2553 = vsel %vm2552, %v2545, %v2549
        %v2554 = vand.u32 2147483647, %v2361
        %vm2555 = vcmp.eq.f32.partialorder %v2554, 8.507059e+37
        %v2556 = vand.u32 %v2361, 2147483648
        %v2557 = vor.u32 1.1754944e-38, %v2556
        %v2558 = vsel %vm2555, %v2557, %v2553
        %v2559 = vmul.f32 1.0, %v2558
        %v2560 = vrcp.pop %v2362
        %v2561 = vmul.f32 %v2362, %v2560
        %v2562 = vsub.f32 1.0, %v2561
        %v2563 = vmul.f32 %v2560, %v2562
        %v2564 = vadd.f32 %v2560, %v2563
        %vm2565 = vweird.f32 %v2362
        %vm2566 = vweird.f32 %v2560
        %vm2567 = vmor %vm2565, %vm2566
        %v2568 = vsel %vm2567, %v2560, %v2564
        %v2569 = vand.u32 2147483647, %v2362
        %vm2570 = vcmp.eq.f32.partialorder %v2569, 8.507059e+37
        %v2571 = vand.u32 %v2362, 2147483648
        %v2572 = vor.u32 1.1754944e-38, %v2571
        %v2573 = vsel %vm2570, %v2572, %v2568
        %v2574 = vmul.f32 1.0, %v2573
        %v2575 = vrcp.pop %v2363
        %v2576 = vmul.f32 %v2363, %v2575
        %v2577 = vsub.f32 1.0, %v2576
        %v2578 = vmul.f32 %v2575, %v2577
        %v2579 = vadd.f32 %v2575, %v2578
        %vm2580 = vweird.f32 %v2363
        %vm2581 = vweird.f32 %v2575
        %vm2582 = vmor %vm2580, %vm2581
        %v2583 = vsel %vm2582, %v2575, %v2579
        %v2584 = vand.u32 2147483647, %v2363
        %vm2585 = vcmp.eq.f32.partialorder %v2584, 8.507059e+37
        %v2586 = vand.u32 %v2363, 2147483648
        %v2587 = vor.u32 1.1754944e-38, %v2586
        %v2588 = vsel %vm2585, %v2587, %v2583
        %v2589 = vmul.f32 1.0, %v2588
        %v2590 = vrcp.pop %v2364
        %v2591 = vmul.f32 %v2364, %v2590
        %v2592 = vsub.f32 1.0, %v2591
        %v2593 = vmul.f32 %v2590, %v2592
        %v2594 = vadd.f32 %v2590, %v2593
        %vm2595 = vweird.f32 %v2364
        %vm2596 = vweird.f32 %v2590
        %vm2597 = vmor %vm2595, %vm2596
        %v2598 = vsel %vm2597, %v2590, %v2594
        %v2599 = vand.u32 2147483647, %v2364
        %vm2600 = vcmp.eq.f32.partialorder %v2599, 8.507059e+37
        %v2601 = vand.u32 %v2364, 2147483648
        %v2602 = vor.u32 1.1754944e-38, %v2601
        %v2603 = vsel %vm2600, %v2602, %v2598
        %v2604 = vmul.f32 1.0, %v2603
        %v2605 = vmul.f32 %v2219, %v2379
        %v2606 = vmul.f32 %v2238, %v2394
        %v2607 = vmul.f32 %v2257, %v2409
        %v2608 = vmul.f32 %v2276, %v2424
        %v2609 = vmul.f32 %v2221, %v2439
        %v2610 = vmul.f32 %v2240, %v2454
        %v2611 = vmul.f32 %v2259, %v2469
        %v2612 = vmul.f32 %v2278, %v2484
        %v2613 = vmul.f32 %v2224, %v2499
        %v2614 = vmul.f32 %v2243, %v2514
        %v2615 = vmul.f32 %v2262, %v2529
        %v2616 = vmul.f32 %v2281, %v2544
        %v2617 = vmul.f32 %v2226, %v2559
        %v2618 = vmul.f32 %v2245, %v2574
        %v2619 = vmul.f32 %v2264, %v2589
        %v2620 = vmul.f32 %v2283, %v2604
        %v2621 = vpack.c.bf16 %v2609, %v2605
        %v2622 = vpack.c.bf16 %v2610, %v2606
        %v2623 = vpack.c.bf16 %v2611, %v2607
        %v2624 = vpack.c.bf16 %v2612, %v2608
        %v2625 = vpack.c.bf16 %v2617, %v2613
        %v2626 = vpack.c.bf16 %v2618, %v2614
        %v2627 = vpack.c.bf16 %v2619, %v2615
        %v2628 = vpack.c.bf16 %v2620, %v2616
        %v2629 = vld [vmem:[%s811] sm:$0xf]
        %v2630 = vld [vmem:[%s811 + $0x4] sm:$0xf]
        %v2631 = vld [vmem:[%s811 + $0x8] sm:$0xf]
        %v2632 = vld [vmem:[%s811 + $0xc] sm:$0xf]
        %v2633 = vld [vmem:[%s811 + $0x10] sm:$0xf]
        %v2634 = vld [vmem:[%s811 + $0x14] sm:$0xf]
        %v2635 = vld [vmem:[%s811 + $0x18] sm:$0xf]
        %v2636 = vld [vmem:[%s811 + $0x1c] sm:$0xf]
        %v2637 = vld [vmem:[%s811 + $0x20] sm:$0xf]
        %v2638 = vld [vmem:[%s811 + $0x24] sm:$0xf]
        %v2639 = vld [vmem:[%s811 + $0x28] sm:$0xf]
        %v2640 = vld [vmem:[%s811 + $0x2c] sm:$0xf]
        %v2641 = vld [vmem:[%s811 + $0x30] sm:$0xf]
        %v2642 = vld [vmem:[%s811 + $0x34] sm:$0xf]
        %v2643 = vld [vmem:[%s811 + $0x38] sm:$0xf]
        %v2644 = vld [vmem:[%s811 + $0x3c] sm:$0xf]
        %v2645 = vld [vmem:[%s811 + $0x40] sm:$0xf]
        %v2646 = vld [vmem:[%s811 + $0x44] sm:$0xf]
        %v2647 = vld [vmem:[%s811 + $0x48] sm:$0xf]
        %v2648 = vld [vmem:[%s811 + $0x4c] sm:$0xf]
        %v2649 = vld [vmem:[%s811 + $0x50] sm:$0xf]
        %v2650 = vld [vmem:[%s811 + $0x54] sm:$0xf]
        %v2651 = vld [vmem:[%s811 + $0x58] sm:$0xf]
        %v2652 = vld [vmem:[%s811 + $0x5c] sm:$0xf]
        %v2653 = vld [vmem:[%s811 + $0x60] sm:$0xf]
        %v2654 = vld [vmem:[%s811 + $0x64] sm:$0xf]
        %v2655 = vld [vmem:[%s811 + $0x68] sm:$0xf]
        %v2656 = vld [vmem:[%s811 + $0x6c] sm:$0xf]
        %v2657 = vld [vmem:[%s811 + $0x70] sm:$0xf]
        %v2658 = vld [vmem:[%s811 + $0x74] sm:$0xf]
        %v2659 = vld [vmem:[%s811 + $0x78] sm:$0xf]
        %v2660 = vld [vmem:[%s811 + $0x7c] sm:$0xf]
        %v2661 = vld [vmem:[%s811 + $0x80] sm:$0xf]
        %v2662 = vld [vmem:[%s811 + $0x84] sm:$0xf]
        %v2663 = vld [vmem:[%s811 + $0x88] sm:$0xf]
        %v2664 = vld [vmem:[%s811 + $0x8c] sm:$0xf]
        %v2665 = vld [vmem:[%s811 + $0x90] sm:$0xf]
        %v2666 = vld [vmem:[%s811 + $0x94] sm:$0xf]
        %v2667 = vld [vmem:[%s811 + $0x98] sm:$0xf]
        %v2668 = vld [vmem:[%s811 + $0x9c] sm:$0xf]
        %v2669 = vld [vmem:[%s811 + $0xa0] sm:$0xf]
        %v2670 = vld [vmem:[%s811 + $0xa4] sm:$0xf]
        %v2671 = vld [vmem:[%s811 + $0xa8] sm:$0xf]
        %v2672 = vld [vmem:[%s811 + $0xac] sm:$0xf]
        %v2673 = vld [vmem:[%s811 + $0xb0] sm:$0xf]
        %v2674 = vld [vmem:[%s811 + $0xb4] sm:$0xf]
        %v2675 = vld [vmem:[%s811 + $0xb8] sm:$0xf]
        %v2676 = vld [vmem:[%s811 + $0xbc] sm:$0xf]
        %v2677 = vld [vmem:[%s811 + $0xc0] sm:$0xf]
        %v2678 = vld [vmem:[%s811 + $0xc4] sm:$0xf]
        %v2679 = vld [vmem:[%s811 + $0xc8] sm:$0xf]
        %v2680 = vld [vmem:[%s811 + $0xcc] sm:$0xf]
        %v2681 = vld [vmem:[%s811 + $0xd0] sm:$0xf]
        %v2682 = vld [vmem:[%s811 + $0xd4] sm:$0xf]
        %v2683 = vld [vmem:[%s811 + $0xd8] sm:$0xf]
        %v2684 = vld [vmem:[%s811 + $0xdc] sm:$0xf]
        %v2685 = vld [vmem:[%s811 + $0xe0] sm:$0xf]
        %v2686 = vld [vmem:[%s811 + $0xe4] sm:$0xf]
        %v2687 = vld [vmem:[%s811 + $0xe8] sm:$0xf]
        %v2688 = vld [vmem:[%s811 + $0xec] sm:$0xf]
        %v2689 = vld [vmem:[%s811 + $0xf0] sm:$0xf]
        %v2690 = vld [vmem:[%s811 + $0xf4] sm:$0xf]
        %v2691 = vld [vmem:[%s811 + $0xf8] sm:$0xf]
        %v2692 = vld [vmem:[%s811 + $0xfc] sm:$0xf]
        %v2693 = vld [vmem:[%s926] sm:$0x1]
        %v2695 = vperm.slane %v2693, 0
        %v2761 = vunpack.c.l.b16 %v2629
        %v2762 = vunpack.c.l.b16 %v2630
        %v2763 = vunpack.c.l.b16 %v2631
        %v2764 = vunpack.c.l.b16 %v2632
        %v2765 = vunpack.c.l.b16 %v2633
        %v2766 = vunpack.c.l.b16 %v2634
        %v2767 = vunpack.c.l.b16 %v2635
        %v2768 = vunpack.c.l.b16 %v2636
        %v2769 = vunpack.c.l.b16 %v2637
        %v2770 = vunpack.c.l.b16 %v2638
        %v2771 = vunpack.c.l.b16 %v2639
        %v2772 = vunpack.c.l.b16 %v2640
        %v2773 = vunpack.c.l.b16 %v2641
        %v2774 = vunpack.c.l.b16 %v2642
        %v2775 = vunpack.c.l.b16 %v2643
        %v2776 = vunpack.c.l.b16 %v2644
        %v2777 = vunpack.c.l.b16 %v2645
        %v2778 = vunpack.c.l.b16 %v2646
        %v2779 = vunpack.c.l.b16 %v2647
        %v2780 = vunpack.c.l.b16 %v2648
        %v2781 = vunpack.c.l.b16 %v2649
        %v2782 = vunpack.c.l.b16 %v2650
        %v2783 = vunpack.c.l.b16 %v2651
        %v2784 = vunpack.c.l.b16 %v2652
        %v2785 = vunpack.c.l.b16 %v2653
        %v2786 = vunpack.c.l.b16 %v2654
        %v2787 = vunpack.c.l.b16 %v2655
        %v2788 = vunpack.c.l.b16 %v2656
        %v2789 = vunpack.c.l.b16 %v2657
        %v2790 = vunpack.c.l.b16 %v2658
        %v2791 = vunpack.c.l.b16 %v2659
        %v2792 = vunpack.c.l.b16 %v2660
        %v2793 = vunpack.c.l.b16 %v2661
        %v2794 = vunpack.c.l.b16 %v2662
        %v2795 = vunpack.c.l.b16 %v2663
        %v2796 = vunpack.c.l.b16 %v2664
        %v2797 = vunpack.c.l.b16 %v2665
        %v2798 = vunpack.c.l.b16 %v2666
        %v2799 = vunpack.c.l.b16 %v2667
        %v2800 = vunpack.c.l.b16 %v2668
        %v2801 = vunpack.c.l.b16 %v2669
        %v2802 = vunpack.c.l.b16 %v2670
        %v2803 = vunpack.c.l.b16 %v2671
        %v2804 = vunpack.c.l.b16 %v2672
        %v2805 = vunpack.c.l.b16 %v2673
        %v2806 = vunpack.c.l.b16 %v2674
        %v2807 = vunpack.c.l.b16 %v2675
        %v2808 = vunpack.c.l.b16 %v2676
        %v2809 = vunpack.c.l.b16 %v2677
        %v2810 = vunpack.c.l.b16 %v2678
        %v2811 = vunpack.c.l.b16 %v2679
        %v2812 = vunpack.c.l.b16 %v2680
        %v2813 = vunpack.c.l.b16 %v2681
        %v2814 = vunpack.c.l.b16 %v2682
        %v2815 = vunpack.c.l.b16 %v2683
        %v2816 = vunpack.c.l.b16 %v2684
        %v2817 = vunpack.c.l.b16 %v2685
        %v2818 = vunpack.c.l.b16 %v2686
        %v2819 = vunpack.c.l.b16 %v2687
        %v2820 = vunpack.c.l.b16 %v2688
        %v2821 = vunpack.c.l.b16 %v2689
        %v2822 = vunpack.c.l.b16 %v2690
        %v2823 = vunpack.c.l.b16 %v2691
        %v2824 = vunpack.c.l.b16 %v2692
        %v2825 = vpack.c.b16 %v2762, %v2761
        %v2826 = vpack.c.b16 %v2764, %v2763
        %v2827 = vpack.c.b16 %v2766, %v2765
        %v2828 = vpack.c.b16 %v2768, %v2767
        %v2829 = vpack.c.b16 %v2770, %v2769
        %v2830 = vpack.c.b16 %v2772, %v2771
        %v2831 = vpack.c.b16 %v2774, %v2773
        %v2832 = vpack.c.b16 %v2776, %v2775
        %v2833 = vpack.c.b16 %v2778, %v2777
        %v2834 = vpack.c.b16 %v2780, %v2779
        %v2835 = vpack.c.b16 %v2782, %v2781
        %v2836 = vpack.c.b16 %v2784, %v2783
        %v2837 = vpack.c.b16 %v2786, %v2785
        %v2838 = vpack.c.b16 %v2788, %v2787
        %v2839 = vpack.c.b16 %v2790, %v2789
        %v2840 = vpack.c.b16 %v2792, %v2791
        %v2841 = vpack.c.b16 %v2794, %v2793
        %v2842 = vpack.c.b16 %v2796, %v2795
        %v2843 = vpack.c.b16 %v2798, %v2797
        %v2844 = vpack.c.b16 %v2800, %v2799
        %v2845 = vpack.c.b16 %v2802, %v2801
        %v2846 = vpack.c.b16 %v2804, %v2803
        %v2847 = vpack.c.b16 %v2806, %v2805
        %v2848 = vpack.c.b16 %v2808, %v2807
        %v2849 = vpack.c.b16 %v2810, %v2809
        %v2850 = vpack.c.b16 %v2812, %v2811
        %v2851 = vpack.c.b16 %v2814, %v2813
        %v2852 = vpack.c.b16 %v2816, %v2815
        %v2853 = vpack.c.b16 %v2818, %v2817
        %v2854 = vpack.c.b16 %v2820, %v2819
        %v2855 = vpack.c.b16 %v2822, %v2821
        %v2856 = vpack.c.b16 %v2824, %v2823
        %2889 = vmatpush.bf16.msra.mxu0 %v2832
        %2890 = vmatpush.bf16.msra.mxu0 %v2831
        %2891 = vmatpush.bf16.msra.mxu0 %v2830
        %2892 = vmatpush.bf16.msra.mxu0 %v2829
        %2893 = vmatpush.bf16.msra.mxu0 %v2828
        %2894 = vmatpush.bf16.msra.mxu0 %v2827
        %2895 = vmatpush.bf16.msra.mxu0 %v2826
        %2896 = vmatpush.bf16.msra.mxu0 %v2825
        %2897 = vmatmul.bf16.gmra.mxu0 %v2621
        %v2898 = vpop.f32.mrf.mxu0
        %v2899 = vadd.f32 %v2695, %v2898
        %v2900 = vpop.f32.mrf.mxu0
        %v2901 = vadd.f32 %v2695, %v2900
        %2902 = vmatmul.bf16.gmra.mxu0 %v2625
        %v2903 = vpop.f32.mrf.mxu0
        %v2904 = vadd.f32 %v2695, %v2903
        %v2905 = vpop.f32.mrf.mxu0
        %v2906 = vadd.f32 %v2695, %v2905
        %2907 = vdwg.mxu0
        %2908 = vmatpush.bf16.msra.mxu0 %v2840
        %2909 = vmatpush.bf16.msra.mxu0 %v2839
        %2910 = vmatpush.bf16.msra.mxu0 %v2838
        %2911 = vmatpush.bf16.msra.mxu0 %v2837
        %2912 = vmatpush.bf16.msra.mxu0 %v2836
        %2913 = vmatpush.bf16.msra.mxu0 %v2835
        %2914 = vmatpush.bf16.msra.mxu0 %v2834
        %2915 = vmatpush.bf16.msra.mxu0 %v2833
        %2916 = vmatmul.bf16.gmra.mxu0 %v2622
        %v2917 = vpop.f32.mrf.mxu0
        %v2918 = vadd.f32 %v2899, %v2917
        %v2919 = vpop.f32.mrf.mxu0
        %v2920 = vadd.f32 %v2901, %v2919
        %2921 = vmatmul.bf16.gmra.mxu0 %v2626
        %v2922 = vpop.f32.mrf.mxu0
        %v2923 = vadd.f32 %v2904, %v2922
        %v2924 = vpop.f32.mrf.mxu0
        %v2925 = vadd.f32 %v2906, %v2924
        %2926 = vdwg.mxu0
        %2927 = vmatpush.bf16.msra.mxu0 %v2848
        %2928 = vmatpush.bf16.msra.mxu0 %v2847
        %2929 = vmatpush.bf16.msra.mxu0 %v2846
        %2930 = vmatpush.bf16.msra.mxu0 %v2845
        %2931 = vmatpush.bf16.msra.mxu0 %v2844
        %2932 = vmatpush.bf16.msra.mxu0 %v2843
        %2933 = vmatpush.bf16.msra.mxu0 %v2842
        %2934 = vmatpush.bf16.msra.mxu0 %v2841
        %2935 = vmatmul.bf16.gmra.mxu0 %v2623
        %v2936 = vpop.f32.mrf.mxu0
        %v2937 = vadd.f32 %v2918, %v2936
        %v2938 = vpop.f32.mrf.mxu0
        %v2939 = vadd.f32 %v2920, %v2938
        %2940 = vmatmul.bf16.gmra.mxu0 %v2627
        %v2941 = vpop.f32.mrf.mxu0
        %v2942 = vadd.f32 %v2923, %v2941
        %v2943 = vpop.f32.mrf.mxu0
        %v2944 = vadd.f32 %v2925, %v2943
        %2945 = vdwg.mxu0
        %2946 = vmatpush.bf16.msra.mxu0 %v2856
        %2947 = vmatpush.bf16.msra.mxu0 %v2855
        %2948 = vmatpush.bf16.msra.mxu0 %v2854
        %2949 = vmatpush.bf16.msra.mxu0 %v2853
        %2950 = vmatpush.bf16.msra.mxu0 %v2852
        %2951 = vmatpush.bf16.msra.mxu0 %v2851
        %2952 = vmatpush.bf16.msra.mxu0 %v2850
        %2953 = vmatpush.bf16.msra.mxu0 %v2849
        %2954 = vmatmul.bf16.gmra.mxu0 %v2624
        %v2955 = vpop.f32.mrf.mxu0
        %v2956 = vadd.f32 %v2937, %v2955
        %v2957 = vpop.f32.mrf.mxu0
        %v2958 = vadd.f32 %v2939, %v2957
        %2959 = vmatmul.bf16.gmra.mxu0 %v2628
        %v2960 = vpop.f32.mrf.mxu0
        %v2961 = vadd.f32 %v2942, %v2960
        %v2962 = vpop.f32.mrf.mxu0
        %v2963 = vadd.f32 %v2944, %v2962
        %2964 = vdwg.mxu0
        %v2965 = vadd.f32 %v1905, %v2956
        %v2966 = vadd.f32 %v1906, %v2958
        %v2967 = vadd.f32 %v1907, %v2961
        %v2968 = vadd.f32 %v1908, %v2963
        %v2969 = vpack.c.bf16 %v2965, %v2965
        %v2970 = vpack.c.bf16 %v2966, %v2966
        %v2971 = vpack.c.bf16 %v2967, %v2967
        %v2972 = vpack.c.bf16 %v2968, %v2968
        %2973 = vst [vmem:[%s913] sm:$0xf] %v2969
        %2974 = vst [vmem:[%s913 + $0x4] sm:$0xf] %v2970
        %2975 = vst [vmem:[%s913 + $0x8] sm:$0xf] %v2971
        %2976 = vst [vmem:[%s913 + $0xc] sm:$0xf] %v2972
        %s2977 = sand.u32 %s438, 1
        %s2978 = scalar_lea.sflag [#allocation4], %s2977
        %s2979 = sand.u32 %s438, 1
        %s2980 = smul.addr %s2979, 16
        %s2981 = scalar_lea.vmem [#allocation16], %s2980
        // Predicated region
        $region129: #{tpu_custom_call.1} parent=79 // pred_check
          %p2982 = pneg %p448
        $region130: #{tpu_custom_call.1} parent=79 // pred_check_branch
          %2984 = sbr.rel (%p2982) target = $region132
        $region131: #{tpu_custom_call.1} parent=79 // pred_region
          %s2985 = smul.u32 4, %s37
          %2987 = vsyncadd %s2978, 0
          %s2988 = smul.addr %s2985, 4
          %s2989 = scalar_lea.hbm %s15, %s2988
          %s2990 = sshll.u32 %s2981, 4
          %s2991 = int_to_ptr.vmem [resolvable:$true] %s2990
          %s2992 = sshll.u32 %s2989, 4
          %s2993 = int_to_ptr.hbm [resolvable:$true] %s2992
          %2998 = dma.vmem_to_hbm [thread:$0]  %s2991, 256, %s2993, %s2978, 64, 64, 4
        $region132: #{tpu_custom_call.1} parent=79 // pred_fallthru
          _
      $region80: #{tpu_custom_call.1} parent=5 // pred_fallthru
        _
      %p2999 = scmp.le.s32.totalorder 2, %s28
      // Predicated region
      $region133: #{tpu_custom_call.1} parent=5 // pred_check
        %p3000 = pneg %p2999
      $region134: #{tpu_custom_call.1} parent=5 // pred_check_branch
        %3002 = sbr.rel (%p3000) target = $region136
      $region135: #{tpu_custom_call.1} parent=5 // pred_region
        %s3003 = ssub.s32 %s28, 2
        // Predicated region
        $region137: #{tpu_custom_call.1} parent=135 // pred_check
          %p3004 = pneg %p454
        $region138: #{tpu_custom_call.1} parent=135 // pred_check_branch
          %3006 = sbr.rel (%p3004) target = $region140
        $region139: #{tpu_custom_call.1} parent=135 // pred_region
          %s3007 = sand.u32 %s439, 1
          %s3008 = scalar_lea.sflag [#allocation4], %s3007
          %s3009 = sand.u32 %s439, 1
          %s3010 = smul.addr %s3009, 16
          %s3011 = scalar_lea.vmem [#allocation16], %s3010
          %3013 = dma.done %s3008, 256
        $region140: #{tpu_custom_call.1} parent=135 // pred_fallthru
          _
      $region136: #{tpu_custom_call.1} parent=5 // pred_fallthru
        _
    $region6: #{tpu_custom_call.1} parent=1 // loop_footer
      %s32 = sadd.s32 1, %s28
    $region7: #{tpu_custom_call.1} parent=1 // loop_footer_branch
      %27 = sbr.rel target = $region3
    $region8: #{tpu_custom_call.1} parent=1 // loop_exit
      _
    %3014 = vsyncpa [#allocation3], 1
    %s3015 = scalar_lea.sflag [#allocation3], 1
    %3016 = vsyncpa %s3015, 1
    %3017 = vsyncpa [#allocation6], 1
    %3018 = vsyncpa [#allocation4], 1
    %s3019 = scalar_lea.sflag [#allocation4], 1
    %3020 = vsyncpa %s3019, 1

</llo_original>
